<compile_context>
chip_gen: v7x
topology: tpu7x:2x2x1
jax: 0.10.0
libtpu: 0.0.40
codegen_flags: <defaults>
</compile_context>

<pallas_src>
import jax
import jax.numpy as jnp
from jax import lax
from jax.experimental import pallas as pl
from jax.experimental.pallas import tpu as pltpu


_BATCH_TILE = 8  # images per grid step (multiple of 8; 8-16 is the sweet spot)


# ---------------------------------------------------------------------------
# Fused kernel: conv(as GEMM) + bias + ReLU + GAP (sublane reduce) + FC classifier,
# one batch tile (Bt images) per grid step.
# ---------------------------------------------------------------------------
def _make_kernel(batch_tile, hw):
    inv_hw = 1.0 / float(hw)

    def kernel(p_ref, wconv_ref, bconv_ref, wfc_ref, bfc_ref, o_ref):
        # p_ref    : (Bt*HW, KP)  bf16  im2col patches for Bt images (rows = (img, y, x))
        # wconv_ref: (KP, Cout)   bf16  conv weight (rows = tap*Cin + cin), zero-padded K
        # bconv_ref: (1, Cout)    f32   conv bias
        # wfc_ref  : (Cout, NCP)  f32pad->bf16  classifier weight, lane-padded to 128
        # bfc_ref  : (1, NCP)     f32   classifier bias (lane-padded)
        # o_ref    : (Bt, NCP)    f32   logits (lane-padded), (8,128)-aligned store

        # Conv as one MXU GEMM with Cout on lanes; f32 accumulation.
        h = jnp.dot(p_ref[...], wconv_ref[...],
                    preferred_element_type=jnp.float32)            # (Bt*HW, Cout)
        h = jnp.maximum(h + bconv_ref[...], 0.0)                   # bias + ReLU (f32 VPU)

        # GAP: each image's feature = mean over its HW consecutive rows.
        # Pure sublane reduction (no pool matrix, no MXU work).
        rows = [jnp.sum(h[b * hw:(b + 1) * hw, :], axis=0, keepdims=True)
                for b in range(batch_tile)]                        # Bt x (1, Cout)
        feat = jnp.concatenate(rows, axis=0) * inv_hw              # (Bt, Cout) f32

        # FC classifier (bf16 operands, f32 accumulation); full 128-lane output slab.
        logits = jnp.dot(feat.astype(jnp.bfloat16), wfc_ref[...],
                         preferred_element_type=jnp.float32) + bfc_ref[...]
        o_ref[...] = logits.astype(o_ref.dtype)

    return kernel


# ---------------------------------------------------------------------------
# Wrapper: layout conversion + im2col (host glue), then one pallas_call.
# ---------------------------------------------------------------------------
@jax.jit
def network_forward(x_nchw, w_conv, b_conv, w_fc, b_fc):
    N, Cin, H, W = x_nchw.shape
    KH, KW, _, Cout = w_conv.shape
    NC = w_fc.shape[1]
    HW = H * W
    K = KH * KW * Cin

    # Fixed batch tile; pad the batch up to a multiple of it (padded rows sliced off).
    Bt = _BATCH_TILE
    Np = ((N + Bt - 1) // Bt) * Bt
    num_tiles = Np // Bt
    Mt = Bt * HW

    x_nchw_p = jnp.pad(x_nchw, ((0, Np - N), (0, 0), (0, 0), (0, 0)))

    # --- host-side glue: NCHW -> NHWC, 'same' pad, im2col (rows = (img, y, x)) ---
    x = jnp.transpose(x_nchw_p, (0, 2, 3, 1))                          # (Np, H, W, Cin)
    xp = jnp.pad(x, ((0, 0), (1, 1), (1, 1), (0, 0)))
    taps = [xp[:, dy:dy + H, dx:dx + W, :]
            for dy in range(KH) for dx in range(KW)]                   # 9 x (Np, H, W, Cin)
    patches = jnp.stack(taps, axis=3).reshape(Np * HW, K)              # (Np*HW, K)

    KP = ((K + 7) // 8) * 8                                            # sublane-pad 27 -> 32
    patches = jnp.pad(patches, ((0, 0), (0, KP - K))).astype(jnp.bfloat16)   # (Np*HW, KP)

    wconv = jnp.pad(w_conv.reshape(K, Cout),
                    ((0, KP - K), (0, 0))).astype(jnp.bfloat16)        # (KP, Cout)
    bconv = b_conv.astype(jnp.float32).reshape(1, Cout)

    # Lane-pad the classifier so the output store is a full 128-lane slab; bf16 weights.
    NCP = ((NC + 127) // 128) * 128
    wfc_p = jnp.pad(w_fc, ((0, 0), (0, NCP - NC))).astype(jnp.bfloat16)      # (Cout, NCP)
    bfc_p = jnp.pad(b_fc.astype(jnp.float32).reshape(1, NC),
                    ((0, 0), (0, NCP - NC)))                                 # (1, NCP)

    kernel = _make_kernel(Bt, HW)

    out = pl.pallas_call(
        kernel,
        out_shape=jax.ShapeDtypeStruct((Np, NCP), jnp.float32),
        grid_spec=pltpu.PrefetchScalarGridSpec(
            num_scalar_prefetch=0,
            grid=(num_tiles,),
            in_specs=[
                pl.BlockSpec((Mt, KP), lambda i: (i, 0)),        # streamed patches tile
                pl.BlockSpec((KP, Cout), lambda i: (0, 0)),      # resident conv weight
                pl.BlockSpec((1, Cout), lambda i: (0, 0)),       # resident conv bias
                pl.BlockSpec((Cout, NCP), lambda i: (0, 0)),     # resident fc weight
                pl.BlockSpec((1, NCP), lambda i: (0, 0)),        # resident fc bias
            ],
            out_specs=pl.BlockSpec((Bt, NCP), lambda i: (i, 0)),  # (8, 128)-aligned
        ),
        compiler_params=pltpu.CompilerParams(
            dimension_semantics=("parallel",)),
    )(patches, wconv, bconv, wfc_p, bfc_p)

    return out[:N, :NC].astype(x_nchw.dtype)


# ---------------------------------------------------------------------------
# Pure-JAX references for correctness checks.
# ---------------------------------------------------------------------------
def network_forward_ref_f32(x_nchw, w_conv, b_conv, w_fc, b_fc):
    """Exact f32 semantics of the module's forward (backbone stem + GAP + FC)."""
    x = jnp.transpose(x_nchw, (0, 2, 3, 1))
    h = lax.conv_general_dilated(
        x, w_conv, window_strides=(1, 1), padding="SAME",
        dimension_numbers=("NHWC", "HWIO", "NHWC"))
    h = jnp.maximum(h + b_conv, 0.0)
    feat = jnp.mean(h, axis=(1, 2))
    return feat @ w_fc + b_fc


def network_forward_ref_bf16(x_nchw, w_conv, b_conv, w_fc, b_fc):
    """Same math, with the MXU operands rounded to bf16 exactly like the kernel."""
    q = lambda a: a.astype(jnp.bfloat16).astype(jnp.float32)
    x = q(jnp.transpose(x_nchw, (0, 2, 3, 1)))
    h = lax.conv_general_dilated(
        x, q(w_conv), window_strides=(1, 1), padding="SAME",
        dimension_numbers=("NHWC", "HWIO", "NHWC"))
    h = jnp.maximum(h + b_conv, 0.0)
    feat = jnp.mean(h, axis=(1, 2))
    return q(feat) @ q(w_fc) + b_fc


if __name__ == "__main__":
    # Small shapes consistent with the cifar branch of the module:
    # feature_len = 64, FC classifier with bias.  N is deliberately NOT a multiple of
    # the 8-image batch tile so both the multi-step grid and the batch padding path
    # are exercised.
    N, Cin, H, W = 20, 3, 16, 16
    Cout = 64            # cifar feature length
    num_classes = 10     # cifar-like class count (lane-padded to 128 internally)

    key = jax.random.PRNGKey(0)
    kx, kw1, kb1, kw2, kb2 = jax.random.split(key, 5)
    x = jax.random.normal(kx, (N, Cin, H, W), dtype=jnp.float32)
    w_conv = jax.random.normal(kw1, (3, 3, Cin, Cout), dtype=jnp.float32) * 0.1
    b_conv = jax.random.normal(kb1, (Cout,), dtype=jnp.float32) * 0.1
    w_fc = jax.random.normal(kw2, (Cout, num_classes), dtype=jnp.float32) * 0.1
    b_fc = jax.random.normal(kb2, (num_classes,), dtype=jnp.float32) * 0.1

    out = network_forward(x, w_conv, b_conv, w_fc, b_fc)
    jax.block_until_ready(out)
    assert out.shape == (N, num_classes)

    # Tight check against a reference with the same bf16 quantization of the MXU
    # operands (f32 accumulation everywhere).
    ref_q = network_forward_ref_bf16(x, w_conv, b_conv, w_fc, b_fc)
    assert jnp.allclose(out, ref_q, atol=5e-3, rtol=5e-3), \
        "mismatch vs bf16-matched reference"

    # Looser check against the exact f32 module semantics (bf16 rounding of the MXU
    # operands is the only approximation).
    ref = network_forward_ref_f32(x, w_conv, b_conv, w_fc, b_fc)
    assert jnp.allclose(out, ref, atol=5e-2, rtol=5e-2), \
        "mismatch vs f32 reference"

    print("KERNEL_OK")
</pallas_src>

<mosaic_0001>
module attributes {stable_mosaic.version = 11 : i64} {
  func.func @kernel(%arg0: i32, %arg1: memref<2048x32xbf16, #tpu.memory_space<vmem>>, %arg2: memref<32x64xbf16, #tpu.memory_space<vmem>>, %arg3: memref<1x64xf32, #tpu.memory_space<vmem>>, %arg4: memref<64x128xbf16, #tpu.memory_space<vmem>>, %arg5: memref<1x128xf32, #tpu.memory_space<vmem>>, %arg6: memref<8x128xf32, #tpu.memory_space<vmem>>) attributes {dimension_semantics = [#tpu.dimension_semantics<parallel>], iteration_bounds = array<i64: 3>, scalar_prefetch = 0 : i64, scratch_operands = 0 : i64, tpu.core_type = #tpu.core_type<tc>, window_params = [{transform_indices = @transform_0, window_bounds = array<i64: 2048, 32>}, {pipeline_mode = #tpu.pipeline_mode<synchronous>, transform_indices = @transform_1, window_bounds = array<i64: 32, 64>}, {pipeline_mode = #tpu.pipeline_mode<synchronous>, transform_indices = @transform_2, window_bounds = array<i64: 1, 64>}, {pipeline_mode = #tpu.pipeline_mode<synchronous>, transform_indices = @transform_3, window_bounds = array<i64: 64, 128>}, {pipeline_mode = #tpu.pipeline_mode<synchronous>, transform_indices = @transform_4, window_bounds = array<i64: 1, 128>}, {transform_indices = @transform_5, window_bounds = array<i64: 8, 128>}]} {
    %c0 = arith.constant 0 : index
    %c0_0 = arith.constant 0 : index
    %0 = vector.load %arg1[%c0, %c0_0] : memref<2048x32xbf16, #tpu.memory_space<vmem>>, vector<2048x32xbf16>
    %c0_1 = arith.constant 0 : index
    %c0_2 = arith.constant 0 : index
    %1 = vector.load %arg2[%c0_1, %c0_2] : memref<32x64xbf16, #tpu.memory_space<vmem>>, vector<32x64xbf16>
    %cst = arith.constant dense<0.000000e+00> : vector<2048x64xf32>
    %2 = tpu.matmul %0, %1, %cst {dimension_numbers = #tpu.dot_dimension_numbers<[1], [0], [0], [1], [0, 0, 1, 1], [], []>} : vector<2048x32xbf16>, vector<32x64xbf16>, vector<2048x64xf32> -> vector<2048x64xf32>
    %c0_3 = arith.constant 0 : index
    %c0_4 = arith.constant 0 : index
    %3 = vector.load %arg3[%c0_3, %c0_4] : memref<1x64xf32, #tpu.memory_space<vmem>>, vector<1x64xf32>
    %4 = vector.broadcast %3 : vector<1x64xf32> to vector<2048x64xf32>
    %5 = arith.addf %2, %4 : vector<2048x64xf32>
    %cst_5 = arith.constant 0.000000e+00 : f32
    %6 = vector.broadcast %cst_5 : f32 to vector<2048x64xf32>
    %7 = arith.maximumf %5, %6 : vector<2048x64xf32>
    %8 = vector.extract_strided_slice %7 {offsets = [0, 0], sizes = [256, 64], strides = [1, 1]} : vector<2048x64xf32> to vector<256x64xf32>
    %cst_6 = arith.constant dense<0.000000e+00> : vector<64xf32>
    %9 = vector.multi_reduction <add>, %8, %cst_6 [0] : vector<256x64xf32> to vector<64xf32>
    %10 = vector.shape_cast %9 : vector<64xf32> to vector<1x64xf32>
    %11 = vector.extract_strided_slice %7 {offsets = [256, 0], sizes = [256, 64], strides = [1, 1]} : vector<2048x64xf32> to vector<256x64xf32>
    %cst_7 = arith.constant dense<0.000000e+00> : vector<64xf32>
    %12 = vector.multi_reduction <add>, %11, %cst_7 [0] : vector<256x64xf32> to vector<64xf32>
    %13 = vector.shape_cast %12 : vector<64xf32> to vector<1x64xf32>
    %14 = vector.extract_strided_slice %7 {offsets = [512, 0], sizes = [256, 64], strides = [1, 1]} : vector<2048x64xf32> to vector<256x64xf32>
    %cst_8 = arith.constant dense<0.000000e+00> : vector<64xf32>
    %15 = vector.multi_reduction <add>, %14, %cst_8 [0] : vector<256x64xf32> to vector<64xf32>
    %16 = vector.shape_cast %15 : vector<64xf32> to vector<1x64xf32>
    %17 = vector.extract_strided_slice %7 {offsets = [768, 0], sizes = [256, 64], strides = [1, 1]} : vector<2048x64xf32> to vector<256x64xf32>
    %cst_9 = arith.constant dense<0.000000e+00> : vector<64xf32>
    %18 = vector.multi_reduction <add>, %17, %cst_9 [0] : vector<256x64xf32> to vector<64xf32>
    %19 = vector.shape_cast %18 : vector<64xf32> to vector<1x64xf32>
    %20 = vector.extract_strided_slice %7 {offsets = [1024, 0], sizes = [256, 64], strides = [1, 1]} : vector<2048x64xf32> to vector<256x64xf32>
    %cst_10 = arith.constant dense<0.000000e+00> : vector<64xf32>
    %21 = vector.multi_reduction <add>, %20, %cst_10 [0] : vector<256x64xf32> to vector<64xf32>
    %22 = vector.shape_cast %21 : vector<64xf32> to vector<1x64xf32>
    %23 = vector.extract_strided_slice %7 {offsets = [1280, 0], sizes = [256, 64], strides = [1, 1]} : vector<2048x64xf32> to vector<256x64xf32>
    %cst_11 = arith.constant dense<0.000000e+00> : vector<64xf32>
    %24 = vector.multi_reduction <add>, %23, %cst_11 [0] : vector<256x64xf32> to vector<64xf32>
    %25 = vector.shape_cast %24 : vector<64xf32> to vector<1x64xf32>
    %26 = vector.extract_strided_slice %7 {offsets = [1536, 0], sizes = [256, 64], strides = [1, 1]} : vector<2048x64xf32> to vector<256x64xf32>
    %cst_12 = arith.constant dense<0.000000e+00> : vector<64xf32>
    %27 = vector.multi_reduction <add>, %26, %cst_12 [0] : vector<256x64xf32> to vector<64xf32>
    %28 = vector.shape_cast %27 : vector<64xf32> to vector<1x64xf32>
    %29 = vector.extract_strided_slice %7 {offsets = [1792, 0], sizes = [256, 64], strides = [1, 1]} : vector<2048x64xf32> to vector<256x64xf32>
    %cst_13 = arith.constant dense<0.000000e+00> : vector<64xf32>
    %30 = vector.multi_reduction <add>, %29, %cst_13 [0] : vector<256x64xf32> to vector<64xf32>
    %31 = vector.shape_cast %30 : vector<64xf32> to vector<1x64xf32>
    %32 = tpu.concatenate %10, %13, %16, %19, %22, %25, %28, %31 in 0 : vector<1x64xf32>, vector<1x64xf32>, vector<1x64xf32>, vector<1x64xf32>, vector<1x64xf32>, vector<1x64xf32>, vector<1x64xf32>, vector<1x64xf32> -> vector<8x64xf32>
    %cst_14 = arith.constant 3.906250e-03 : f32
    %33 = vector.broadcast %cst_14 : f32 to vector<8x64xf32>
    %34 = arith.mulf %32, %33 : vector<8x64xf32>
    %35 = arith.truncf %34 : vector<8x64xf32> to vector<8x64xbf16>
    %c0_15 = arith.constant 0 : index
    %c0_16 = arith.constant 0 : index
    %36 = vector.load %arg4[%c0_15, %c0_16] : memref<64x128xbf16, #tpu.memory_space<vmem>>, vector<64x128xbf16>
    %cst_17 = arith.constant dense<0.000000e+00> : vector<8x128xf32>
    %37 = tpu.matmul %35, %36, %cst_17 {dimension_numbers = #tpu.dot_dimension_numbers<[1], [0], [0], [1], [0, 0, 1, 1], [], []>} : vector<8x64xbf16>, vector<64x128xbf16>, vector<8x128xf32> -> vector<8x128xf32>
    %c0_18 = arith.constant 0 : index
    %c0_19 = arith.constant 0 : index
    %38 = vector.load %arg5[%c0_18, %c0_19] : memref<1x128xf32, #tpu.memory_space<vmem>>, vector<1x128xf32>
    %39 = vector.broadcast %38 : vector<1x128xf32> to vector<8x128xf32>
    %40 = arith.addf %37, %39 : vector<8x128xf32>
    %c0_20 = arith.constant 0 : index
    %c0_21 = arith.constant 0 : index
    %41 = vector.load %arg6[%c0_20, %c0_21] : memref<8x128xf32, #tpu.memory_space<vmem>>, vector<8x128xf32>
    tpu.vector_store %arg6[%c0_20, %c0_21], %40 {strides = array<i32>} : memref<8x128xf32, #tpu.memory_space<vmem>>, vector<8x128xf32>,
    return
  }
  func.func @transform_0(%arg0: i32) -> (i32, i32) {
    %c0_i32 = arith.constant 0 : i32
    %c0_i32_0 = arith.constant 0 : i32
    return %arg0, %c0_i32 : i32, i32
  }
  func.func @transform_1(%arg0: i32) -> (i32, i32) {
    %c0_i32 = arith.constant 0 : i32
    %c0_i32_0 = arith.constant 0 : i32
    %c0_i32_1 = arith.constant 0 : i32
    return %c0_i32, %c0_i32_0 : i32, i32
  }
  func.func @transform_2(%arg0: i32) -> (i32, i32) {
    %c0_i32 = arith.constant 0 : i32
    %c0_i32_0 = arith.constant 0 : i32
    %c0_i32_1 = arith.constant 0 : i32
    return %c0_i32, %c0_i32_0 : i32, i32
  }
  func.func @transform_3(%arg0: i32) -> (i32, i32) {
    %c0_i32 = arith.constant 0 : i32
    %c0_i32_0 = arith.constant 0 : i32
    %c0_i32_1 = arith.constant 0 : i32
    return %c0_i32, %c0_i32_0 : i32, i32
  }
  func.func @transform_4(%arg0: i32) -> (i32, i32) {
    %c0_i32 = arith.constant 0 : i32
    %c0_i32_0 = arith.constant 0 : i32
    %c0_i32_1 = arith.constant 0 : i32
    return %c0_i32, %c0_i32_0 : i32, i32
  }
  func.func @transform_5(%arg0: i32) -> (i32, i32) {
    %c0_i32 = arith.constant 0 : i32
    %c0_i32_0 = arith.constant 0 : i32
    return %arg0, %c0_i32 : i32, i32
  }
}

</mosaic_0001>

<llo_original>
// kernel: network_forward.1
$region0: #{network_forward.1}
  #allocation0 [shape = 'u32[]', space=smem, size = 0x4, offset = 0x4, fixed_abs, tag = 'smem constant byte address 0x4 - core index']
  #allocation1 [shape = 'u32[144,128]{1,0:T(1,128)}', space=vmem, size = 0x12000, scoped, tag = 'internal scratch']
  %s0 = inlined_call_operand.vmem [shape: bf16[6144,32], index: 0, kind: input, shape index: {}]
  %s1 = inlined_call_operand.vmem [shape: bf16[32,64], index: 1, kind: input, shape index: {}]
  %s2 = inlined_call_operand.vmem [shape: f32[1,64], index: 2, kind: input, shape index: {}]
  %s3 = inlined_call_operand.vmem [shape: bf16[64,128], index: 3, kind: input, shape index: {}]
  %s4 = inlined_call_operand.vmem [shape: f32[1,128], index: 4, kind: input, shape index: {}]
  %s5 = inlined_call_operand.vmem [shape: f32[24,128], index: 5, kind: output, shape index: {}]
  %s6 = sld [smem:[#allocation0]]
  $region53: #{network_forward.1} parent=0
    _
  %s8 = ssub.s32 1, %s6
  %s9 = scalar_select 0, %s8, %s6
  loop: start=0, step=1, limit=5
  $region2: #{network_forward.1} parent=0 // loop_pre_header
    _
  $region3: #{network_forward.1} parent=0 // loop_header
    %s11 = sphi 0, %s15
    %p12 = scmp.ge.s32.totalorder %s11, 5
    %s21 = sphi 0, %s23
    %s24 = sphi 0, %s21
    %s25 = sphi 0, %s24
    %s41 = sphi 0, %s25
    %s45 = sphi 0, %s45
    %s47 = sphi 0, %s45
    %s48 = sphi 0, %s47
    %s62 = sphi 0, %s48
    %s66 = sphi 0, %s66
    %s68 = sphi 0, %s66
    %s69 = sphi 0, %s68
    %s83 = sphi 0, %s69
    %s87 = sphi 0, %s87
    %s89 = sphi 0, %s87
    %s90 = sphi 0, %s89
    %s104 = sphi 0, %s90
    %s108 = sphi 0, %s108
    %s110 = sphi 0, %s108
    %s111 = sphi 0, %s110
    %s125 = sphi 0, %s111
    %s131 = sphi 0, %s133
    %s134 = sphi 0, %s131
    %s135 = sphi 0, %s134
    %s151 = sphi 0, %s135
  $region4: #{network_forward.1} parent=0 // loop_header_branch
    %14 = sbr.rel (%p12) target = $region8
  $region5: #{network_forward.1} parent=0 // loop_body
    %s16 = ssub.s32 %s11, 1
    %s17 = ssub.s32 %s11, 2
    %s18 = sadd.s32 %s11, 1
    %s19 = ssub.s32 %s11, %s18
    %p20 = scmp.eq.s32.totalorder %s19, 0
    %s22 = sadd.s32 %s21, 1
    %s23 = scalar_select %p20, %s21, %s22
    %p26 = pneg %p20
    %p27 = scmp.eq.s32.totalorder %s11, 2
    %p28 = por %p26, %p27
    %p29 = scmp.ne.s32.totalorder %s21, %s24
    %p30 = scmp.eq.s32.totalorder %s11, 0
    %p31 = por %p29, %p30
    %p32 = scmp.ne.s32.totalorder %s21, %s24
    %p33 = scmp.eq.s32.totalorder %s16, 2
    %p34 = por %p32, %p33
    %p35 = scmp.ne.s32.totalorder %s24, %s25
    %p36 = scmp.eq.s32.totalorder %s16, 0
    %p37 = por %p35, %p36
    %p38 = scmp.ne.s32.totalorder %s24, %s25
    %p39 = scmp.eq.s32.totalorder %s17, 2
    %p40 = por %p38, %p39
    %p42 = scmp.ne.s32.totalorder %s25, %s41
    %p43 = scmp.eq.s32.totalorder %s17, 0
    %p44 = por %p42, %p43
    %s46 = sadd.s32 %s45, 1
    %p49 = scmp.eq.s32.totalorder %s11, 2
    %p50 = scmp.ne.s32.totalorder %s45, %s47
    %p51 = scmp.eq.s32.totalorder %s11, 0
    %p52 = por %p50, %p51
    %p53 = scmp.ne.s32.totalorder %s45, %s47
    %p54 = scmp.eq.s32.totalorder %s16, 2
    %p55 = por %p53, %p54
    %p56 = scmp.ne.s32.totalorder %s47, %s48
    %p57 = scmp.eq.s32.totalorder %s16, 0
    %p58 = por %p56, %p57
    %p59 = scmp.ne.s32.totalorder %s47, %s48
    %p60 = scmp.eq.s32.totalorder %s17, 2
    %p61 = por %p59, %p60
    %p63 = scmp.ne.s32.totalorder %s48, %s62
    %p64 = scmp.eq.s32.totalorder %s17, 0
    %p65 = por %p63, %p64
    %s67 = sadd.s32 %s66, 1
    %p70 = scmp.eq.s32.totalorder %s11, 2
    %p71 = scmp.ne.s32.totalorder %s66, %s68
    %p72 = scmp.eq.s32.totalorder %s11, 0
    %p73 = por %p71, %p72
    %p74 = scmp.ne.s32.totalorder %s66, %s68
    %p75 = scmp.eq.s32.totalorder %s16, 2
    %p76 = por %p74, %p75
    %p77 = scmp.ne.s32.totalorder %s68, %s69
    %p78 = scmp.eq.s32.totalorder %s16, 0
    %p79 = por %p77, %p78
    %p80 = scmp.ne.s32.totalorder %s68, %s69
    %p81 = scmp.eq.s32.totalorder %s17, 2
    %p82 = por %p80, %p81
    %p84 = scmp.ne.s32.totalorder %s69, %s83
    %p85 = scmp.eq.s32.totalorder %s17, 0
    %p86 = por %p84, %p85
    %s88 = sadd.s32 %s87, 1
    %p91 = scmp.eq.s32.totalorder %s11, 2
    %p92 = scmp.ne.s32.totalorder %s87, %s89
    %p93 = scmp.eq.s32.totalorder %s11, 0
    %p94 = por %p92, %p93
    %p95 = scmp.ne.s32.totalorder %s87, %s89
    %p96 = scmp.eq.s32.totalorder %s16, 2
    %p97 = por %p95, %p96
    %p98 = scmp.ne.s32.totalorder %s89, %s90
    %p99 = scmp.eq.s32.totalorder %s16, 0
    %p100 = por %p98, %p99
    %p101 = scmp.ne.s32.totalorder %s89, %s90
    %p102 = scmp.eq.s32.totalorder %s17, 2
    %p103 = por %p101, %p102
    %p105 = scmp.ne.s32.totalorder %s90, %s104
    %p106 = scmp.eq.s32.totalorder %s17, 0
    %p107 = por %p105, %p106
    %s109 = sadd.s32 %s108, 1
    %p112 = scmp.eq.s32.totalorder %s11, 2
    %p113 = scmp.ne.s32.totalorder %s108, %s110
    %p114 = scmp.eq.s32.totalorder %s11, 0
    %p115 = por %p113, %p114
    %p116 = scmp.ne.s32.totalorder %s108, %s110
    %p117 = scmp.eq.s32.totalorder %s16, 2
    %p118 = por %p116, %p117
    %p119 = scmp.ne.s32.totalorder %s110, %s111
    %p120 = scmp.eq.s32.totalorder %s16, 0
    %p121 = por %p119, %p120
    %p122 = scmp.ne.s32.totalorder %s110, %s111
    %p123 = scmp.eq.s32.totalorder %s17, 2
    %p124 = por %p122, %p123
    %p126 = scmp.ne.s32.totalorder %s111, %s125
    %p127 = scmp.eq.s32.totalorder %s17, 0
    %p128 = por %p126, %p127
    %s129 = ssub.s32 %s11, %s18
    %p130 = scmp.eq.s32.totalorder %s129, 0
    %s132 = sadd.s32 %s131, 1
    %s133 = scalar_select %p130, %s131, %s132
    %p136 = pneg %p130
    %p137 = scmp.eq.s32.totalorder %s11, 2
    %p138 = por %p136, %p137
    %p139 = scmp.ne.s32.totalorder %s131, %s134
    %p140 = scmp.eq.s32.totalorder %s11, 0
    %p141 = por %p139, %p140
    %p142 = scmp.ne.s32.totalorder %s131, %s134
    %p143 = scmp.eq.s32.totalorder %s16, 2
    %p144 = por %p142, %p143
    %p145 = scmp.ne.s32.totalorder %s134, %s135
    %p146 = scmp.eq.s32.totalorder %s16, 0
    %p147 = por %p145, %p146
    %p148 = scmp.ne.s32.totalorder %s134, %s135
    %p149 = scmp.eq.s32.totalorder %s17, 2
    %p150 = por %p148, %p149
    %p152 = scmp.ne.s32.totalorder %s135, %s151
    %p153 = scmp.eq.s32.totalorder %s17, 0
    %p154 = por %p152, %p153
    %p155 = scmp.le.s32.totalorder 1, %s11
    %p156 = scmp.lt.s32.totalorder %s11, 4
    %p157 = pnand %p155, %p156
    %p158 = pneg %p157
    // Predicated region
    $region9: #{network_forward.1} parent=5 // pred_check
      _
    $region10: #{network_forward.1} parent=5 // pred_check_branch
      %160 = sbr.rel (%p157) target = $region12
    $region11: #{network_forward.1} parent=5 // pred_region
      %s161 = ssub.s32 %s11, 1
      // Predicated region
      $region13: #{network_forward.1} parent=11 // pred_check
        %p162 = pneg %p58
      $region14: #{network_forward.1} parent=11 // pred_check_branch
        %164 = sbr.rel (%p162) target = $region16
      $region15: #{network_forward.1} parent=11 // pred_region
        _
      $region16: #{network_forward.1} parent=11 // pred_fallthru
        _
      // Predicated region
      $region17: #{network_forward.1} parent=11 // pred_check
        %p165 = pneg %p79
      $region18: #{network_forward.1} parent=11 // pred_check_branch
        %167 = sbr.rel (%p165) target = $region20
      $region19: #{network_forward.1} parent=11 // pred_region
        _
      $region20: #{network_forward.1} parent=11 // pred_fallthru
        _
      // Predicated region
      $region21: #{network_forward.1} parent=11 // pred_check
        %p168 = pneg %p100
      $region22: #{network_forward.1} parent=11 // pred_check_branch
        %170 = sbr.rel (%p168) target = $region24
      $region23: #{network_forward.1} parent=11 // pred_region
        _
      $region24: #{network_forward.1} parent=11 // pred_fallthru
        _
      // Predicated region
      $region25: #{network_forward.1} parent=11 // pred_check
        %p171 = pneg %p121
      $region26: #{network_forward.1} parent=11 // pred_check_branch
        %173 = sbr.rel (%p171) target = $region28
      $region27: #{network_forward.1} parent=11 // pred_region
        _
      $region28: #{network_forward.1} parent=11 // pred_fallthru
        _
    $region12: #{network_forward.1} parent=5 // pred_fallthru
      _
    %p174 = scmp.lt.s32.totalorder %s11, 3
    // Predicated region
    $region29: #{network_forward.1} parent=5 // pred_check
      %p175 = pneg %p174
    $region30: #{network_forward.1} parent=5 // pred_check_branch
      %177 = sbr.rel (%p175) target = $region32
    $region31: #{network_forward.1} parent=5 // pred_region
      // Predicated region
      $region33: #{network_forward.1} parent=31 // pred_check
        %p178 = pneg %p31
      $region34: #{network_forward.1} parent=31 // pred_check_branch
        %180 = sbr.rel (%p178) target = $region36
      $region35: #{network_forward.1} parent=31 // pred_region
        %s181 = smul.u32 256, %s11
        %p182 = scmp.lt.s32.totalorder %s181, 767
        %s183 = scalar_select %p182, %s181, 767
        %s184 = smul.addr %s183, 4
        %s185 = scalar_lea.vmem %s0, %s184
        %s186 = smul.u32 256, %s11
      $region36: #{network_forward.1} parent=31 // pred_fallthru
        _
    $region32: #{network_forward.1} parent=5 // pred_fallthru
      _
    %p187 = scmp.le.s32.totalorder 1, %s11
    %p188 = scmp.lt.s32.totalorder %s11, 4
    %p189 = pnand %p187, %p188
    %p190 = pneg %p189
    // Predicated region
    $region37: #{network_forward.1} parent=5 // pred_check
      _
    $region38: #{network_forward.1} parent=5 // pred_check_branch
      %192 = sbr.rel (%p189) target = $region40
    $region39: #{network_forward.1} parent=5 // pred_region
      %s193 = ssub.s32 %s11, 1
      %s194 = smul.u32 256, %s16
      %p195 = scmp.lt.s32.totalorder %s194, 767
      %s196 = scalar_select %p195, %s194, 767
      %s197 = smul.addr %s196, 4
      %s198 = scalar_lea.vmem %s0, %s197
      %p199 = pneg %p37
      %p200 = pneg %p34
      %p201 = pneg %p58
      %p202 = pneg %p55
      %p203 = pneg %p79
      %p204 = pneg %p76
      %p205 = pneg %p100
      %p206 = pneg %p97
      %p207 = pneg %p121
      %p208 = pneg %p118
      %p209 = pneg %p147
      %p210 = pneg %p144
      %p211 = scmp.lt.s32.totalorder %s16, 2
      %s212 = scalar_select %p211, %s16, 2
      %s213 = smul.addr %s212, 8
      %s214 = scalar_lea.vmem %s5, %s213
      %s215 = smul.u32 256, %s16
      %p216 = scmp.lt.s32.totalorder %s215, 767
      %s217 = scalar_select %p216, %s215, 767
      %s218 = smul.addr %s217, 4
      %s219 = scalar_lea.vmem %s0, %s218
      %s220 = smul.u32 256, %s16
      %p221 = scmp.lt.s32.totalorder %s16, 2
      %s222 = scalar_select %p221, %s16, 2
      %s223 = smul.addr %s222, 8
      %s224 = scalar_lea.vmem %s5, %s223
      %v226 = vld [vmem:[%s219] sm:$0xf]
      %v227 = vld [vmem:[%s219 + $0x4] sm:$0xf]
      %v228 = vld [vmem:[%s219 + $0x8] sm:$0xf]
      %v229 = vld [vmem:[%s219 + $0xc] sm:$0xf]
      %v230 = vld [vmem:[%s219 + $0x10] sm:$0xf]
      %v231 = vld [vmem:[%s219 + $0x14] sm:$0xf]
      %v232 = vld [vmem:[%s219 + $0x18] sm:$0xf]
      %v233 = vld [vmem:[%s219 + $0x1c] sm:$0xf]
      %v234 = vld [vmem:[%s219 + $0x20] sm:$0xf]
      %v235 = vld [vmem:[%s219 + $0x24] sm:$0xf]
      %v236 = vld [vmem:[%s219 + $0x28] sm:$0xf]
      %v237 = vld [vmem:[%s219 + $0x2c] sm:$0xf]
      %v238 = vld [vmem:[%s219 + $0x30] sm:$0xf]
      %v239 = vld [vmem:[%s219 + $0x34] sm:$0xf]
      %v240 = vld [vmem:[%s219 + $0x38] sm:$0xf]
      %v241 = vld [vmem:[%s219 + $0x3c] sm:$0xf]
      %v242 = vld [vmem:[%s219 + $0x40] sm:$0xf]
      %v243 = vld [vmem:[%s219 + $0x44] sm:$0xf]
      %v244 = vld [vmem:[%s219 + $0x48] sm:$0xf]
      %v245 = vld [vmem:[%s219 + $0x4c] sm:$0xf]
      %v246 = vld [vmem:[%s219 + $0x50] sm:$0xf]
      %v247 = vld [vmem:[%s219 + $0x54] sm:$0xf]
      %v248 = vld [vmem:[%s219 + $0x58] sm:$0xf]
      %v249 = vld [vmem:[%s219 + $0x5c] sm:$0xf]
      %v250 = vld [vmem:[%s219 + $0x60] sm:$0xf]
      %v251 = vld [vmem:[%s219 + $0x64] sm:$0xf]
      %v252 = vld [vmem:[%s219 + $0x68] sm:$0xf]
      %v253 = vld [vmem:[%s219 + $0x6c] sm:$0xf]
      %v254 = vld [vmem:[%s219 + $0x70] sm:$0xf]
      %v255 = vld [vmem:[%s219 + $0x74] sm:$0xf]
      %v256 = vld [vmem:[%s219 + $0x78] sm:$0xf]
      %v257 = vld [vmem:[%s219 + $0x7c] sm:$0xf]
      %v258 = vld [vmem:[%s219 + $0x80] sm:$0xf]
      %v259 = vld [vmem:[%s219 + $0x84] sm:$0xf]
      %v260 = vld [vmem:[%s219 + $0x88] sm:$0xf]
      %v261 = vld [vmem:[%s219 + $0x8c] sm:$0xf]
      %v262 = vld [vmem:[%s219 + $0x90] sm:$0xf]
      %v263 = vld [vmem:[%s219 + $0x94] sm:$0xf]
      %v264 = vld [vmem:[%s219 + $0x98] sm:$0xf]
      %v265 = vld [vmem:[%s219 + $0x9c] sm:$0xf]
      %v266 = vld [vmem:[%s219 + $0xa0] sm:$0xf]
      %v267 = vld [vmem:[%s219 + $0xa4] sm:$0xf]
      %v268 = vld [vmem:[%s219 + $0xa8] sm:$0xf]
      %v269 = vld [vmem:[%s219 + $0xac] sm:$0xf]
      %v270 = vld [vmem:[%s219 + $0xb0] sm:$0xf]
      %v271 = vld [vmem:[%s219 + $0xb4] sm:$0xf]
      %v272 = vld [vmem:[%s219 + $0xb8] sm:$0xf]
      %v273 = vld [vmem:[%s219 + $0xbc] sm:$0xf]
      %v274 = vld [vmem:[%s219 + $0xc0] sm:$0xf]
      %v275 = vld [vmem:[%s219 + $0xc4] sm:$0xf]
      %v276 = vld [vmem:[%s219 + $0xc8] sm:$0xf]
      %v277 = vld [vmem:[%s219 + $0xcc] sm:$0xf]
      %v278 = vld [vmem:[%s219 + $0xd0] sm:$0xf]
      %v279 = vld [vmem:[%s219 + $0xd4] sm:$0xf]
      %v280 = vld [vmem:[%s219 + $0xd8] sm:$0xf]
      %v281 = vld [vmem:[%s219 + $0xdc] sm:$0xf]
      %v282 = vld [vmem:[%s219 + $0xe0] sm:$0xf]
      %v283 = vld [vmem:[%s219 + $0xe4] sm:$0xf]
      %v284 = vld [vmem:[%s219 + $0xe8] sm:$0xf]
      %v285 = vld [vmem:[%s219 + $0xec] sm:$0xf]
      %v286 = vld [vmem:[%s219 + $0xf0] sm:$0xf]
      %v287 = vld [vmem:[%s219 + $0xf4] sm:$0xf]
      %v288 = vld [vmem:[%s219 + $0xf8] sm:$0xf]
      %v289 = vld [vmem:[%s219 + $0xfc] sm:$0xf]
      %v290 = vld [vmem:[%s219 + $0x100] sm:$0xf]
      %v291 = vld [vmem:[%s219 + $0x104] sm:$0xf]
      %v292 = vld [vmem:[%s219 + $0x108] sm:$0xf]
      %v293 = vld [vmem:[%s219 + $0x10c] sm:$0xf]
      %v294 = vld [vmem:[%s219 + $0x110] sm:$0xf]
      %v295 = vld [vmem:[%s219 + $0x114] sm:$0xf]
      %v296 = vld [vmem:[%s219 + $0x118] sm:$0xf]
      %v297 = vld [vmem:[%s219 + $0x11c] sm:$0xf]
      %v298 = vld [vmem:[%s219 + $0x120] sm:$0xf]
      %v299 = vld [vmem:[%s219 + $0x124] sm:$0xf]
      %v300 = vld [vmem:[%s219 + $0x128] sm:$0xf]
      %v301 = vld [vmem:[%s219 + $0x12c] sm:$0xf]
      %v302 = vld [vmem:[%s219 + $0x130] sm:$0xf]
      %v303 = vld [vmem:[%s219 + $0x134] sm:$0xf]
      %v304 = vld [vmem:[%s219 + $0x138] sm:$0xf]
      %v305 = vld [vmem:[%s219 + $0x13c] sm:$0xf]
      %v306 = vld [vmem:[%s219 + $0x140] sm:$0xf]
      %v307 = vld [vmem:[%s219 + $0x144] sm:$0xf]
      %v308 = vld [vmem:[%s219 + $0x148] sm:$0xf]
      %v309 = vld [vmem:[%s219 + $0x14c] sm:$0xf]
      %v310 = vld [vmem:[%s219 + $0x150] sm:$0xf]
      %v311 = vld [vmem:[%s219 + $0x154] sm:$0xf]
      %v312 = vld [vmem:[%s219 + $0x158] sm:$0xf]
      %v313 = vld [vmem:[%s219 + $0x15c] sm:$0xf]
      %v314 = vld [vmem:[%s219 + $0x160] sm:$0xf]
      %v315 = vld [vmem:[%s219 + $0x164] sm:$0xf]
      %v316 = vld [vmem:[%s219 + $0x168] sm:$0xf]
      %v317 = vld [vmem:[%s219 + $0x16c] sm:$0xf]
      %v318 = vld [vmem:[%s219 + $0x170] sm:$0xf]
      %v319 = vld [vmem:[%s219 + $0x174] sm:$0xf]
      %v320 = vld [vmem:[%s219 + $0x178] sm:$0xf]
      %v321 = vld [vmem:[%s219 + $0x17c] sm:$0xf]
      %v322 = vld [vmem:[%s219 + $0x180] sm:$0xf]
      %v323 = vld [vmem:[%s219 + $0x184] sm:$0xf]
      %v324 = vld [vmem:[%s219 + $0x188] sm:$0xf]
      %v325 = vld [vmem:[%s219 + $0x18c] sm:$0xf]
      %v326 = vld [vmem:[%s219 + $0x190] sm:$0xf]
      %v327 = vld [vmem:[%s219 + $0x194] sm:$0xf]
      %v328 = vld [vmem:[%s219 + $0x198] sm:$0xf]
      %v329 = vld [vmem:[%s219 + $0x19c] sm:$0xf]
      %v330 = vld [vmem:[%s219 + $0x1a0] sm:$0xf]
      %v331 = vld [vmem:[%s219 + $0x1a4] sm:$0xf]
      %v332 = vld [vmem:[%s219 + $0x1a8] sm:$0xf]
      %v333 = vld [vmem:[%s219 + $0x1ac] sm:$0xf]
      %v334 = vld [vmem:[%s219 + $0x1b0] sm:$0xf]
      %v335 = vld [vmem:[%s219 + $0x1b4] sm:$0xf]
      %v336 = vld [vmem:[%s219 + $0x1b8] sm:$0xf]
      %v337 = vld [vmem:[%s219 + $0x1bc] sm:$0xf]
      %v338 = vld [vmem:[%s219 + $0x1c0] sm:$0xf]
      %v339 = vld [vmem:[%s219 + $0x1c4] sm:$0xf]
      %v340 = vld [vmem:[%s219 + $0x1c8] sm:$0xf]
      %v341 = vld [vmem:[%s219 + $0x1cc] sm:$0xf]
      %v342 = vld [vmem:[%s219 + $0x1d0] sm:$0xf]
      %v343 = vld [vmem:[%s219 + $0x1d4] sm:$0xf]
      %v344 = vld [vmem:[%s219 + $0x1d8] sm:$0xf]
      %v345 = vld [vmem:[%s219 + $0x1dc] sm:$0xf]
      %v346 = vld [vmem:[%s219 + $0x1e0] sm:$0xf]
      %v347 = vld [vmem:[%s219 + $0x1e4] sm:$0xf]
      %v348 = vld [vmem:[%s219 + $0x1e8] sm:$0xf]
      %v349 = vld [vmem:[%s219 + $0x1ec] sm:$0xf]
      %v350 = vld [vmem:[%s219 + $0x1f0] sm:$0xf]
      %v351 = vld [vmem:[%s219 + $0x1f4] sm:$0xf]
      %v352 = vld [vmem:[%s219 + $0x1f8] sm:$0xf]
      %v353 = vld [vmem:[%s219 + $0x1fc] sm:$0xf]
      %v354 = vld [vmem:[%s219 + $0x200] sm:$0xf]
      %v355 = vld [vmem:[%s219 + $0x204] sm:$0xf]
      %v356 = vld [vmem:[%s219 + $0x208] sm:$0xf]
      %v357 = vld [vmem:[%s219 + $0x20c] sm:$0xf]
      %v358 = vld [vmem:[%s219 + $0x210] sm:$0xf]
      %v359 = vld [vmem:[%s219 + $0x214] sm:$0xf]
      %v360 = vld [vmem:[%s219 + $0x218] sm:$0xf]
      %v361 = vld [vmem:[%s219 + $0x21c] sm:$0xf]
      %v362 = vld [vmem:[%s219 + $0x220] sm:$0xf]
      %v363 = vld [vmem:[%s219 + $0x224] sm:$0xf]
      %v364 = vld [vmem:[%s219 + $0x228] sm:$0xf]
      %v365 = vld [vmem:[%s219 + $0x22c] sm:$0xf]
      %v366 = vld [vmem:[%s219 + $0x230] sm:$0xf]
      %v367 = vld [vmem:[%s219 + $0x234] sm:$0xf]
      %v368 = vld [vmem:[%s219 + $0x238] sm:$0xf]
      %v369 = vld [vmem:[%s219 + $0x23c] sm:$0xf]
      %v370 = vld [vmem:[%s219 + $0x240] sm:$0xf]
      %v371 = vld [vmem:[%s219 + $0x244] sm:$0xf]
      %v372 = vld [vmem:[%s219 + $0x248] sm:$0xf]
      %v373 = vld [vmem:[%s219 + $0x24c] sm:$0xf]
      %v374 = vld [vmem:[%s219 + $0x250] sm:$0xf]
      %v375 = vld [vmem:[%s219 + $0x254] sm:$0xf]
      %v376 = vld [vmem:[%s219 + $0x258] sm:$0xf]
      %v377 = vld [vmem:[%s219 + $0x25c] sm:$0xf]
      %v378 = vld [vmem:[%s219 + $0x260] sm:$0xf]
      %v379 = vld [vmem:[%s219 + $0x264] sm:$0xf]
      %v380 = vld [vmem:[%s219 + $0x268] sm:$0xf]
      %v381 = vld [vmem:[%s219 + $0x26c] sm:$0xf]
      %v382 = vld [vmem:[%s219 + $0x270] sm:$0xf]
      %v383 = vld [vmem:[%s219 + $0x274] sm:$0xf]
      %v384 = vld [vmem:[%s219 + $0x278] sm:$0xf]
      %v385 = vld [vmem:[%s219 + $0x27c] sm:$0xf]
      %v386 = vld [vmem:[%s219 + $0x280] sm:$0xf]
      %v387 = vld [vmem:[%s219 + $0x284] sm:$0xf]
      %v388 = vld [vmem:[%s219 + $0x288] sm:$0xf]
      %v389 = vld [vmem:[%s219 + $0x28c] sm:$0xf]
      %v390 = vld [vmem:[%s219 + $0x290] sm:$0xf]
      %v391 = vld [vmem:[%s219 + $0x294] sm:$0xf]
      %v392 = vld [vmem:[%s219 + $0x298] sm:$0xf]
      %v393 = vld [vmem:[%s219 + $0x29c] sm:$0xf]
      %v394 = vld [vmem:[%s219 + $0x2a0] sm:$0xf]
      %v395 = vld [vmem:[%s219 + $0x2a4] sm:$0xf]
      %v396 = vld [vmem:[%s219 + $0x2a8] sm:$0xf]
      %v397 = vld [vmem:[%s219 + $0x2ac] sm:$0xf]
      %v398 = vld [vmem:[%s219 + $0x2b0] sm:$0xf]
      %v399 = vld [vmem:[%s219 + $0x2b4] sm:$0xf]
      %v400 = vld [vmem:[%s219 + $0x2b8] sm:$0xf]
      %v401 = vld [vmem:[%s219 + $0x2bc] sm:$0xf]
      %v402 = vld [vmem:[%s219 + $0x2c0] sm:$0xf]
      %v403 = vld [vmem:[%s219 + $0x2c4] sm:$0xf]
      %v404 = vld [vmem:[%s219 + $0x2c8] sm:$0xf]
      %v405 = vld [vmem:[%s219 + $0x2cc] sm:$0xf]
      %v406 = vld [vmem:[%s219 + $0x2d0] sm:$0xf]
      %v407 = vld [vmem:[%s219 + $0x2d4] sm:$0xf]
      %v408 = vld [vmem:[%s219 + $0x2d8] sm:$0xf]
      %v409 = vld [vmem:[%s219 + $0x2dc] sm:$0xf]
      %v410 = vld [vmem:[%s219 + $0x2e0] sm:$0xf]
      %v411 = vld [vmem:[%s219 + $0x2e4] sm:$0xf]
      %v412 = vld [vmem:[%s219 + $0x2e8] sm:$0xf]
      %v413 = vld [vmem:[%s219 + $0x2ec] sm:$0xf]
      %v414 = vld [vmem:[%s219 + $0x2f0] sm:$0xf]
      %v415 = vld [vmem:[%s219 + $0x2f4] sm:$0xf]
      %v416 = vld [vmem:[%s219 + $0x2f8] sm:$0xf]
      %v417 = vld [vmem:[%s219 + $0x2fc] sm:$0xf]
      %v418 = vld [vmem:[%s219 + $0x300] sm:$0xf]
      %v419 = vld [vmem:[%s219 + $0x304] sm:$0xf]
      %v420 = vld [vmem:[%s219 + $0x308] sm:$0xf]
      %v421 = vld [vmem:[%s219 + $0x30c] sm:$0xf]
      %v422 = vld [vmem:[%s219 + $0x310] sm:$0xf]
      %v423 = vld [vmem:[%s219 + $0x314] sm:$0xf]
      %v424 = vld [vmem:[%s219 + $0x318] sm:$0xf]
      %v425 = vld [vmem:[%s219 + $0x31c] sm:$0xf]
      %v426 = vld [vmem:[%s219 + $0x320] sm:$0xf]
      %v427 = vld [vmem:[%s219 + $0x324] sm:$0xf]
      %v428 = vld [vmem:[%s219 + $0x328] sm:$0xf]
      %v429 = vld [vmem:[%s219 + $0x32c] sm:$0xf]
      %v430 = vld [vmem:[%s219 + $0x330] sm:$0xf]
      %v431 = vld [vmem:[%s219 + $0x334] sm:$0xf]
      %v432 = vld [vmem:[%s219 + $0x338] sm:$0xf]
      %v433 = vld [vmem:[%s219 + $0x33c] sm:$0xf]
      %v434 = vld [vmem:[%s219 + $0x340] sm:$0xf]
      %v435 = vld [vmem:[%s219 + $0x344] sm:$0xf]
      %v436 = vld [vmem:[%s219 + $0x348] sm:$0xf]
      %v437 = vld [vmem:[%s219 + $0x34c] sm:$0xf]
      %v438 = vld [vmem:[%s219 + $0x350] sm:$0xf]
      %v439 = vld [vmem:[%s219 + $0x354] sm:$0xf]
      %v440 = vld [vmem:[%s219 + $0x358] sm:$0xf]
      %v441 = vld [vmem:[%s219 + $0x35c] sm:$0xf]
      %v442 = vld [vmem:[%s219 + $0x360] sm:$0xf]
      %v443 = vld [vmem:[%s219 + $0x364] sm:$0xf]
      %v444 = vld [vmem:[%s219 + $0x368] sm:$0xf]
      %v445 = vld [vmem:[%s219 + $0x36c] sm:$0xf]
      %v446 = vld [vmem:[%s219 + $0x370] sm:$0xf]
      %v447 = vld [vmem:[%s219 + $0x374] sm:$0xf]
      %v448 = vld [vmem:[%s219 + $0x378] sm:$0xf]
      %v449 = vld [vmem:[%s219 + $0x37c] sm:$0xf]
      %v450 = vld [vmem:[%s219 + $0x380] sm:$0xf]
      %v451 = vld [vmem:[%s219 + $0x384] sm:$0xf]
      %v452 = vld [vmem:[%s219 + $0x388] sm:$0xf]
      %v453 = vld [vmem:[%s219 + $0x38c] sm:$0xf]
      %v454 = vld [vmem:[%s219 + $0x390] sm:$0xf]
      %v455 = vld [vmem:[%s219 + $0x394] sm:$0xf]
      %v456 = vld [vmem:[%s219 + $0x398] sm:$0xf]
      %v457 = vld [vmem:[%s219 + $0x39c] sm:$0xf]
      %v458 = vld [vmem:[%s219 + $0x3a0] sm:$0xf]
      %v459 = vld [vmem:[%s219 + $0x3a4] sm:$0xf]
      %v460 = vld [vmem:[%s219 + $0x3a8] sm:$0xf]
      %v461 = vld [vmem:[%s219 + $0x3ac] sm:$0xf]
      %v462 = vld [vmem:[%s219 + $0x3b0] sm:$0xf]
      %v463 = vld [vmem:[%s219 + $0x3b4] sm:$0xf]
      %v464 = vld [vmem:[%s219 + $0x3b8] sm:$0xf]
      %v465 = vld [vmem:[%s219 + $0x3bc] sm:$0xf]
      %v466 = vld [vmem:[%s219 + $0x3c0] sm:$0xf]
      %v467 = vld [vmem:[%s219 + $0x3c4] sm:$0xf]
      %v468 = vld [vmem:[%s219 + $0x3c8] sm:$0xf]
      %v469 = vld [vmem:[%s219 + $0x3cc] sm:$0xf]
      %v470 = vld [vmem:[%s219 + $0x3d0] sm:$0xf]
      %v471 = vld [vmem:[%s219 + $0x3d4] sm:$0xf]
      %v472 = vld [vmem:[%s219 + $0x3d8] sm:$0xf]
      %v473 = vld [vmem:[%s219 + $0x3dc] sm:$0xf]
      %v474 = vld [vmem:[%s219 + $0x3e0] sm:$0xf]
      %v475 = vld [vmem:[%s219 + $0x3e4] sm:$0xf]
      %v476 = vld [vmem:[%s219 + $0x3e8] sm:$0xf]
      %v477 = vld [vmem:[%s219 + $0x3ec] sm:$0xf]
      %v478 = vld [vmem:[%s219 + $0x3f0] sm:$0xf]
      %v479 = vld [vmem:[%s219 + $0x3f4] sm:$0xf]
      %v480 = vld [vmem:[%s219 + $0x3f8] sm:$0xf]
      %v481 = vld [vmem:[%s219 + $0x3fc] sm:$0xf]
      %v482 = vld [vmem:[%s1] sm:$0xf]
      %v483 = vld [vmem:[%s1 + $0x4] sm:$0xf]
      %v484 = vld [vmem:[%s1 + $0x8] sm:$0xf]
      %v485 = vld [vmem:[%s1 + $0xc] sm:$0xf]
      %v486 = vld [vmem:[%s2] sm:$0x1]
      %v488 = vlaneseq
      %v489 = vshrl.u32 %v488, 7
      %v490 = vsub.s32 0, %v489
      %v491 = vrot.slane %v486, %v490
      %v749 = vunpack.c.l.b16 %v226
      %v750 = vunpack.c.l.b16 %v227
      %v751 = vunpack.c.l.b16 %v228
      %v752 = vunpack.c.l.b16 %v229
      %v753 = vunpack.c.l.b16 %v230
      %v754 = vunpack.c.l.b16 %v231
      %v755 = vunpack.c.l.b16 %v232
      %v756 = vunpack.c.l.b16 %v233
      %v757 = vunpack.c.l.b16 %v234
      %v758 = vunpack.c.l.b16 %v235
      %v759 = vunpack.c.l.b16 %v236
      %v760 = vunpack.c.l.b16 %v237
      %v761 = vunpack.c.l.b16 %v238
      %v762 = vunpack.c.l.b16 %v239
      %v763 = vunpack.c.l.b16 %v240
      %v764 = vunpack.c.l.b16 %v241
      %v765 = vunpack.c.l.b16 %v242
      %v766 = vunpack.c.l.b16 %v243
      %v767 = vunpack.c.l.b16 %v244
      %v768 = vunpack.c.l.b16 %v245
      %v769 = vunpack.c.l.b16 %v246
      %v770 = vunpack.c.l.b16 %v247
      %v771 = vunpack.c.l.b16 %v248
      %v772 = vunpack.c.l.b16 %v249
      %v773 = vunpack.c.l.b16 %v250
      %v774 = vunpack.c.l.b16 %v251
      %v775 = vunpack.c.l.b16 %v252
      %v776 = vunpack.c.l.b16 %v253
      %v777 = vunpack.c.l.b16 %v254
      %v778 = vunpack.c.l.b16 %v255
      %v779 = vunpack.c.l.b16 %v256
      %v780 = vunpack.c.l.b16 %v257
      %v781 = vunpack.c.l.b16 %v258
      %v782 = vunpack.c.l.b16 %v259
      %v783 = vunpack.c.l.b16 %v260
      %v784 = vunpack.c.l.b16 %v261
      %v785 = vunpack.c.l.b16 %v262
      %v786 = vunpack.c.l.b16 %v263
      %v787 = vunpack.c.l.b16 %v264
      %v788 = vunpack.c.l.b16 %v265
      %v789 = vunpack.c.l.b16 %v266
      %v790 = vunpack.c.l.b16 %v267
      %v791 = vunpack.c.l.b16 %v268
      %v792 = vunpack.c.l.b16 %v269
      %v793 = vunpack.c.l.b16 %v270
      %v794 = vunpack.c.l.b16 %v271
      %v795 = vunpack.c.l.b16 %v272
      %v796 = vunpack.c.l.b16 %v273
      %v797 = vunpack.c.l.b16 %v274
      %v798 = vunpack.c.l.b16 %v275
      %v799 = vunpack.c.l.b16 %v276
      %v800 = vunpack.c.l.b16 %v277
      %v801 = vunpack.c.l.b16 %v278
      %v802 = vunpack.c.l.b16 %v279
      %v803 = vunpack.c.l.b16 %v280
      %v804 = vunpack.c.l.b16 %v281
      %v805 = vunpack.c.l.b16 %v282
      %v806 = vunpack.c.l.b16 %v283
      %v807 = vunpack.c.l.b16 %v284
      %v808 = vunpack.c.l.b16 %v285
      %v809 = vunpack.c.l.b16 %v286
      %v810 = vunpack.c.l.b16 %v287
      %v811 = vunpack.c.l.b16 %v288
      %v812 = vunpack.c.l.b16 %v289
      %v813 = vunpack.c.l.b16 %v290
      %v814 = vunpack.c.l.b16 %v291
      %v815 = vunpack.c.l.b16 %v292
      %v816 = vunpack.c.l.b16 %v293
      %v817 = vunpack.c.l.b16 %v294
      %v818 = vunpack.c.l.b16 %v295
      %v819 = vunpack.c.l.b16 %v296
      %v820 = vunpack.c.l.b16 %v297
      %v821 = vunpack.c.l.b16 %v298
      %v822 = vunpack.c.l.b16 %v299
      %v823 = vunpack.c.l.b16 %v300
      %v824 = vunpack.c.l.b16 %v301
      %v825 = vunpack.c.l.b16 %v302
      %v826 = vunpack.c.l.b16 %v303
      %v827 = vunpack.c.l.b16 %v304
      %v828 = vunpack.c.l.b16 %v305
      %v829 = vunpack.c.l.b16 %v306
      %v830 = vunpack.c.l.b16 %v307
      %v831 = vunpack.c.l.b16 %v308
      %v832 = vunpack.c.l.b16 %v309
      %v833 = vunpack.c.l.b16 %v310
      %v834 = vunpack.c.l.b16 %v311
      %v835 = vunpack.c.l.b16 %v312
      %v836 = vunpack.c.l.b16 %v313
      %v837 = vunpack.c.l.b16 %v314
      %v838 = vunpack.c.l.b16 %v315
      %v839 = vunpack.c.l.b16 %v316
      %v840 = vunpack.c.l.b16 %v317
      %v841 = vunpack.c.l.b16 %v318
      %v842 = vunpack.c.l.b16 %v319
      %v843 = vunpack.c.l.b16 %v320
      %v844 = vunpack.c.l.b16 %v321
      %v845 = vunpack.c.l.b16 %v322
      %v846 = vunpack.c.l.b16 %v323
      %v847 = vunpack.c.l.b16 %v324
      %v848 = vunpack.c.l.b16 %v325
      %v849 = vunpack.c.l.b16 %v326
      %v850 = vunpack.c.l.b16 %v327
      %v851 = vunpack.c.l.b16 %v328
      %v852 = vunpack.c.l.b16 %v329
      %v853 = vunpack.c.l.b16 %v330
      %v854 = vunpack.c.l.b16 %v331
      %v855 = vunpack.c.l.b16 %v332
      %v856 = vunpack.c.l.b16 %v333
      %v857 = vunpack.c.l.b16 %v334
      %v858 = vunpack.c.l.b16 %v335
      %v859 = vunpack.c.l.b16 %v336
      %v860 = vunpack.c.l.b16 %v337
      %v861 = vunpack.c.l.b16 %v338
      %v862 = vunpack.c.l.b16 %v339
      %v863 = vunpack.c.l.b16 %v340
      %v864 = vunpack.c.l.b16 %v341
      %v865 = vunpack.c.l.b16 %v342
      %v866 = vunpack.c.l.b16 %v343
      %v867 = vunpack.c.l.b16 %v344
      %v868 = vunpack.c.l.b16 %v345
      %v869 = vunpack.c.l.b16 %v346
      %v870 = vunpack.c.l.b16 %v347
      %v871 = vunpack.c.l.b16 %v348
      %v872 = vunpack.c.l.b16 %v349
      %v873 = vunpack.c.l.b16 %v350
      %v874 = vunpack.c.l.b16 %v351
      %v875 = vunpack.c.l.b16 %v352
      %v876 = vunpack.c.l.b16 %v353
      %v877 = vunpack.c.l.b16 %v354
      %v878 = vunpack.c.l.b16 %v355
      %v879 = vunpack.c.l.b16 %v356
      %v880 = vunpack.c.l.b16 %v357
      %v881 = vunpack.c.l.b16 %v358
      %v882 = vunpack.c.l.b16 %v359
      %v883 = vunpack.c.l.b16 %v360
      %v884 = vunpack.c.l.b16 %v361
      %v885 = vunpack.c.l.b16 %v362
      %v886 = vunpack.c.l.b16 %v363
      %v887 = vunpack.c.l.b16 %v364
      %v888 = vunpack.c.l.b16 %v365
      %v889 = vunpack.c.l.b16 %v366
      %v890 = vunpack.c.l.b16 %v367
      %v891 = vunpack.c.l.b16 %v368
      %v892 = vunpack.c.l.b16 %v369
      %v893 = vunpack.c.l.b16 %v370
      %v894 = vunpack.c.l.b16 %v371
      %v895 = vunpack.c.l.b16 %v372
      %v896 = vunpack.c.l.b16 %v373
      %v897 = vunpack.c.l.b16 %v374
      %v898 = vunpack.c.l.b16 %v375
      %v899 = vunpack.c.l.b16 %v376
      %v900 = vunpack.c.l.b16 %v377
      %v901 = vunpack.c.l.b16 %v378
      %v902 = vunpack.c.l.b16 %v379
      %v903 = vunpack.c.l.b16 %v380
      %v904 = vunpack.c.l.b16 %v381
      %v905 = vunpack.c.l.b16 %v382
      %v906 = vunpack.c.l.b16 %v383
      %v907 = vunpack.c.l.b16 %v384
      %v908 = vunpack.c.l.b16 %v385
      %v909 = vunpack.c.l.b16 %v386
      %v910 = vunpack.c.l.b16 %v387
      %v911 = vunpack.c.l.b16 %v388
      %v912 = vunpack.c.l.b16 %v389
      %v913 = vunpack.c.l.b16 %v390
      %v914 = vunpack.c.l.b16 %v391
      %v915 = vunpack.c.l.b16 %v392
      %v916 = vunpack.c.l.b16 %v393
      %v917 = vunpack.c.l.b16 %v394
      %v918 = vunpack.c.l.b16 %v395
      %v919 = vunpack.c.l.b16 %v396
      %v920 = vunpack.c.l.b16 %v397
      %v921 = vunpack.c.l.b16 %v398
      %v922 = vunpack.c.l.b16 %v399
      %v923 = vunpack.c.l.b16 %v400
      %v924 = vunpack.c.l.b16 %v401
      %v925 = vunpack.c.l.b16 %v402
      %v926 = vunpack.c.l.b16 %v403
      %v927 = vunpack.c.l.b16 %v404
      %v928 = vunpack.c.l.b16 %v405
      %v929 = vunpack.c.l.b16 %v406
      %v930 = vunpack.c.l.b16 %v407
      %v931 = vunpack.c.l.b16 %v408
      %v932 = vunpack.c.l.b16 %v409
      %v933 = vunpack.c.l.b16 %v410
      %v934 = vunpack.c.l.b16 %v411
      %v935 = vunpack.c.l.b16 %v412
      %v936 = vunpack.c.l.b16 %v413
      %v937 = vunpack.c.l.b16 %v414
      %v938 = vunpack.c.l.b16 %v415
      %v939 = vunpack.c.l.b16 %v416
      %v940 = vunpack.c.l.b16 %v417
      %v941 = vunpack.c.l.b16 %v418
      %v942 = vunpack.c.l.b16 %v419
      %v943 = vunpack.c.l.b16 %v420
      %v944 = vunpack.c.l.b16 %v421
      %v945 = vunpack.c.l.b16 %v422
      %v946 = vunpack.c.l.b16 %v423
      %v947 = vunpack.c.l.b16 %v424
      %v948 = vunpack.c.l.b16 %v425
      %v949 = vunpack.c.l.b16 %v426
      %v950 = vunpack.c.l.b16 %v427
      %v951 = vunpack.c.l.b16 %v428
      %v952 = vunpack.c.l.b16 %v429
      %v953 = vunpack.c.l.b16 %v430
      %v954 = vunpack.c.l.b16 %v431
      %v955 = vunpack.c.l.b16 %v432
      %v956 = vunpack.c.l.b16 %v433
      %v957 = vunpack.c.l.b16 %v434
      %v958 = vunpack.c.l.b16 %v435
      %v959 = vunpack.c.l.b16 %v436
      %v960 = vunpack.c.l.b16 %v437
      %v961 = vunpack.c.l.b16 %v438
      %v962 = vunpack.c.l.b16 %v439
      %v963 = vunpack.c.l.b16 %v440
      %v964 = vunpack.c.l.b16 %v441
      %v965 = vunpack.c.l.b16 %v442
      %v966 = vunpack.c.l.b16 %v443
      %v967 = vunpack.c.l.b16 %v444
      %v968 = vunpack.c.l.b16 %v445
      %v969 = vunpack.c.l.b16 %v446
      %v970 = vunpack.c.l.b16 %v447
      %v971 = vunpack.c.l.b16 %v448
      %v972 = vunpack.c.l.b16 %v449
      %v973 = vunpack.c.l.b16 %v450
      %v974 = vunpack.c.l.b16 %v451
      %v975 = vunpack.c.l.b16 %v452
      %v976 = vunpack.c.l.b16 %v453
      %v977 = vunpack.c.l.b16 %v454
      %v978 = vunpack.c.l.b16 %v455
      %v979 = vunpack.c.l.b16 %v456
      %v980 = vunpack.c.l.b16 %v457
      %v981 = vunpack.c.l.b16 %v458
      %v982 = vunpack.c.l.b16 %v459
      %v983 = vunpack.c.l.b16 %v460
      %v984 = vunpack.c.l.b16 %v461
      %v985 = vunpack.c.l.b16 %v462
      %v986 = vunpack.c.l.b16 %v463
      %v987 = vunpack.c.l.b16 %v464
      %v988 = vunpack.c.l.b16 %v465
      %v989 = vunpack.c.l.b16 %v466
      %v990 = vunpack.c.l.b16 %v467
      %v991 = vunpack.c.l.b16 %v468
      %v992 = vunpack.c.l.b16 %v469
      %v993 = vunpack.c.l.b16 %v470
      %v994 = vunpack.c.l.b16 %v471
      %v995 = vunpack.c.l.b16 %v472
      %v996 = vunpack.c.l.b16 %v473
      %v997 = vunpack.c.l.b16 %v474
      %v998 = vunpack.c.l.b16 %v475
      %v999 = vunpack.c.l.b16 %v476
      %v1000 = vunpack.c.l.b16 %v477
      %v1001 = vunpack.c.l.b16 %v478
      %v1002 = vunpack.c.l.b16 %v479
      %v1003 = vunpack.c.l.b16 %v480
      %v1004 = vunpack.c.l.b16 %v481
      %v1005 = vpack.c.b16 %v750, %v749
      %v1006 = vpack.c.b16 %v752, %v751
      %v1007 = vpack.c.b16 %v754, %v753
      %v1008 = vpack.c.b16 %v756, %v755
      %v1009 = vpack.c.b16 %v758, %v757
      %v1010 = vpack.c.b16 %v760, %v759
      %v1011 = vpack.c.b16 %v762, %v761
      %v1012 = vpack.c.b16 %v764, %v763
      %v1013 = vpack.c.b16 %v766, %v765
      %v1014 = vpack.c.b16 %v768, %v767
      %v1015 = vpack.c.b16 %v770, %v769
      %v1016 = vpack.c.b16 %v772, %v771
      %v1017 = vpack.c.b16 %v774, %v773
      %v1018 = vpack.c.b16 %v776, %v775
      %v1019 = vpack.c.b16 %v778, %v777
      %v1020 = vpack.c.b16 %v780, %v779
      %v1021 = vpack.c.b16 %v782, %v781
      %v1022 = vpack.c.b16 %v784, %v783
      %v1023 = vpack.c.b16 %v786, %v785
      %v1024 = vpack.c.b16 %v788, %v787
      %v1025 = vpack.c.b16 %v790, %v789
      %v1026 = vpack.c.b16 %v792, %v791
      %v1027 = vpack.c.b16 %v794, %v793
      %v1028 = vpack.c.b16 %v796, %v795
      %v1029 = vpack.c.b16 %v798, %v797
      %v1030 = vpack.c.b16 %v800, %v799
      %v1031 = vpack.c.b16 %v802, %v801
      %v1032 = vpack.c.b16 %v804, %v803
      %v1033 = vpack.c.b16 %v806, %v805
      %v1034 = vpack.c.b16 %v808, %v807
      %v1035 = vpack.c.b16 %v810, %v809
      %v1036 = vpack.c.b16 %v812, %v811
      %v1037 = vpack.c.b16 %v814, %v813
      %v1038 = vpack.c.b16 %v816, %v815
      %v1039 = vpack.c.b16 %v818, %v817
      %v1040 = vpack.c.b16 %v820, %v819
      %v1041 = vpack.c.b16 %v822, %v821
      %v1042 = vpack.c.b16 %v824, %v823
      %v1043 = vpack.c.b16 %v826, %v825
      %v1044 = vpack.c.b16 %v828, %v827
      %v1045 = vpack.c.b16 %v830, %v829
      %v1046 = vpack.c.b16 %v832, %v831
      %v1047 = vpack.c.b16 %v834, %v833
      %v1048 = vpack.c.b16 %v836, %v835
      %v1049 = vpack.c.b16 %v838, %v837
      %v1050 = vpack.c.b16 %v840, %v839
      %v1051 = vpack.c.b16 %v842, %v841
      %v1052 = vpack.c.b16 %v844, %v843
      %v1053 = vpack.c.b16 %v846, %v845
      %v1054 = vpack.c.b16 %v848, %v847
      %v1055 = vpack.c.b16 %v850, %v849
      %v1056 = vpack.c.b16 %v852, %v851
      %v1057 = vpack.c.b16 %v854, %v853
      %v1058 = vpack.c.b16 %v856, %v855
      %v1059 = vpack.c.b16 %v858, %v857
      %v1060 = vpack.c.b16 %v860, %v859
      %v1061 = vpack.c.b16 %v862, %v861
      %v1062 = vpack.c.b16 %v864, %v863
      %v1063 = vpack.c.b16 %v866, %v865
      %v1064 = vpack.c.b16 %v868, %v867
      %v1065 = vpack.c.b16 %v870, %v869
      %v1066 = vpack.c.b16 %v872, %v871
      %v1067 = vpack.c.b16 %v874, %v873
      %v1068 = vpack.c.b16 %v876, %v875
      %v1069 = vpack.c.b16 %v878, %v877
      %v1070 = vpack.c.b16 %v880, %v879
      %v1071 = vpack.c.b16 %v882, %v881
      %v1072 = vpack.c.b16 %v884, %v883
      %v1073 = vpack.c.b16 %v886, %v885
      %v1074 = vpack.c.b16 %v888, %v887
      %v1075 = vpack.c.b16 %v890, %v889
      %v1076 = vpack.c.b16 %v892, %v891
      %v1077 = vpack.c.b16 %v894, %v893
      %v1078 = vpack.c.b16 %v896, %v895
      %v1079 = vpack.c.b16 %v898, %v897
      %v1080 = vpack.c.b16 %v900, %v899
      %v1081 = vpack.c.b16 %v902, %v901
      %v1082 = vpack.c.b16 %v904, %v903
      %v1083 = vpack.c.b16 %v906, %v905
      %v1084 = vpack.c.b16 %v908, %v907
      %v1085 = vpack.c.b16 %v910, %v909
      %v1086 = vpack.c.b16 %v912, %v911
      %v1087 = vpack.c.b16 %v914, %v913
      %v1088 = vpack.c.b16 %v916, %v915
      %v1089 = vpack.c.b16 %v918, %v917
      %v1090 = vpack.c.b16 %v920, %v919
      %v1091 = vpack.c.b16 %v922, %v921
      %v1092 = vpack.c.b16 %v924, %v923
      %v1093 = vpack.c.b16 %v926, %v925
      %v1094 = vpack.c.b16 %v928, %v927
      %v1095 = vpack.c.b16 %v930, %v929
      %v1096 = vpack.c.b16 %v932, %v931
      %v1097 = vpack.c.b16 %v934, %v933
      %v1098 = vpack.c.b16 %v936, %v935
      %v1099 = vpack.c.b16 %v938, %v937
      %v1100 = vpack.c.b16 %v940, %v939
      %v1101 = vpack.c.b16 %v942, %v941
      %v1102 = vpack.c.b16 %v944, %v943
      %v1103 = vpack.c.b16 %v946, %v945
      %v1104 = vpack.c.b16 %v948, %v947
      %v1105 = vpack.c.b16 %v950, %v949
      %v1106 = vpack.c.b16 %v952, %v951
      %v1107 = vpack.c.b16 %v954, %v953
      %v1108 = vpack.c.b16 %v956, %v955
      %v1109 = vpack.c.b16 %v958, %v957
      %v1110 = vpack.c.b16 %v960, %v959
      %v1111 = vpack.c.b16 %v962, %v961
      %v1112 = vpack.c.b16 %v964, %v963
      %v1113 = vpack.c.b16 %v966, %v965
      %v1114 = vpack.c.b16 %v968, %v967
      %v1115 = vpack.c.b16 %v970, %v969
      %v1116 = vpack.c.b16 %v972, %v971
      %v1117 = vpack.c.b16 %v974, %v973
      %v1118 = vpack.c.b16 %v976, %v975
      %v1119 = vpack.c.b16 %v978, %v977
      %v1120 = vpack.c.b16 %v980, %v979
      %v1121 = vpack.c.b16 %v982, %v981
      %v1122 = vpack.c.b16 %v984, %v983
      %v1123 = vpack.c.b16 %v986, %v985
      %v1124 = vpack.c.b16 %v988, %v987
      %v1125 = vpack.c.b16 %v990, %v989
      %v1126 = vpack.c.b16 %v992, %v991
      %v1127 = vpack.c.b16 %v994, %v993
      %v1128 = vpack.c.b16 %v996, %v995
      %v1129 = vpack.c.b16 %v998, %v997
      %v1130 = vpack.c.b16 %v1000, %v999
      %v1131 = vpack.c.b16 %v1002, %v1001
      %v1132 = vpack.c.b16 %v1004, %v1003
      %v1137 = vunpack.c.l.b16 %v482
      %v1138 = vunpack.c.l.b16 %v483
      %v1139 = vunpack.c.l.b16 %v484
      %v1140 = vunpack.c.l.b16 %v485
      %v1141 = vpack.c.b16 %v1138, %v1137
      %v1142 = vpack.c.b16 %v1140, %v1139
      %vm1145 = vcmask 261120
      %v1147 = vsel %vm1145, %v1005, 0
      %v1150 = vsel %vm1145, %v1006, 0
      %v1153 = vsel %vm1145, %v1007, 0
      %v1156 = vsel %vm1145, %v1008, 0
      %v1159 = vsel %vm1145, %v1009, 0
      %v1162 = vsel %vm1145, %v1010, 0
      %v1165 = vsel %vm1145, %v1011, 0
      %v1168 = vsel %vm1145, %v1012, 0
      %v1171 = vsel %vm1145, %v1013, 0
      %v1174 = vsel %vm1145, %v1014, 0
      %v1177 = vsel %vm1145, %v1015, 0
      %v1180 = vsel %vm1145, %v1016, 0
      %v1183 = vsel %vm1145, %v1017, 0
      %v1186 = vsel %vm1145, %v1018, 0
      %v1189 = vsel %vm1145, %v1019, 0
      %v1192 = vsel %vm1145, %v1020, 0
      %v1195 = vsel %vm1145, %v1021, 0
      %v1198 = vsel %vm1145, %v1022, 0
      %v1201 = vsel %vm1145, %v1023, 0
      %v1204 = vsel %vm1145, %v1024, 0
      %v1207 = vsel %vm1145, %v1025, 0
      %v1210 = vsel %vm1145, %v1026, 0
      %v1213 = vsel %vm1145, %v1027, 0
      %v1216 = vsel %vm1145, %v1028, 0
      %v1219 = vsel %vm1145, %v1029, 0
      %v1222 = vsel %vm1145, %v1030, 0
      %v1225 = vsel %vm1145, %v1031, 0
      %v1228 = vsel %vm1145, %v1032, 0
      %v1231 = vsel %vm1145, %v1033, 0
      %v1234 = vsel %vm1145, %v1034, 0
      %v1237 = vsel %vm1145, %v1035, 0
      %v1240 = vsel %vm1145, %v1036, 0
      %v1243 = vsel %vm1145, %v1037, 0
      %v1246 = vsel %vm1145, %v1038, 0
      %v1249 = vsel %vm1145, %v1039, 0
      %v1252 = vsel %vm1145, %v1040, 0
      %v1255 = vsel %vm1145, %v1041, 0
      %v1258 = vsel %vm1145, %v1042, 0
      %v1261 = vsel %vm1145, %v1043, 0
      %v1264 = vsel %vm1145, %v1044, 0
      %v1267 = vsel %vm1145, %v1045, 0
      %v1270 = vsel %vm1145, %v1046, 0
      %v1273 = vsel %vm1145, %v1047, 0
      %v1276 = vsel %vm1145, %v1048, 0
      %v1279 = vsel %vm1145, %v1049, 0
      %v1282 = vsel %vm1145, %v1050, 0
      %v1285 = vsel %vm1145, %v1051, 0
      %v1288 = vsel %vm1145, %v1052, 0
      %v1291 = vsel %vm1145, %v1053, 0
      %v1294 = vsel %vm1145, %v1054, 0
      %v1297 = vsel %vm1145, %v1055, 0
      %v1300 = vsel %vm1145, %v1056, 0
      %v1303 = vsel %vm1145, %v1057, 0
      %v1306 = vsel %vm1145, %v1058, 0
      %v1309 = vsel %vm1145, %v1059, 0
      %v1312 = vsel %vm1145, %v1060, 0
      %v1315 = vsel %vm1145, %v1061, 0
      %v1318 = vsel %vm1145, %v1062, 0
      %v1321 = vsel %vm1145, %v1063, 0
      %v1324 = vsel %vm1145, %v1064, 0
      %v1327 = vsel %vm1145, %v1065, 0
      %v1330 = vsel %vm1145, %v1066, 0
      %v1333 = vsel %vm1145, %v1067, 0
      %v1336 = vsel %vm1145, %v1068, 0
      %v1339 = vsel %vm1145, %v1069, 0
      %v1342 = vsel %vm1145, %v1070, 0
      %v1345 = vsel %vm1145, %v1071, 0
      %v1348 = vsel %vm1145, %v1072, 0
      %v1351 = vsel %vm1145, %v1073, 0
      %v1354 = vsel %vm1145, %v1074, 0
      %v1357 = vsel %vm1145, %v1075, 0
      %v1360 = vsel %vm1145, %v1076, 0
      %v1363 = vsel %vm1145, %v1077, 0
      %v1366 = vsel %vm1145, %v1078, 0
      %v1369 = vsel %vm1145, %v1079, 0
      %v1372 = vsel %vm1145, %v1080, 0
      %v1375 = vsel %vm1145, %v1081, 0
      %v1378 = vsel %vm1145, %v1082, 0
      %v1381 = vsel %vm1145, %v1083, 0
      %v1384 = vsel %vm1145, %v1084, 0
      %v1387 = vsel %vm1145, %v1085, 0
      %v1390 = vsel %vm1145, %v1086, 0
      %v1393 = vsel %vm1145, %v1087, 0
      %v1396 = vsel %vm1145, %v1088, 0
      %v1399 = vsel %vm1145, %v1089, 0
      %v1402 = vsel %vm1145, %v1090, 0
      %v1405 = vsel %vm1145, %v1091, 0
      %v1408 = vsel %vm1145, %v1092, 0
      %v1411 = vsel %vm1145, %v1093, 0
      %v1414 = vsel %vm1145, %v1094, 0
      %v1417 = vsel %vm1145, %v1095, 0
      %v1420 = vsel %vm1145, %v1096, 0
      %v1423 = vsel %vm1145, %v1097, 0
      %v1426 = vsel %vm1145, %v1098, 0
      %v1429 = vsel %vm1145, %v1099, 0
      %v1432 = vsel %vm1145, %v1100, 0
      %v1435 = vsel %vm1145, %v1101, 0
      %v1438 = vsel %vm1145, %v1102, 0
      %v1441 = vsel %vm1145, %v1103, 0
      %v1444 = vsel %vm1145, %v1104, 0
      %v1447 = vsel %vm1145, %v1105, 0
      %v1450 = vsel %vm1145, %v1106, 0
      %v1453 = vsel %vm1145, %v1107, 0
      %v1456 = vsel %vm1145, %v1108, 0
      %v1459 = vsel %vm1145, %v1109, 0
      %v1462 = vsel %vm1145, %v1110, 0
      %v1465 = vsel %vm1145, %v1111, 0
      %v1468 = vsel %vm1145, %v1112, 0
      %v1471 = vsel %vm1145, %v1113, 0
      %v1474 = vsel %vm1145, %v1114, 0
      %v1477 = vsel %vm1145, %v1115, 0
      %v1480 = vsel %vm1145, %v1116, 0
      %v1483 = vsel %vm1145, %v1117, 0
      %v1486 = vsel %vm1145, %v1118, 0
      %v1489 = vsel %vm1145, %v1119, 0
      %v1492 = vsel %vm1145, %v1120, 0
      %v1495 = vsel %vm1145, %v1121, 0
      %v1498 = vsel %vm1145, %v1122, 0
      %v1501 = vsel %vm1145, %v1123, 0
      %v1504 = vsel %vm1145, %v1124, 0
      %v1507 = vsel %vm1145, %v1125, 0
      %v1510 = vsel %vm1145, %v1126, 0
      %v1513 = vsel %vm1145, %v1127, 0
      %v1516 = vsel %vm1145, %v1128, 0
      %v1519 = vsel %vm1145, %v1129, 0
      %v1522 = vsel %vm1145, %v1130, 0
      %v1525 = vsel %vm1145, %v1131, 0
      %v1528 = vsel %vm1145, %v1132, 0
      %1530 = vmatprep.subr.bf16.mxu0 0
      %1531 = vmatpush1.bf16.msra.mxu0 %v1141
      %1532 = vmatprep.subr.bf16.mxu0 0
      %1533 = vmatpush1.bf16.msra.mxu0 %v1142
      %1534 = vmatprep.subr.bf16.mxu0 0
      %1535 = vmatpush1.bf16.msra.mxu0 0
      %1536 = vmatprep.subr.bf16.mxu0 0
      %1537 = vmatpush1.bf16.msra.mxu0 0
      %1538 = vmatprep.subr.bf16.mxu0 0
      %1539 = vmatpush1.bf16.msra.mxu0 0
      %1540 = vmatprep.subr.bf16.mxu0 0
      %1541 = vmatpush1.bf16.msra.mxu0 0
      %1542 = vmatprep.subr.bf16.mxu0 0
      %1543 = vmatpush1.bf16.msra.mxu0 0
      %1544 = vmatprep.subr.bf16.mxu0 0
      %1545 = vmatpush1.bf16.msra.mxu0 0
      %1546 = vmatprep.subr.bf16.mxu0 0
      %1547 = vmatpush1.bf16.msra.mxu0 0
      %1548 = vmatprep.subr.bf16.mxu0 0
      %1549 = vmatpush1.bf16.msra.mxu0 0
      %1550 = vmatprep.subr.bf16.mxu0 0
      %1551 = vmatpush1.bf16.msra.mxu0 0
      %1552 = vmatprep.subr.bf16.mxu0 0
      %1553 = vmatpush1.bf16.msra.mxu0 0
      %1554 = vmatprep.subr.bf16.mxu0 0
      %1555 = vmatpush1.bf16.msra.mxu0 0
      %1556 = vmatprep.subr.bf16.mxu0 0
      %1557 = vmatpush1.bf16.msra.mxu0 0
      %1558 = vmatprep.subr.bf16.mxu0 0
      %1559 = vmatpush1.bf16.msra.mxu0 0
      %1560 = vmatprep.subr.bf16.mxu0 0
      %1561 = vmatpush1.bf16.msra.mxu0 0
      %1562 = vmatprep.mubr.bf16.mxu0 0
      %1563 = vmatmul.mubr.bf16.gmra.mrb[0].mxu0 %v1147
      %v1564 = vpop.f32.mrb[0].mxu0
      %v1565 = vadd.f32 %v491, %v1564
      %v1566 = vpop.f32.mrb[0].mxu0
      %v1567 = vpop.f32.mrb[0].mxu0
      %v1568 = vadd.f32 %v491, %v1567
      %v1569 = vpop.f32.mrb[0].mxu0
      %1570 = vmatprep.mubr.bf16.mxu0 0
      %1571 = vmatmul.mubr.bf16.gmra.mrb[0].mxu0 %v1150
      %v1572 = vpop.f32.mrb[0].mxu0
      %v1573 = vadd.f32 %v491, %v1572
      %v1574 = vpop.f32.mrb[0].mxu0
      %v1575 = vpop.f32.mrb[0].mxu0
      %v1576 = vadd.f32 %v491, %v1575
      %v1577 = vpop.f32.mrb[0].mxu0
      %1578 = vmatprep.mubr.bf16.mxu0 0
      %1579 = vmatmul.mubr.bf16.gmra.mrb[0].mxu0 %v1153
      %v1580 = vpop.f32.mrb[0].mxu0
      %v1581 = vadd.f32 %v491, %v1580
      %v1582 = vpop.f32.mrb[0].mxu0
      %v1583 = vpop.f32.mrb[0].mxu0
      %v1584 = vadd.f32 %v491, %v1583
      %v1585 = vpop.f32.mrb[0].mxu0
      %1586 = vmatprep.mubr.bf16.mxu0 0
      %1587 = vmatmul.mubr.bf16.gmra.mrb[0].mxu0 %v1156
      %v1588 = vpop.f32.mrb[0].mxu0
      %v1589 = vadd.f32 %v491, %v1588
      %v1590 = vpop.f32.mrb[0].mxu0
      %v1591 = vpop.f32.mrb[0].mxu0
      %v1592 = vadd.f32 %v491, %v1591
      %v1593 = vpop.f32.mrb[0].mxu0
      %1594 = vmatprep.mubr.bf16.mxu0 0
      %1595 = vmatmul.mubr.bf16.gmra.mrb[0].mxu0 %v1159
      %v1596 = vpop.f32.mrb[0].mxu0
      %v1597 = vadd.f32 %v491, %v1596
      %v1598 = vpop.f32.mrb[0].mxu0
      %v1599 = vpop.f32.mrb[0].mxu0
      %v1600 = vadd.f32 %v491, %v1599
      %v1601 = vpop.f32.mrb[0].mxu0
      %1602 = vmatprep.mubr.bf16.mxu0 0
      %1603 = vmatmul.mubr.bf16.gmra.mrb[0].mxu0 %v1162
      %v1604 = vpop.f32.mrb[0].mxu0
      %v1605 = vadd.f32 %v491, %v1604
      %v1606 = vpop.f32.mrb[0].mxu0
      %v1607 = vpop.f32.mrb[0].mxu0
      %v1608 = vadd.f32 %v491, %v1607
      %v1609 = vpop.f32.mrb[0].mxu0
      %1610 = vmatprep.mubr.bf16.mxu0 0
      %1611 = vmatmul.mubr.bf16.gmra.mrb[0].mxu0 %v1165
      %v1612 = vpop.f32.mrb[0].mxu0
      %v1613 = vadd.f32 %v491, %v1612
      %v1614 = vpop.f32.mrb[0].mxu0
      %v1615 = vpop.f32.mrb[0].mxu0
      %v1616 = vadd.f32 %v491, %v1615
      %v1617 = vpop.f32.mrb[0].mxu0
      %1618 = vmatprep.mubr.bf16.mxu0 0
      %1619 = vmatmul.mubr.bf16.gmra.mrb[0].mxu0 %v1168
      %v1620 = vpop.f32.mrb[0].mxu0
      %v1621 = vadd.f32 %v491, %v1620
      %v1622 = vpop.f32.mrb[0].mxu0
      %v1623 = vpop.f32.mrb[0].mxu0
      %v1624 = vadd.f32 %v491, %v1623
      %v1625 = vpop.f32.mrb[0].mxu0
      %1626 = vmatprep.mubr.bf16.mxu0 0
      %1627 = vmatmul.mubr.bf16.gmra.mrb[0].mxu0 %v1171
      %v1628 = vpop.f32.mrb[0].mxu0
      %v1629 = vadd.f32 %v491, %v1628
      %v1630 = vpop.f32.mrb[0].mxu0
      %v1631 = vpop.f32.mrb[0].mxu0
      %v1632 = vadd.f32 %v491, %v1631
      %v1633 = vpop.f32.mrb[0].mxu0
      %1634 = vmatprep.mubr.bf16.mxu0 0
      %1635 = vmatmul.mubr.bf16.gmra.mrb[0].mxu0 %v1174
      %v1636 = vpop.f32.mrb[0].mxu0
      %v1637 = vadd.f32 %v491, %v1636
      %v1638 = vpop.f32.mrb[0].mxu0
      %v1639 = vpop.f32.mrb[0].mxu0
      %v1640 = vadd.f32 %v491, %v1639
      %v1641 = vpop.f32.mrb[0].mxu0
      %1642 = vmatprep.mubr.bf16.mxu0 0
      %1643 = vmatmul.mubr.bf16.gmra.mrb[0].mxu0 %v1177
      %v1644 = vpop.f32.mrb[0].mxu0
      %v1645 = vadd.f32 %v491, %v1644
      %v1646 = vpop.f32.mrb[0].mxu0
      %v1647 = vpop.f32.mrb[0].mxu0
      %v1648 = vadd.f32 %v491, %v1647
      %v1649 = vpop.f32.mrb[0].mxu0
      %1650 = vmatprep.mubr.bf16.mxu0 0
      %1651 = vmatmul.mubr.bf16.gmra.mrb[0].mxu0 %v1180
      %v1652 = vpop.f32.mrb[0].mxu0
      %v1653 = vadd.f32 %v491, %v1652
      %v1654 = vpop.f32.mrb[0].mxu0
      %v1655 = vpop.f32.mrb[0].mxu0
      %v1656 = vadd.f32 %v491, %v1655
      %v1657 = vpop.f32.mrb[0].mxu0
      %1658 = vmatprep.mubr.bf16.mxu0 0
      %1659 = vmatmul.mubr.bf16.gmra.mrb[0].mxu0 %v1183
      %v1660 = vpop.f32.mrb[0].mxu0
      %v1661 = vadd.f32 %v491, %v1660
      %v1662 = vpop.f32.mrb[0].mxu0
      %v1663 = vpop.f32.mrb[0].mxu0
      %v1664 = vadd.f32 %v491, %v1663
      %v1665 = vpop.f32.mrb[0].mxu0
      %1666 = vmatprep.mubr.bf16.mxu0 0
      %1667 = vmatmul.mubr.bf16.gmra.mrb[0].mxu0 %v1186
      %v1668 = vpop.f32.mrb[0].mxu0
      %v1669 = vadd.f32 %v491, %v1668
      %v1670 = vpop.f32.mrb[0].mxu0
      %v1671 = vpop.f32.mrb[0].mxu0
      %v1672 = vadd.f32 %v491, %v1671
      %v1673 = vpop.f32.mrb[0].mxu0
      %1674 = vmatprep.mubr.bf16.mxu0 0
      %1675 = vmatmul.mubr.bf16.gmra.mrb[0].mxu0 %v1189
      %v1676 = vpop.f32.mrb[0].mxu0
      %v1677 = vadd.f32 %v491, %v1676
      %v1678 = vpop.f32.mrb[0].mxu0
      %v1679 = vpop.f32.mrb[0].mxu0
      %v1680 = vadd.f32 %v491, %v1679
      %v1681 = vpop.f32.mrb[0].mxu0
      %1682 = vmatprep.mubr.bf16.mxu0 0
      %1683 = vmatmul.mubr.bf16.gmra.mrb[0].mxu0 %v1192
      %v1684 = vpop.f32.mrb[0].mxu0
      %v1685 = vadd.f32 %v491, %v1684
      %v1686 = vpop.f32.mrb[0].mxu0
      %v1687 = vpop.f32.mrb[0].mxu0
      %v1688 = vadd.f32 %v491, %v1687
      %v1689 = vpop.f32.mrb[0].mxu0
      %1690 = vmatprep.mubr.bf16.mxu0 0
      %1691 = vmatmul.mubr.bf16.gmra.mrb[0].mxu0 %v1195
      %v1692 = vpop.f32.mrb[0].mxu0
      %v1693 = vadd.f32 %v491, %v1692
      %v1694 = vpop.f32.mrb[0].mxu0
      %v1695 = vpop.f32.mrb[0].mxu0
      %v1696 = vadd.f32 %v491, %v1695
      %v1697 = vpop.f32.mrb[0].mxu0
      %1698 = vmatprep.mubr.bf16.mxu0 0
      %1699 = vmatmul.mubr.bf16.gmra.mrb[0].mxu0 %v1198
      %v1700 = vpop.f32.mrb[0].mxu0
      %v1701 = vadd.f32 %v491, %v1700
      %v1702 = vpop.f32.mrb[0].mxu0
      %v1703 = vpop.f32.mrb[0].mxu0
      %v1704 = vadd.f32 %v491, %v1703
      %v1705 = vpop.f32.mrb[0].mxu0
      %1706 = vmatprep.mubr.bf16.mxu0 0
      %1707 = vmatmul.mubr.bf16.gmra.mrb[0].mxu0 %v1201
      %v1708 = vpop.f32.mrb[0].mxu0
      %v1709 = vadd.f32 %v491, %v1708
      %v1710 = vpop.f32.mrb[0].mxu0
      %v1711 = vpop.f32.mrb[0].mxu0
      %v1712 = vadd.f32 %v491, %v1711
      %v1713 = vpop.f32.mrb[0].mxu0
      %1714 = vmatprep.mubr.bf16.mxu0 0
      %1715 = vmatmul.mubr.bf16.gmra.mrb[0].mxu0 %v1204
      %v1716 = vpop.f32.mrb[0].mxu0
      %v1717 = vadd.f32 %v491, %v1716
      %v1718 = vpop.f32.mrb[0].mxu0
      %v1719 = vpop.f32.mrb[0].mxu0
      %v1720 = vadd.f32 %v491, %v1719
      %v1721 = vpop.f32.mrb[0].mxu0
      %1722 = vmatprep.mubr.bf16.mxu0 0
      %1723 = vmatmul.mubr.bf16.gmra.mrb[0].mxu0 %v1207
      %v1724 = vpop.f32.mrb[0].mxu0
      %v1725 = vadd.f32 %v491, %v1724
      %v1726 = vpop.f32.mrb[0].mxu0
      %v1727 = vpop.f32.mrb[0].mxu0
      %v1728 = vadd.f32 %v491, %v1727
      %v1729 = vpop.f32.mrb[0].mxu0
      %1730 = vmatprep.mubr.bf16.mxu0 0
      %1731 = vmatmul.mubr.bf16.gmra.mrb[0].mxu0 %v1210
      %v1732 = vpop.f32.mrb[0].mxu0
      %v1733 = vadd.f32 %v491, %v1732
      %v1734 = vpop.f32.mrb[0].mxu0
      %v1735 = vpop.f32.mrb[0].mxu0
      %v1736 = vadd.f32 %v491, %v1735
      %v1737 = vpop.f32.mrb[0].mxu0
      %1738 = vmatprep.mubr.bf16.mxu0 0
      %1739 = vmatmul.mubr.bf16.gmra.mrb[0].mxu0 %v1213
      %v1740 = vpop.f32.mrb[0].mxu0
      %v1741 = vadd.f32 %v491, %v1740
      %v1742 = vpop.f32.mrb[0].mxu0
      %v1743 = vpop.f32.mrb[0].mxu0
      %v1744 = vadd.f32 %v491, %v1743
      %v1745 = vpop.f32.mrb[0].mxu0
      %1746 = vmatprep.mubr.bf16.mxu0 0
      %1747 = vmatmul.mubr.bf16.gmra.mrb[0].mxu0 %v1216
      %v1748 = vpop.f32.mrb[0].mxu0
      %v1749 = vadd.f32 %v491, %v1748
      %v1750 = vpop.f32.mrb[0].mxu0
      %v1751 = vpop.f32.mrb[0].mxu0
      %v1752 = vadd.f32 %v491, %v1751
      %v1753 = vpop.f32.mrb[0].mxu0
      %1754 = vmatprep.mubr.bf16.mxu0 0
      %1755 = vmatmul.mubr.bf16.gmra.mrb[0].mxu0 %v1219
      %v1756 = vpop.f32.mrb[0].mxu0
      %v1757 = vadd.f32 %v491, %v1756
      %v1758 = vpop.f32.mrb[0].mxu0
      %v1759 = vpop.f32.mrb[0].mxu0
      %v1760 = vadd.f32 %v491, %v1759
      %v1761 = vpop.f32.mrb[0].mxu0
      %1762 = vmatprep.mubr.bf16.mxu0 0
      %1763 = vmatmul.mubr.bf16.gmra.mrb[0].mxu0 %v1222
      %v1764 = vpop.f32.mrb[0].mxu0
      %v1765 = vadd.f32 %v491, %v1764
      %v1766 = vpop.f32.mrb[0].mxu0
      %v1767 = vpop.f32.mrb[0].mxu0
      %v1768 = vadd.f32 %v491, %v1767
      %v1769 = vpop.f32.mrb[0].mxu0
      %1770 = vmatprep.mubr.bf16.mxu0 0
      %1771 = vmatmul.mubr.bf16.gmra.mrb[0].mxu0 %v1225
      %v1772 = vpop.f32.mrb[0].mxu0
      %v1773 = vadd.f32 %v491, %v1772
      %v1774 = vpop.f32.mrb[0].mxu0
      %v1775 = vpop.f32.mrb[0].mxu0
      %v1776 = vadd.f32 %v491, %v1775
      %v1777 = vpop.f32.mrb[0].mxu0
      %1778 = vmatprep.mubr.bf16.mxu0 0
      %1779 = vmatmul.mubr.bf16.gmra.mrb[0].mxu0 %v1228
      %v1780 = vpop.f32.mrb[0].mxu0
      %v1781 = vadd.f32 %v491, %v1780
      %v1782 = vpop.f32.mrb[0].mxu0
      %v1783 = vpop.f32.mrb[0].mxu0
      %v1784 = vadd.f32 %v491, %v1783
      %v1785 = vpop.f32.mrb[0].mxu0
      %1786 = vmatprep.mubr.bf16.mxu0 0
      %1787 = vmatmul.mubr.bf16.gmra.mrb[0].mxu0 %v1231
      %v1788 = vpop.f32.mrb[0].mxu0
      %v1789 = vadd.f32 %v491, %v1788
      %v1790 = vpop.f32.mrb[0].mxu0
      %v1791 = vpop.f32.mrb[0].mxu0
      %v1792 = vadd.f32 %v491, %v1791
      %v1793 = vpop.f32.mrb[0].mxu0
      %1794 = vmatprep.mubr.bf16.mxu0 0
      %1795 = vmatmul.mubr.bf16.gmra.mrb[0].mxu0 %v1234
      %v1796 = vpop.f32.mrb[0].mxu0
      %v1797 = vadd.f32 %v491, %v1796
      %v1798 = vpop.f32.mrb[0].mxu0
      %v1799 = vpop.f32.mrb[0].mxu0
      %v1800 = vadd.f32 %v491, %v1799
      %v1801 = vpop.f32.mrb[0].mxu0
      %1802 = vmatprep.mubr.bf16.mxu0 0
      %1803 = vmatmul.mubr.bf16.gmra.mrb[0].mxu0 %v1237
      %v1804 = vpop.f32.mrb[0].mxu0
      %v1805 = vadd.f32 %v491, %v1804
      %v1806 = vpop.f32.mrb[0].mxu0
      %v1807 = vpop.f32.mrb[0].mxu0
      %v1808 = vadd.f32 %v491, %v1807
      %v1809 = vpop.f32.mrb[0].mxu0
      %1810 = vmatprep.mubr.bf16.mxu0 0
      %1811 = vmatmul.mubr.bf16.gmra.mrb[0].mxu0 %v1240
      %v1812 = vpop.f32.mrb[0].mxu0
      %v1813 = vadd.f32 %v491, %v1812
      %v1814 = vpop.f32.mrb[0].mxu0
      %v1815 = vpop.f32.mrb[0].mxu0
      %v1816 = vadd.f32 %v491, %v1815
      %v1817 = vpop.f32.mrb[0].mxu0
      %1818 = vmatprep.mubr.bf16.mxu0 0
      %1819 = vmatmul.mubr.bf16.gmra.mrb[0].mxu0 %v1243
      %v1820 = vpop.f32.mrb[0].mxu0
      %v1821 = vadd.f32 %v491, %v1820
      %v1822 = vpop.f32.mrb[0].mxu0
      %v1823 = vpop.f32.mrb[0].mxu0
      %v1824 = vadd.f32 %v491, %v1823
      %v1825 = vpop.f32.mrb[0].mxu0
      %1826 = vmatprep.mubr.bf16.mxu0 0
      %1827 = vmatmul.mubr.bf16.gmra.mrb[0].mxu0 %v1246
      %v1828 = vpop.f32.mrb[0].mxu0
      %v1829 = vadd.f32 %v491, %v1828
      %v1830 = vpop.f32.mrb[0].mxu0
      %v1831 = vpop.f32.mrb[0].mxu0
      %v1832 = vadd.f32 %v491, %v1831
      %v1833 = vpop.f32.mrb[0].mxu0
      %1834 = vmatprep.mubr.bf16.mxu0 0
      %1835 = vmatmul.mubr.bf16.gmra.mrb[0].mxu0 %v1249
      %v1836 = vpop.f32.mrb[0].mxu0
      %v1837 = vadd.f32 %v491, %v1836
      %v1838 = vpop.f32.mrb[0].mxu0
      %v1839 = vpop.f32.mrb[0].mxu0
      %v1840 = vadd.f32 %v491, %v1839
      %v1841 = vpop.f32.mrb[0].mxu0
      %1842 = vmatprep.mubr.bf16.mxu0 0
      %1843 = vmatmul.mubr.bf16.gmra.mrb[0].mxu0 %v1252
      %v1844 = vpop.f32.mrb[0].mxu0
      %v1845 = vadd.f32 %v491, %v1844
      %v1846 = vpop.f32.mrb[0].mxu0
      %v1847 = vpop.f32.mrb[0].mxu0
      %v1848 = vadd.f32 %v491, %v1847
      %v1849 = vpop.f32.mrb[0].mxu0
      %1850 = vmatprep.mubr.bf16.mxu0 0
      %1851 = vmatmul.mubr.bf16.gmra.mrb[0].mxu0 %v1255
      %v1852 = vpop.f32.mrb[0].mxu0
      %v1853 = vadd.f32 %v491, %v1852
      %v1854 = vpop.f32.mrb[0].mxu0
      %v1855 = vpop.f32.mrb[0].mxu0
      %v1856 = vadd.f32 %v491, %v1855
      %v1857 = vpop.f32.mrb[0].mxu0
      %1858 = vmatprep.mubr.bf16.mxu0 0
      %1859 = vmatmul.mubr.bf16.gmra.mrb[0].mxu0 %v1258
      %v1860 = vpop.f32.mrb[0].mxu0
      %v1861 = vadd.f32 %v491, %v1860
      %v1862 = vpop.f32.mrb[0].mxu0
      %v1863 = vpop.f32.mrb[0].mxu0
      %v1864 = vadd.f32 %v491, %v1863
      %v1865 = vpop.f32.mrb[0].mxu0
      %1866 = vmatprep.mubr.bf16.mxu0 0
      %1867 = vmatmul.mubr.bf16.gmra.mrb[0].mxu0 %v1261
      %v1868 = vpop.f32.mrb[0].mxu0
      %v1869 = vadd.f32 %v491, %v1868
      %v1870 = vpop.f32.mrb[0].mxu0
      %v1871 = vpop.f32.mrb[0].mxu0
      %v1872 = vadd.f32 %v491, %v1871
      %v1873 = vpop.f32.mrb[0].mxu0
      %1874 = vmatprep.mubr.bf16.mxu0 0
      %1875 = vmatmul.mubr.bf16.gmra.mrb[0].mxu0 %v1264
      %v1876 = vpop.f32.mrb[0].mxu0
      %v1877 = vadd.f32 %v491, %v1876
      %v1878 = vpop.f32.mrb[0].mxu0
      %v1879 = vpop.f32.mrb[0].mxu0
      %v1880 = vadd.f32 %v491, %v1879
      %v1881 = vpop.f32.mrb[0].mxu0
      %1882 = vmatprep.mubr.bf16.mxu0 0
      %1883 = vmatmul.mubr.bf16.gmra.mrb[0].mxu0 %v1267
      %v1884 = vpop.f32.mrb[0].mxu0
      %v1885 = vadd.f32 %v491, %v1884
      %v1886 = vpop.f32.mrb[0].mxu0
      %v1887 = vpop.f32.mrb[0].mxu0
      %v1888 = vadd.f32 %v491, %v1887
      %v1889 = vpop.f32.mrb[0].mxu0
      %1890 = vmatprep.mubr.bf16.mxu0 0
      %1891 = vmatmul.mubr.bf16.gmra.mrb[0].mxu0 %v1270
      %v1892 = vpop.f32.mrb[0].mxu0
      %v1893 = vadd.f32 %v491, %v1892
      %v1894 = vpop.f32.mrb[0].mxu0
      %v1895 = vpop.f32.mrb[0].mxu0
      %v1896 = vadd.f32 %v491, %v1895
      %v1897 = vpop.f32.mrb[0].mxu0
      %1898 = vmatprep.mubr.bf16.mxu0 0
      %1899 = vmatmul.mubr.bf16.gmra.mrb[0].mxu0 %v1273
      %v1900 = vpop.f32.mrb[0].mxu0
      %v1901 = vadd.f32 %v491, %v1900
      %v1902 = vpop.f32.mrb[0].mxu0
      %v1903 = vpop.f32.mrb[0].mxu0
      %v1904 = vadd.f32 %v491, %v1903
      %v1905 = vpop.f32.mrb[0].mxu0
      %1906 = vmatprep.mubr.bf16.mxu0 0
      %1907 = vmatmul.mubr.bf16.gmra.mrb[0].mxu0 %v1276
      %v1908 = vpop.f32.mrb[0].mxu0
      %v1909 = vadd.f32 %v491, %v1908
      %v1910 = vpop.f32.mrb[0].mxu0
      %v1911 = vpop.f32.mrb[0].mxu0
      %v1912 = vadd.f32 %v491, %v1911
      %v1913 = vpop.f32.mrb[0].mxu0
      %1914 = vmatprep.mubr.bf16.mxu0 0
      %1915 = vmatmul.mubr.bf16.gmra.mrb[0].mxu0 %v1279
      %v1916 = vpop.f32.mrb[0].mxu0
      %v1917 = vadd.f32 %v491, %v1916
      %v1918 = vpop.f32.mrb[0].mxu0
      %v1919 = vpop.f32.mrb[0].mxu0
      %v1920 = vadd.f32 %v491, %v1919
      %v1921 = vpop.f32.mrb[0].mxu0
      %1922 = vmatprep.mubr.bf16.mxu0 0
      %1923 = vmatmul.mubr.bf16.gmra.mrb[0].mxu0 %v1282
      %v1924 = vpop.f32.mrb[0].mxu0
      %v1925 = vadd.f32 %v491, %v1924
      %v1926 = vpop.f32.mrb[0].mxu0
      %v1927 = vpop.f32.mrb[0].mxu0
      %v1928 = vadd.f32 %v491, %v1927
      %v1929 = vpop.f32.mrb[0].mxu0
      %1930 = vmatprep.mubr.bf16.mxu0 0
      %1931 = vmatmul.mubr.bf16.gmra.mrb[0].mxu0 %v1285
      %v1932 = vpop.f32.mrb[0].mxu0
      %v1933 = vadd.f32 %v491, %v1932
      %v1934 = vpop.f32.mrb[0].mxu0
      %v1935 = vpop.f32.mrb[0].mxu0
      %v1936 = vadd.f32 %v491, %v1935
      %v1937 = vpop.f32.mrb[0].mxu0
      %1938 = vmatprep.mubr.bf16.mxu0 0
      %1939 = vmatmul.mubr.bf16.gmra.mrb[0].mxu0 %v1288
      %v1940 = vpop.f32.mrb[0].mxu0
      %v1941 = vadd.f32 %v491, %v1940
      %v1942 = vpop.f32.mrb[0].mxu0
      %v1943 = vpop.f32.mrb[0].mxu0
      %v1944 = vadd.f32 %v491, %v1943
      %v1945 = vpop.f32.mrb[0].mxu0
      %1946 = vmatprep.mubr.bf16.mxu0 0
      %1947 = vmatmul.mubr.bf16.gmra.mrb[0].mxu0 %v1291
      %v1948 = vpop.f32.mrb[0].mxu0
      %v1949 = vadd.f32 %v491, %v1948
      %v1950 = vpop.f32.mrb[0].mxu0
      %v1951 = vpop.f32.mrb[0].mxu0
      %v1952 = vadd.f32 %v491, %v1951
      %v1953 = vpop.f32.mrb[0].mxu0
      %1954 = vmatprep.mubr.bf16.mxu0 0
      %1955 = vmatmul.mubr.bf16.gmra.mrb[0].mxu0 %v1294
      %v1956 = vpop.f32.mrb[0].mxu0
      %v1957 = vadd.f32 %v491, %v1956
      %v1958 = vpop.f32.mrb[0].mxu0
      %v1959 = vpop.f32.mrb[0].mxu0
      %v1960 = vadd.f32 %v491, %v1959
      %v1961 = vpop.f32.mrb[0].mxu0
      %1962 = vmatprep.mubr.bf16.mxu0 0
      %1963 = vmatmul.mubr.bf16.gmra.mrb[0].mxu0 %v1297
      %v1964 = vpop.f32.mrb[0].mxu0
      %v1965 = vadd.f32 %v491, %v1964
      %v1966 = vpop.f32.mrb[0].mxu0
      %v1967 = vpop.f32.mrb[0].mxu0
      %v1968 = vadd.f32 %v491, %v1967
      %v1969 = vpop.f32.mrb[0].mxu0
      %1970 = vmatprep.mubr.bf16.mxu0 0
      %1971 = vmatmul.mubr.bf16.gmra.mrb[0].mxu0 %v1300
      %v1972 = vpop.f32.mrb[0].mxu0
      %v1973 = vadd.f32 %v491, %v1972
      %v1974 = vpop.f32.mrb[0].mxu0
      %v1975 = vpop.f32.mrb[0].mxu0
      %v1976 = vadd.f32 %v491, %v1975
      %v1977 = vpop.f32.mrb[0].mxu0
      %1978 = vmatprep.mubr.bf16.mxu0 0
      %1979 = vmatmul.mubr.bf16.gmra.mrb[0].mxu0 %v1303
      %v1980 = vpop.f32.mrb[0].mxu0
      %v1981 = vadd.f32 %v491, %v1980
      %v1982 = vpop.f32.mrb[0].mxu0
      %v1983 = vpop.f32.mrb[0].mxu0
      %v1984 = vadd.f32 %v491, %v1983
      %v1985 = vpop.f32.mrb[0].mxu0
      %1986 = vmatprep.mubr.bf16.mxu0 0
      %1987 = vmatmul.mubr.bf16.gmra.mrb[0].mxu0 %v1306
      %v1988 = vpop.f32.mrb[0].mxu0
      %v1989 = vadd.f32 %v491, %v1988
      %v1990 = vpop.f32.mrb[0].mxu0
      %v1991 = vpop.f32.mrb[0].mxu0
      %v1992 = vadd.f32 %v491, %v1991
      %v1993 = vpop.f32.mrb[0].mxu0
      %1994 = vmatprep.mubr.bf16.mxu0 0
      %1995 = vmatmul.mubr.bf16.gmra.mrb[0].mxu0 %v1309
      %v1996 = vpop.f32.mrb[0].mxu0
      %v1997 = vadd.f32 %v491, %v1996
      %v1998 = vpop.f32.mrb[0].mxu0
      %v1999 = vpop.f32.mrb[0].mxu0
      %v2000 = vadd.f32 %v491, %v1999
      %v2001 = vpop.f32.mrb[0].mxu0
      %2002 = vmatprep.mubr.bf16.mxu0 0
      %2003 = vmatmul.mubr.bf16.gmra.mrb[0].mxu0 %v1312
      %v2004 = vpop.f32.mrb[0].mxu0
      %v2005 = vadd.f32 %v491, %v2004
      %v2006 = vpop.f32.mrb[0].mxu0
      %v2007 = vpop.f32.mrb[0].mxu0
      %v2008 = vadd.f32 %v491, %v2007
      %v2009 = vpop.f32.mrb[0].mxu0
      %2010 = vmatprep.mubr.bf16.mxu0 0
      %2011 = vmatmul.mubr.bf16.gmra.mrb[0].mxu0 %v1315
      %v2012 = vpop.f32.mrb[0].mxu0
      %v2013 = vadd.f32 %v491, %v2012
      %v2014 = vpop.f32.mrb[0].mxu0
      %v2015 = vpop.f32.mrb[0].mxu0
      %v2016 = vadd.f32 %v491, %v2015
      %v2017 = vpop.f32.mrb[0].mxu0
      %2018 = vmatprep.mubr.bf16.mxu0 0
      %2019 = vmatmul.mubr.bf16.gmra.mrb[0].mxu0 %v1318
      %v2020 = vpop.f32.mrb[0].mxu0
      %v2021 = vadd.f32 %v491, %v2020
      %v2022 = vpop.f32.mrb[0].mxu0
      %v2023 = vpop.f32.mrb[0].mxu0
      %v2024 = vadd.f32 %v491, %v2023
      %v2025 = vpop.f32.mrb[0].mxu0
      %2026 = vmatprep.mubr.bf16.mxu0 0
      %2027 = vmatmul.mubr.bf16.gmra.mrb[0].mxu0 %v1321
      %v2028 = vpop.f32.mrb[0].mxu0
      %v2029 = vadd.f32 %v491, %v2028
      %v2030 = vpop.f32.mrb[0].mxu0
      %v2031 = vpop.f32.mrb[0].mxu0
      %v2032 = vadd.f32 %v491, %v2031
      %v2033 = vpop.f32.mrb[0].mxu0
      %2034 = vmatprep.mubr.bf16.mxu0 0
      %2035 = vmatmul.mubr.bf16.gmra.mrb[0].mxu0 %v1324
      %v2036 = vpop.f32.mrb[0].mxu0
      %v2037 = vadd.f32 %v491, %v2036
      %v2038 = vpop.f32.mrb[0].mxu0
      %v2039 = vpop.f32.mrb[0].mxu0
      %v2040 = vadd.f32 %v491, %v2039
      %v2041 = vpop.f32.mrb[0].mxu0
      %2042 = vmatprep.mubr.bf16.mxu0 0
      %2043 = vmatmul.mubr.bf16.gmra.mrb[0].mxu0 %v1327
      %v2044 = vpop.f32.mrb[0].mxu0
      %v2045 = vadd.f32 %v491, %v2044
      %v2046 = vpop.f32.mrb[0].mxu0
      %v2047 = vpop.f32.mrb[0].mxu0
      %v2048 = vadd.f32 %v491, %v2047
      %v2049 = vpop.f32.mrb[0].mxu0
      %2050 = vmatprep.mubr.bf16.mxu0 0
      %2051 = vmatmul.mubr.bf16.gmra.mrb[0].mxu0 %v1330
      %v2052 = vpop.f32.mrb[0].mxu0
      %v2053 = vadd.f32 %v491, %v2052
      %v2054 = vpop.f32.mrb[0].mxu0
      %v2055 = vpop.f32.mrb[0].mxu0
      %v2056 = vadd.f32 %v491, %v2055
      %v2057 = vpop.f32.mrb[0].mxu0
      %2058 = vmatprep.mubr.bf16.mxu0 0
      %2059 = vmatmul.mubr.bf16.gmra.mrb[0].mxu0 %v1333
      %v2060 = vpop.f32.mrb[0].mxu0
      %v2061 = vadd.f32 %v491, %v2060
      %v2062 = vpop.f32.mrb[0].mxu0
      %v2063 = vpop.f32.mrb[0].mxu0
      %v2064 = vadd.f32 %v491, %v2063
      %v2065 = vpop.f32.mrb[0].mxu0
      %2066 = vmatprep.mubr.bf16.mxu0 0
      %2067 = vmatmul.mubr.bf16.gmra.mrb[0].mxu0 %v1336
      %v2068 = vpop.f32.mrb[0].mxu0
      %v2069 = vadd.f32 %v491, %v2068
      %v2070 = vpop.f32.mrb[0].mxu0
      %v2071 = vpop.f32.mrb[0].mxu0
      %v2072 = vadd.f32 %v491, %v2071
      %v2073 = vpop.f32.mrb[0].mxu0
      %2074 = vmatprep.mubr.bf16.mxu0 0
      %2075 = vmatmul.mubr.bf16.gmra.mrb[0].mxu0 %v1339
      %v2076 = vpop.f32.mrb[0].mxu0
      %v2077 = vadd.f32 %v491, %v2076
      %v2078 = vpop.f32.mrb[0].mxu0
      %v2079 = vpop.f32.mrb[0].mxu0
      %v2080 = vadd.f32 %v491, %v2079
      %v2081 = vpop.f32.mrb[0].mxu0
      %2082 = vmatprep.mubr.bf16.mxu0 0
      %2083 = vmatmul.mubr.bf16.gmra.mrb[0].mxu0 %v1342
      %v2084 = vpop.f32.mrb[0].mxu0
      %v2085 = vadd.f32 %v491, %v2084
      %v2086 = vpop.f32.mrb[0].mxu0
      %v2087 = vpop.f32.mrb[0].mxu0
      %v2088 = vadd.f32 %v491, %v2087
      %v2089 = vpop.f32.mrb[0].mxu0
      %2090 = vmatprep.mubr.bf16.mxu0 0
      %2091 = vmatmul.mubr.bf16.gmra.mrb[0].mxu0 %v1345
      %v2092 = vpop.f32.mrb[0].mxu0
      %v2093 = vadd.f32 %v491, %v2092
      %v2094 = vpop.f32.mrb[0].mxu0
      %v2095 = vpop.f32.mrb[0].mxu0
      %v2096 = vadd.f32 %v491, %v2095
      %v2097 = vpop.f32.mrb[0].mxu0
      %2098 = vmatprep.mubr.bf16.mxu0 0
      %2099 = vmatmul.mubr.bf16.gmra.mrb[0].mxu0 %v1348
      %v2100 = vpop.f32.mrb[0].mxu0
      %v2101 = vadd.f32 %v491, %v2100
      %v2102 = vpop.f32.mrb[0].mxu0
      %v2103 = vpop.f32.mrb[0].mxu0
      %v2104 = vadd.f32 %v491, %v2103
      %v2105 = vpop.f32.mrb[0].mxu0
      %2106 = vmatprep.mubr.bf16.mxu0 0
      %2107 = vmatmul.mubr.bf16.gmra.mrb[0].mxu0 %v1351
      %v2108 = vpop.f32.mrb[0].mxu0
      %v2109 = vadd.f32 %v491, %v2108
      %v2110 = vpop.f32.mrb[0].mxu0
      %v2111 = vpop.f32.mrb[0].mxu0
      %v2112 = vadd.f32 %v491, %v2111
      %v2113 = vpop.f32.mrb[0].mxu0
      %2114 = vmatprep.mubr.bf16.mxu0 0
      %2115 = vmatmul.mubr.bf16.gmra.mrb[0].mxu0 %v1354
      %v2116 = vpop.f32.mrb[0].mxu0
      %v2117 = vadd.f32 %v491, %v2116
      %v2118 = vpop.f32.mrb[0].mxu0
      %v2119 = vpop.f32.mrb[0].mxu0
      %v2120 = vadd.f32 %v491, %v2119
      %v2121 = vpop.f32.mrb[0].mxu0
      %2122 = vmatprep.mubr.bf16.mxu0 0
      %2123 = vmatmul.mubr.bf16.gmra.mrb[0].mxu0 %v1357
      %v2124 = vpop.f32.mrb[0].mxu0
      %v2125 = vadd.f32 %v491, %v2124
      %v2126 = vpop.f32.mrb[0].mxu0
      %v2127 = vpop.f32.mrb[0].mxu0
      %v2128 = vadd.f32 %v491, %v2127
      %v2129 = vpop.f32.mrb[0].mxu0
      %2130 = vmatprep.mubr.bf16.mxu0 0
      %2131 = vmatmul.mubr.bf16.gmra.mrb[0].mxu0 %v1360
      %v2132 = vpop.f32.mrb[0].mxu0
      %v2133 = vadd.f32 %v491, %v2132
      %v2134 = vpop.f32.mrb[0].mxu0
      %v2135 = vpop.f32.mrb[0].mxu0
      %v2136 = vadd.f32 %v491, %v2135
      %v2137 = vpop.f32.mrb[0].mxu0
      %2138 = vmatprep.mubr.bf16.mxu0 0
      %2139 = vmatmul.mubr.bf16.gmra.mrb[0].mxu0 %v1363
      %v2140 = vpop.f32.mrb[0].mxu0
      %v2141 = vadd.f32 %v491, %v2140
      %v2142 = vpop.f32.mrb[0].mxu0
      %v2143 = vpop.f32.mrb[0].mxu0
      %v2144 = vadd.f32 %v491, %v2143
      %v2145 = vpop.f32.mrb[0].mxu0
      %2146 = vmatprep.mubr.bf16.mxu0 0
      %2147 = vmatmul.mubr.bf16.gmra.mrb[0].mxu0 %v1366
      %v2148 = vpop.f32.mrb[0].mxu0
      %v2149 = vadd.f32 %v491, %v2148
      %v2150 = vpop.f32.mrb[0].mxu0
      %v2151 = vpop.f32.mrb[0].mxu0
      %v2152 = vadd.f32 %v491, %v2151
      %v2153 = vpop.f32.mrb[0].mxu0
      %2154 = vmatprep.mubr.bf16.mxu0 0
      %2155 = vmatmul.mubr.bf16.gmra.mrb[0].mxu0 %v1369
      %v2156 = vpop.f32.mrb[0].mxu0
      %v2157 = vadd.f32 %v491, %v2156
      %v2158 = vpop.f32.mrb[0].mxu0
      %v2159 = vpop.f32.mrb[0].mxu0
      %v2160 = vadd.f32 %v491, %v2159
      %v2161 = vpop.f32.mrb[0].mxu0
      %2162 = vmatprep.mubr.bf16.mxu0 0
      %2163 = vmatmul.mubr.bf16.gmra.mrb[0].mxu0 %v1372
      %v2164 = vpop.f32.mrb[0].mxu0
      %v2165 = vadd.f32 %v491, %v2164
      %v2166 = vpop.f32.mrb[0].mxu0
      %v2167 = vpop.f32.mrb[0].mxu0
      %v2168 = vadd.f32 %v491, %v2167
      %v2169 = vpop.f32.mrb[0].mxu0
      %2170 = vmatprep.mubr.bf16.mxu0 0
      %2171 = vmatmul.mubr.bf16.gmra.mrb[0].mxu0 %v1375
      %v2172 = vpop.f32.mrb[0].mxu0
      %v2173 = vadd.f32 %v491, %v2172
      %v2174 = vpop.f32.mrb[0].mxu0
      %v2175 = vpop.f32.mrb[0].mxu0
      %v2176 = vadd.f32 %v491, %v2175
      %v2177 = vpop.f32.mrb[0].mxu0
      %2178 = vmatprep.mubr.bf16.mxu0 0
      %2179 = vmatmul.mubr.bf16.gmra.mrb[0].mxu0 %v1378
      %v2180 = vpop.f32.mrb[0].mxu0
      %v2181 = vadd.f32 %v491, %v2180
      %v2182 = vpop.f32.mrb[0].mxu0
      %v2183 = vpop.f32.mrb[0].mxu0
      %v2184 = vadd.f32 %v491, %v2183
      %v2185 = vpop.f32.mrb[0].mxu0
      %2186 = vmatprep.mubr.bf16.mxu0 0
      %2187 = vmatmul.mubr.bf16.gmra.mrb[0].mxu0 %v1381
      %v2188 = vpop.f32.mrb[0].mxu0
      %v2189 = vadd.f32 %v491, %v2188
      %v2190 = vpop.f32.mrb[0].mxu0
      %v2191 = vpop.f32.mrb[0].mxu0
      %v2192 = vadd.f32 %v491, %v2191
      %v2193 = vpop.f32.mrb[0].mxu0
      %2194 = vmatprep.mubr.bf16.mxu0 0
      %2195 = vmatmul.mubr.bf16.gmra.mrb[0].mxu0 %v1384
      %v2196 = vpop.f32.mrb[0].mxu0
      %v2197 = vadd.f32 %v491, %v2196
      %v2198 = vpop.f32.mrb[0].mxu0
      %v2199 = vpop.f32.mrb[0].mxu0
      %v2200 = vadd.f32 %v491, %v2199
      %v2201 = vpop.f32.mrb[0].mxu0
      %2202 = vmatprep.mubr.bf16.mxu0 0
      %2203 = vmatmul.mubr.bf16.gmra.mrb[0].mxu0 %v1387
      %v2204 = vpop.f32.mrb[0].mxu0
      %v2205 = vadd.f32 %v491, %v2204
      %v2206 = vpop.f32.mrb[0].mxu0
      %v2207 = vpop.f32.mrb[0].mxu0
      %v2208 = vadd.f32 %v491, %v2207
      %v2209 = vpop.f32.mrb[0].mxu0
      %2210 = vmatprep.mubr.bf16.mxu0 0
      %2211 = vmatmul.mubr.bf16.gmra.mrb[0].mxu0 %v1390
      %v2212 = vpop.f32.mrb[0].mxu0
      %v2213 = vadd.f32 %v491, %v2212
      %v2214 = vpop.f32.mrb[0].mxu0
      %v2215 = vpop.f32.mrb[0].mxu0
      %v2216 = vadd.f32 %v491, %v2215
      %v2217 = vpop.f32.mrb[0].mxu0
      %2218 = vmatprep.mubr.bf16.mxu0 0
      %2219 = vmatmul.mubr.bf16.gmra.mrb[0].mxu0 %v1393
      %v2220 = vpop.f32.mrb[0].mxu0
      %v2221 = vadd.f32 %v491, %v2220
      %v2222 = vpop.f32.mrb[0].mxu0
      %v2223 = vpop.f32.mrb[0].mxu0
      %v2224 = vadd.f32 %v491, %v2223
      %v2225 = vpop.f32.mrb[0].mxu0
      %2226 = vmatprep.mubr.bf16.mxu0 0
      %2227 = vmatmul.mubr.bf16.gmra.mrb[0].mxu0 %v1396
      %v2228 = vpop.f32.mrb[0].mxu0
      %v2229 = vadd.f32 %v491, %v2228
      %v2230 = vpop.f32.mrb[0].mxu0
      %v2231 = vpop.f32.mrb[0].mxu0
      %v2232 = vadd.f32 %v491, %v2231
      %v2233 = vpop.f32.mrb[0].mxu0
      %2234 = vmatprep.mubr.bf16.mxu0 0
      %2235 = vmatmul.mubr.bf16.gmra.mrb[0].mxu0 %v1399
      %v2236 = vpop.f32.mrb[0].mxu0
      %v2237 = vadd.f32 %v491, %v2236
      %v2238 = vpop.f32.mrb[0].mxu0
      %v2239 = vpop.f32.mrb[0].mxu0
      %v2240 = vadd.f32 %v491, %v2239
      %v2241 = vpop.f32.mrb[0].mxu0
      %2242 = vmatprep.mubr.bf16.mxu0 0
      %2243 = vmatmul.mubr.bf16.gmra.mrb[0].mxu0 %v1402
      %v2244 = vpop.f32.mrb[0].mxu0
      %v2245 = vadd.f32 %v491, %v2244
      %v2246 = vpop.f32.mrb[0].mxu0
      %v2247 = vpop.f32.mrb[0].mxu0
      %v2248 = vadd.f32 %v491, %v2247
      %v2249 = vpop.f32.mrb[0].mxu0
      %2250 = vmatprep.mubr.bf16.mxu0 0
      %2251 = vmatmul.mubr.bf16.gmra.mrb[0].mxu0 %v1405
      %v2252 = vpop.f32.mrb[0].mxu0
      %v2253 = vadd.f32 %v491, %v2252
      %v2254 = vpop.f32.mrb[0].mxu0
      %v2255 = vpop.f32.mrb[0].mxu0
      %v2256 = vadd.f32 %v491, %v2255
      %v2257 = vpop.f32.mrb[0].mxu0
      %2258 = vmatprep.mubr.bf16.mxu0 0
      %2259 = vmatmul.mubr.bf16.gmra.mrb[0].mxu0 %v1408
      %v2260 = vpop.f32.mrb[0].mxu0
      %v2261 = vadd.f32 %v491, %v2260
      %v2262 = vpop.f32.mrb[0].mxu0
      %v2263 = vpop.f32.mrb[0].mxu0
      %v2264 = vadd.f32 %v491, %v2263
      %v2265 = vpop.f32.mrb[0].mxu0
      %2266 = vmatprep.mubr.bf16.mxu0 0
      %2267 = vmatmul.mubr.bf16.gmra.mrb[0].mxu0 %v1411
      %v2268 = vpop.f32.mrb[0].mxu0
      %v2269 = vadd.f32 %v491, %v2268
      %v2270 = vpop.f32.mrb[0].mxu0
      %v2271 = vpop.f32.mrb[0].mxu0
      %v2272 = vadd.f32 %v491, %v2271
      %v2273 = vpop.f32.mrb[0].mxu0
      %2274 = vmatprep.mubr.bf16.mxu0 0
      %2275 = vmatmul.mubr.bf16.gmra.mrb[0].mxu0 %v1414
      %v2276 = vpop.f32.mrb[0].mxu0
      %v2277 = vadd.f32 %v491, %v2276
      %v2278 = vpop.f32.mrb[0].mxu0
      %v2279 = vpop.f32.mrb[0].mxu0
      %v2280 = vadd.f32 %v491, %v2279
      %v2281 = vpop.f32.mrb[0].mxu0
      %2282 = vmatprep.mubr.bf16.mxu0 0
      %2283 = vmatmul.mubr.bf16.gmra.mrb[0].mxu0 %v1417
      %v2284 = vpop.f32.mrb[0].mxu0
      %v2285 = vadd.f32 %v491, %v2284
      %v2286 = vpop.f32.mrb[0].mxu0
      %v2287 = vpop.f32.mrb[0].mxu0
      %v2288 = vadd.f32 %v491, %v2287
      %v2289 = vpop.f32.mrb[0].mxu0
      %2290 = vmatprep.mubr.bf16.mxu0 0
      %2291 = vmatmul.mubr.bf16.gmra.mrb[0].mxu0 %v1420
      %v2292 = vpop.f32.mrb[0].mxu0
      %v2293 = vadd.f32 %v491, %v2292
      %v2294 = vpop.f32.mrb[0].mxu0
      %v2295 = vpop.f32.mrb[0].mxu0
      %v2296 = vadd.f32 %v491, %v2295
      %v2297 = vpop.f32.mrb[0].mxu0
      %2298 = vmatprep.mubr.bf16.mxu0 0
      %2299 = vmatmul.mubr.bf16.gmra.mrb[0].mxu0 %v1423
      %v2300 = vpop.f32.mrb[0].mxu0
      %v2301 = vadd.f32 %v491, %v2300
      %v2302 = vpop.f32.mrb[0].mxu0
      %v2303 = vpop.f32.mrb[0].mxu0
      %v2304 = vadd.f32 %v491, %v2303
      %v2305 = vpop.f32.mrb[0].mxu0
      %2306 = vmatprep.mubr.bf16.mxu0 0
      %2307 = vmatmul.mubr.bf16.gmra.mrb[0].mxu0 %v1426
      %v2308 = vpop.f32.mrb[0].mxu0
      %v2309 = vadd.f32 %v491, %v2308
      %v2310 = vpop.f32.mrb[0].mxu0
      %v2311 = vpop.f32.mrb[0].mxu0
      %v2312 = vadd.f32 %v491, %v2311
      %v2313 = vpop.f32.mrb[0].mxu0
      %2314 = vmatprep.mubr.bf16.mxu0 0
      %2315 = vmatmul.mubr.bf16.gmra.mrb[0].mxu0 %v1429
      %v2316 = vpop.f32.mrb[0].mxu0
      %v2317 = vadd.f32 %v491, %v2316
      %v2318 = vpop.f32.mrb[0].mxu0
      %v2319 = vpop.f32.mrb[0].mxu0
      %v2320 = vadd.f32 %v491, %v2319
      %v2321 = vpop.f32.mrb[0].mxu0
      %2322 = vmatprep.mubr.bf16.mxu0 0
      %2323 = vmatmul.mubr.bf16.gmra.mrb[0].mxu0 %v1432
      %v2324 = vpop.f32.mrb[0].mxu0
      %v2325 = vadd.f32 %v491, %v2324
      %v2326 = vpop.f32.mrb[0].mxu0
      %v2327 = vpop.f32.mrb[0].mxu0
      %v2328 = vadd.f32 %v491, %v2327
      %v2329 = vpop.f32.mrb[0].mxu0
      %2330 = vmatprep.mubr.bf16.mxu0 0
      %2331 = vmatmul.mubr.bf16.gmra.mrb[0].mxu0 %v1435
      %v2332 = vpop.f32.mrb[0].mxu0
      %v2333 = vadd.f32 %v491, %v2332
      %v2334 = vpop.f32.mrb[0].mxu0
      %v2335 = vpop.f32.mrb[0].mxu0
      %v2336 = vadd.f32 %v491, %v2335
      %v2337 = vpop.f32.mrb[0].mxu0
      %2338 = vmatprep.mubr.bf16.mxu0 0
      %2339 = vmatmul.mubr.bf16.gmra.mrb[0].mxu0 %v1438
      %v2340 = vpop.f32.mrb[0].mxu0
      %v2341 = vadd.f32 %v491, %v2340
      %v2342 = vpop.f32.mrb[0].mxu0
      %v2343 = vpop.f32.mrb[0].mxu0
      %v2344 = vadd.f32 %v491, %v2343
      %v2345 = vpop.f32.mrb[0].mxu0
      %2346 = vmatprep.mubr.bf16.mxu0 0
      %2347 = vmatmul.mubr.bf16.gmra.mrb[0].mxu0 %v1441
      %v2348 = vpop.f32.mrb[0].mxu0
      %v2349 = vadd.f32 %v491, %v2348
      %v2350 = vpop.f32.mrb[0].mxu0
      %v2351 = vpop.f32.mrb[0].mxu0
      %v2352 = vadd.f32 %v491, %v2351
      %v2353 = vpop.f32.mrb[0].mxu0
      %2354 = vmatprep.mubr.bf16.mxu0 0
      %2355 = vmatmul.mubr.bf16.gmra.mrb[0].mxu0 %v1444
      %v2356 = vpop.f32.mrb[0].mxu0
      %v2357 = vadd.f32 %v491, %v2356
      %v2358 = vpop.f32.mrb[0].mxu0
      %v2359 = vpop.f32.mrb[0].mxu0
      %v2360 = vadd.f32 %v491, %v2359
      %v2361 = vpop.f32.mrb[0].mxu0
      %2362 = vmatprep.mubr.bf16.mxu0 0
      %2363 = vmatmul.mubr.bf16.gmra.mrb[0].mxu0 %v1447
      %v2364 = vpop.f32.mrb[0].mxu0
      %v2365 = vadd.f32 %v491, %v2364
      %v2366 = vpop.f32.mrb[0].mxu0
      %v2367 = vpop.f32.mrb[0].mxu0
      %v2368 = vadd.f32 %v491, %v2367
      %v2369 = vpop.f32.mrb[0].mxu0
      %2370 = vmatprep.mubr.bf16.mxu0 0
      %2371 = vmatmul.mubr.bf16.gmra.mrb[0].mxu0 %v1450
      %v2372 = vpop.f32.mrb[0].mxu0
      %v2373 = vadd.f32 %v491, %v2372
      %v2374 = vpop.f32.mrb[0].mxu0
      %v2375 = vpop.f32.mrb[0].mxu0
      %v2376 = vadd.f32 %v491, %v2375
      %v2377 = vpop.f32.mrb[0].mxu0
      %2378 = vmatprep.mubr.bf16.mxu0 0
      %2379 = vmatmul.mubr.bf16.gmra.mrb[0].mxu0 %v1453
      %v2380 = vpop.f32.mrb[0].mxu0
      %v2381 = vadd.f32 %v491, %v2380
      %v2382 = vpop.f32.mrb[0].mxu0
      %v2383 = vpop.f32.mrb[0].mxu0
      %v2384 = vadd.f32 %v491, %v2383
      %v2385 = vpop.f32.mrb[0].mxu0
      %2386 = vmatprep.mubr.bf16.mxu0 0
      %2387 = vmatmul.mubr.bf16.gmra.mrb[0].mxu0 %v1456
      %v2388 = vpop.f32.mrb[0].mxu0
      %v2389 = vadd.f32 %v491, %v2388
      %v2390 = vpop.f32.mrb[0].mxu0
      %v2391 = vpop.f32.mrb[0].mxu0
      %v2392 = vadd.f32 %v491, %v2391
      %v2393 = vpop.f32.mrb[0].mxu0
      %2394 = vmatprep.mubr.bf16.mxu0 0
      %2395 = vmatmul.mubr.bf16.gmra.mrb[0].mxu0 %v1459
      %v2396 = vpop.f32.mrb[0].mxu0
      %v2397 = vadd.f32 %v491, %v2396
      %v2398 = vpop.f32.mrb[0].mxu0
      %v2399 = vpop.f32.mrb[0].mxu0
      %v2400 = vadd.f32 %v491, %v2399
      %v2401 = vpop.f32.mrb[0].mxu0
      %2402 = vmatprep.mubr.bf16.mxu0 0
      %2403 = vmatmul.mubr.bf16.gmra.mrb[0].mxu0 %v1462
      %v2404 = vpop.f32.mrb[0].mxu0
      %v2405 = vadd.f32 %v491, %v2404
      %v2406 = vpop.f32.mrb[0].mxu0
      %v2407 = vpop.f32.mrb[0].mxu0
      %v2408 = vadd.f32 %v491, %v2407
      %v2409 = vpop.f32.mrb[0].mxu0
      %2410 = vmatprep.mubr.bf16.mxu0 0
      %2411 = vmatmul.mubr.bf16.gmra.mrb[0].mxu0 %v1465
      %v2412 = vpop.f32.mrb[0].mxu0
      %v2413 = vadd.f32 %v491, %v2412
      %v2414 = vpop.f32.mrb[0].mxu0
      %v2415 = vpop.f32.mrb[0].mxu0
      %v2416 = vadd.f32 %v491, %v2415
      %v2417 = vpop.f32.mrb[0].mxu0
      %2418 = vmatprep.mubr.bf16.mxu0 0
      %2419 = vmatmul.mubr.bf16.gmra.mrb[0].mxu0 %v1468
      %v2420 = vpop.f32.mrb[0].mxu0
      %v2421 = vadd.f32 %v491, %v2420
      %v2422 = vpop.f32.mrb[0].mxu0
      %v2423 = vpop.f32.mrb[0].mxu0
      %v2424 = vadd.f32 %v491, %v2423
      %v2425 = vpop.f32.mrb[0].mxu0
      %2426 = vmatprep.mubr.bf16.mxu0 0
      %2427 = vmatmul.mubr.bf16.gmra.mrb[0].mxu0 %v1471
      %v2428 = vpop.f32.mrb[0].mxu0
      %v2429 = vadd.f32 %v491, %v2428
      %v2430 = vpop.f32.mrb[0].mxu0
      %v2431 = vpop.f32.mrb[0].mxu0
      %v2432 = vadd.f32 %v491, %v2431
      %v2433 = vpop.f32.mrb[0].mxu0
      %2434 = vmatprep.mubr.bf16.mxu0 0
      %2435 = vmatmul.mubr.bf16.gmra.mrb[0].mxu0 %v1474
      %v2436 = vpop.f32.mrb[0].mxu0
      %v2437 = vadd.f32 %v491, %v2436
      %v2438 = vpop.f32.mrb[0].mxu0
      %v2439 = vpop.f32.mrb[0].mxu0
      %v2440 = vadd.f32 %v491, %v2439
      %v2441 = vpop.f32.mrb[0].mxu0
      %2442 = vmatprep.mubr.bf16.mxu0 0
      %2443 = vmatmul.mubr.bf16.gmra.mrb[0].mxu0 %v1477
      %v2444 = vpop.f32.mrb[0].mxu0
      %v2445 = vadd.f32 %v491, %v2444
      %v2446 = vpop.f32.mrb[0].mxu0
      %v2447 = vpop.f32.mrb[0].mxu0
      %v2448 = vadd.f32 %v491, %v2447
      %v2449 = vpop.f32.mrb[0].mxu0
      %2450 = vmatprep.mubr.bf16.mxu0 0
      %2451 = vmatmul.mubr.bf16.gmra.mrb[0].mxu0 %v1480
      %v2452 = vpop.f32.mrb[0].mxu0
      %v2453 = vadd.f32 %v491, %v2452
      %v2454 = vpop.f32.mrb[0].mxu0
      %v2455 = vpop.f32.mrb[0].mxu0
      %v2456 = vadd.f32 %v491, %v2455
      %v2457 = vpop.f32.mrb[0].mxu0
      %2458 = vmatprep.mubr.bf16.mxu0 0
      %2459 = vmatmul.mubr.bf16.gmra.mrb[0].mxu0 %v1483
      %v2460 = vpop.f32.mrb[0].mxu0
      %v2461 = vadd.f32 %v491, %v2460
      %v2462 = vpop.f32.mrb[0].mxu0
      %v2463 = vpop.f32.mrb[0].mxu0
      %v2464 = vadd.f32 %v491, %v2463
      %v2465 = vpop.f32.mrb[0].mxu0
      %2466 = vmatprep.mubr.bf16.mxu0 0
      %2467 = vmatmul.mubr.bf16.gmra.mrb[0].mxu0 %v1486
      %v2468 = vpop.f32.mrb[0].mxu0
      %v2469 = vadd.f32 %v491, %v2468
      %v2470 = vpop.f32.mrb[0].mxu0
      %v2471 = vpop.f32.mrb[0].mxu0
      %v2472 = vadd.f32 %v491, %v2471
      %v2473 = vpop.f32.mrb[0].mxu0
      %2474 = vmatprep.mubr.bf16.mxu0 0
      %2475 = vmatmul.mubr.bf16.gmra.mrb[0].mxu0 %v1489
      %v2476 = vpop.f32.mrb[0].mxu0
      %v2477 = vadd.f32 %v491, %v2476
      %v2478 = vpop.f32.mrb[0].mxu0
      %v2479 = vpop.f32.mrb[0].mxu0
      %v2480 = vadd.f32 %v491, %v2479
      %v2481 = vpop.f32.mrb[0].mxu0
      %2482 = vmatprep.mubr.bf16.mxu0 0
      %2483 = vmatmul.mubr.bf16.gmra.mrb[0].mxu0 %v1492
      %v2484 = vpop.f32.mrb[0].mxu0
      %v2485 = vadd.f32 %v491, %v2484
      %v2486 = vpop.f32.mrb[0].mxu0
      %v2487 = vpop.f32.mrb[0].mxu0
      %v2488 = vadd.f32 %v491, %v2487
      %v2489 = vpop.f32.mrb[0].mxu0
      %2490 = vmatprep.mubr.bf16.mxu0 0
      %2491 = vmatmul.mubr.bf16.gmra.mrb[0].mxu0 %v1495
      %v2492 = vpop.f32.mrb[0].mxu0
      %v2493 = vadd.f32 %v491, %v2492
      %v2494 = vpop.f32.mrb[0].mxu0
      %v2495 = vpop.f32.mrb[0].mxu0
      %v2496 = vadd.f32 %v491, %v2495
      %v2497 = vpop.f32.mrb[0].mxu0
      %2498 = vmatprep.mubr.bf16.mxu0 0
      %2499 = vmatmul.mubr.bf16.gmra.mrb[0].mxu0 %v1498
      %v2500 = vpop.f32.mrb[0].mxu0
      %v2501 = vadd.f32 %v491, %v2500
      %v2502 = vpop.f32.mrb[0].mxu0
      %v2503 = vpop.f32.mrb[0].mxu0
      %v2504 = vadd.f32 %v491, %v2503
      %v2505 = vpop.f32.mrb[0].mxu0
      %2506 = vmatprep.mubr.bf16.mxu0 0
      %2507 = vmatmul.mubr.bf16.gmra.mrb[0].mxu0 %v1501
      %v2508 = vpop.f32.mrb[0].mxu0
      %v2509 = vadd.f32 %v491, %v2508
      %v2510 = vpop.f32.mrb[0].mxu0
      %v2511 = vpop.f32.mrb[0].mxu0
      %v2512 = vadd.f32 %v491, %v2511
      %v2513 = vpop.f32.mrb[0].mxu0
      %2514 = vmatprep.mubr.bf16.mxu0 0
      %2515 = vmatmul.mubr.bf16.gmra.mrb[0].mxu0 %v1504
      %v2516 = vpop.f32.mrb[0].mxu0
      %v2517 = vadd.f32 %v491, %v2516
      %v2518 = vpop.f32.mrb[0].mxu0
      %v2519 = vpop.f32.mrb[0].mxu0
      %v2520 = vadd.f32 %v491, %v2519
      %v2521 = vpop.f32.mrb[0].mxu0
      %2522 = vmatprep.mubr.bf16.mxu0 0
      %2523 = vmatmul.mubr.bf16.gmra.mrb[0].mxu0 %v1507
      %v2524 = vpop.f32.mrb[0].mxu0
      %v2525 = vadd.f32 %v491, %v2524
      %v2526 = vpop.f32.mrb[0].mxu0
      %v2527 = vpop.f32.mrb[0].mxu0
      %v2528 = vadd.f32 %v491, %v2527
      %v2529 = vpop.f32.mrb[0].mxu0
      %2530 = vmatprep.mubr.bf16.mxu0 0
      %2531 = vmatmul.mubr.bf16.gmra.mrb[0].mxu0 %v1510
      %v2532 = vpop.f32.mrb[0].mxu0
      %v2533 = vadd.f32 %v491, %v2532
      %v2534 = vpop.f32.mrb[0].mxu0
      %v2535 = vpop.f32.mrb[0].mxu0
      %v2536 = vadd.f32 %v491, %v2535
      %v2537 = vpop.f32.mrb[0].mxu0
      %2538 = vmatprep.mubr.bf16.mxu0 0
      %2539 = vmatmul.mubr.bf16.gmra.mrb[0].mxu0 %v1513
      %v2540 = vpop.f32.mrb[0].mxu0
      %v2541 = vadd.f32 %v491, %v2540
      %v2542 = vpop.f32.mrb[0].mxu0
      %v2543 = vpop.f32.mrb[0].mxu0
      %v2544 = vadd.f32 %v491, %v2543
      %v2545 = vpop.f32.mrb[0].mxu0
      %2546 = vmatprep.mubr.bf16.mxu0 0
      %2547 = vmatmul.mubr.bf16.gmra.mrb[0].mxu0 %v1516
      %v2548 = vpop.f32.mrb[0].mxu0
      %v2549 = vadd.f32 %v491, %v2548
      %v2550 = vpop.f32.mrb[0].mxu0
      %v2551 = vpop.f32.mrb[0].mxu0
      %v2552 = vadd.f32 %v491, %v2551
      %v2553 = vpop.f32.mrb[0].mxu0
      %2554 = vmatprep.mubr.bf16.mxu0 0
      %2555 = vmatmul.mubr.bf16.gmra.mrb[0].mxu0 %v1519
      %v2556 = vpop.f32.mrb[0].mxu0
      %v2557 = vadd.f32 %v491, %v2556
      %v2558 = vpop.f32.mrb[0].mxu0
      %v2559 = vpop.f32.mrb[0].mxu0
      %v2560 = vadd.f32 %v491, %v2559
      %v2561 = vpop.f32.mrb[0].mxu0
      %2562 = vmatprep.mubr.bf16.mxu0 0
      %2563 = vmatmul.mubr.bf16.gmra.mrb[0].mxu0 %v1522
      %v2564 = vpop.f32.mrb[0].mxu0
      %v2565 = vadd.f32 %v491, %v2564
      %v2566 = vpop.f32.mrb[0].mxu0
      %v2567 = vpop.f32.mrb[0].mxu0
      %v2568 = vadd.f32 %v491, %v2567
      %v2569 = vpop.f32.mrb[0].mxu0
      %2570 = vmatprep.mubr.bf16.mxu0 0
      %2571 = vmatmul.mubr.bf16.gmra.mrb[0].mxu0 %v1525
      %v2572 = vpop.f32.mrb[0].mxu0
      %v2573 = vadd.f32 %v491, %v2572
      %v2574 = vpop.f32.mrb[0].mxu0
      %v2575 = vpop.f32.mrb[0].mxu0
      %v2576 = vadd.f32 %v491, %v2575
      %v2577 = vpop.f32.mrb[0].mxu0
      %2578 = vmatprep.mubr.bf16.mxu0 0
      %2579 = vmatmul.mubr.bf16.gmra.mrb[0].mxu0 %v1528
      %v2580 = vpop.f32.mrb[0].mxu0
      %v2581 = vadd.f32 %v491, %v2580
      %v2582 = vpop.f32.mrb[0].mxu0
      %v2583 = vpop.f32.mrb[0].mxu0
      %v2584 = vadd.f32 %v491, %v2583
      %v2585 = vpop.f32.mrb[0].mxu0
      %2586 = vdwg.mxu0
      %v2587 = vmax.f32 %v1565, 0.0
      %v2588 = vmax.f32 %v1568, 0.0
      %v2589 = vmax.f32 %v1573, 0.0
      %v2590 = vmax.f32 %v1576, 0.0
      %v2591 = vmax.f32 %v1581, 0.0
      %v2592 = vmax.f32 %v1584, 0.0
      %v2593 = vmax.f32 %v1589, 0.0
      %v2594 = vmax.f32 %v1592, 0.0
      %v2595 = vmax.f32 %v1597, 0.0
      %v2596 = vmax.f32 %v1600, 0.0
      %v2597 = vmax.f32 %v1605, 0.0
      %v2598 = vmax.f32 %v1608, 0.0
      %v2599 = vmax.f32 %v1613, 0.0
      %v2600 = vmax.f32 %v1616, 0.0
      %v2601 = vmax.f32 %v1621, 0.0
      %v2602 = vmax.f32 %v1624, 0.0
      %v2603 = vmax.f32 %v1629, 0.0
      %v2604 = vmax.f32 %v1632, 0.0
      %v2605 = vmax.f32 %v1637, 0.0
      %v2606 = vmax.f32 %v1640, 0.0
      %v2607 = vmax.f32 %v1645, 0.0
      %v2608 = vmax.f32 %v1648, 0.0
      %v2609 = vmax.f32 %v1653, 0.0
      %v2610 = vmax.f32 %v1656, 0.0
      %v2611 = vmax.f32 %v1661, 0.0
      %v2612 = vmax.f32 %v1664, 0.0
      %v2613 = vmax.f32 %v1669, 0.0
      %v2614 = vmax.f32 %v1672, 0.0
      %v2615 = vmax.f32 %v1677, 0.0
      %v2616 = vmax.f32 %v1680, 0.0
      %v2617 = vmax.f32 %v1685, 0.0
      %v2618 = vmax.f32 %v1688, 0.0
      %v2619 = vmax.f32 %v1693, 0.0
      %v2620 = vmax.f32 %v1696, 0.0
      %v2621 = vmax.f32 %v1701, 0.0
      %v2622 = vmax.f32 %v1704, 0.0
      %v2623 = vmax.f32 %v1709, 0.0
      %v2624 = vmax.f32 %v1712, 0.0
      %v2625 = vmax.f32 %v1717, 0.0
      %v2626 = vmax.f32 %v1720, 0.0
      %v2627 = vmax.f32 %v1725, 0.0
      %v2628 = vmax.f32 %v1728, 0.0
      %v2629 = vmax.f32 %v1733, 0.0
      %v2630 = vmax.f32 %v1736, 0.0
      %v2631 = vmax.f32 %v1741, 0.0
      %v2632 = vmax.f32 %v1744, 0.0
      %v2633 = vmax.f32 %v1749, 0.0
      %v2634 = vmax.f32 %v1752, 0.0
      %v2635 = vmax.f32 %v1757, 0.0
      %v2636 = vmax.f32 %v1760, 0.0
      %v2637 = vmax.f32 %v1765, 0.0
      %v2638 = vmax.f32 %v1768, 0.0
      %v2639 = vmax.f32 %v1773, 0.0
      %v2640 = vmax.f32 %v1776, 0.0
      %v2641 = vmax.f32 %v1781, 0.0
      %v2642 = vmax.f32 %v1784, 0.0
      %v2643 = vmax.f32 %v1789, 0.0
      %v2644 = vmax.f32 %v1792, 0.0
      %v2645 = vmax.f32 %v1797, 0.0
      %v2646 = vmax.f32 %v1800, 0.0
      %v2647 = vmax.f32 %v1805, 0.0
      %v2648 = vmax.f32 %v1808, 0.0
      %v2649 = vmax.f32 %v1813, 0.0
      %v2650 = vmax.f32 %v1816, 0.0
      %v2651 = vmax.f32 %v1821, 0.0
      %v2652 = vmax.f32 %v1824, 0.0
      %v2653 = vmax.f32 %v1829, 0.0
      %v2654 = vmax.f32 %v1832, 0.0
      %v2655 = vmax.f32 %v1837, 0.0
      %v2656 = vmax.f32 %v1840, 0.0
      %v2657 = vmax.f32 %v1845, 0.0
      %v2658 = vmax.f32 %v1848, 0.0
      %v2659 = vmax.f32 %v1853, 0.0
      %v2660 = vmax.f32 %v1856, 0.0
      %v2661 = vmax.f32 %v1861, 0.0
      %v2662 = vmax.f32 %v1864, 0.0
      %v2663 = vmax.f32 %v1869, 0.0
      %v2664 = vmax.f32 %v1872, 0.0
      %v2665 = vmax.f32 %v1877, 0.0
      %v2666 = vmax.f32 %v1880, 0.0
      %v2667 = vmax.f32 %v1885, 0.0
      %v2668 = vmax.f32 %v1888, 0.0
      %v2669 = vmax.f32 %v1893, 0.0
      %v2670 = vmax.f32 %v1896, 0.0
      %v2671 = vmax.f32 %v1901, 0.0
      %v2672 = vmax.f32 %v1904, 0.0
      %v2673 = vmax.f32 %v1909, 0.0
      %v2674 = vmax.f32 %v1912, 0.0
      %v2675 = vmax.f32 %v1917, 0.0
      %v2676 = vmax.f32 %v1920, 0.0
      %v2677 = vmax.f32 %v1925, 0.0
      %v2678 = vmax.f32 %v1928, 0.0
      %v2679 = vmax.f32 %v1933, 0.0
      %v2680 = vmax.f32 %v1936, 0.0
      %v2681 = vmax.f32 %v1941, 0.0
      %v2682 = vmax.f32 %v1944, 0.0
      %v2683 = vmax.f32 %v1949, 0.0
      %v2684 = vmax.f32 %v1952, 0.0
      %v2685 = vmax.f32 %v1957, 0.0
      %v2686 = vmax.f32 %v1960, 0.0
      %v2687 = vmax.f32 %v1965, 0.0
      %v2688 = vmax.f32 %v1968, 0.0
      %v2689 = vmax.f32 %v1973, 0.0
      %v2690 = vmax.f32 %v1976, 0.0
      %v2691 = vmax.f32 %v1981, 0.0
      %v2692 = vmax.f32 %v1984, 0.0
      %v2693 = vmax.f32 %v1989, 0.0
      %v2694 = vmax.f32 %v1992, 0.0
      %v2695 = vmax.f32 %v1997, 0.0
      %v2696 = vmax.f32 %v2000, 0.0
      %v2697 = vmax.f32 %v2005, 0.0
      %v2698 = vmax.f32 %v2008, 0.0
      %v2699 = vmax.f32 %v2013, 0.0
      %v2700 = vmax.f32 %v2016, 0.0
      %v2701 = vmax.f32 %v2021, 0.0
      %v2702 = vmax.f32 %v2024, 0.0
      %v2703 = vmax.f32 %v2029, 0.0
      %v2704 = vmax.f32 %v2032, 0.0
      %v2705 = vmax.f32 %v2037, 0.0
      %v2706 = vmax.f32 %v2040, 0.0
      %v2707 = vmax.f32 %v2045, 0.0
      %v2708 = vmax.f32 %v2048, 0.0
      %v2709 = vmax.f32 %v2053, 0.0
      %v2710 = vmax.f32 %v2056, 0.0
      %v2711 = vmax.f32 %v2061, 0.0
      %v2712 = vmax.f32 %v2064, 0.0
      %v2713 = vmax.f32 %v2069, 0.0
      %v2714 = vmax.f32 %v2072, 0.0
      %v2715 = vmax.f32 %v2077, 0.0
      %v2716 = vmax.f32 %v2080, 0.0
      %v2717 = vmax.f32 %v2085, 0.0
      %v2718 = vmax.f32 %v2088, 0.0
      %v2719 = vmax.f32 %v2093, 0.0
      %v2720 = vmax.f32 %v2096, 0.0
      %v2721 = vmax.f32 %v2101, 0.0
      %v2722 = vmax.f32 %v2104, 0.0
      %v2723 = vmax.f32 %v2109, 0.0
      %v2724 = vmax.f32 %v2112, 0.0
      %v2725 = vmax.f32 %v2117, 0.0
      %v2726 = vmax.f32 %v2120, 0.0
      %v2727 = vmax.f32 %v2125, 0.0
      %v2728 = vmax.f32 %v2128, 0.0
      %v2729 = vmax.f32 %v2133, 0.0
      %v2730 = vmax.f32 %v2136, 0.0
      %v2731 = vmax.f32 %v2141, 0.0
      %v2732 = vmax.f32 %v2144, 0.0
      %v2733 = vmax.f32 %v2149, 0.0
      %v2734 = vmax.f32 %v2152, 0.0
      %v2735 = vmax.f32 %v2157, 0.0
      %v2736 = vmax.f32 %v2160, 0.0
      %v2737 = vmax.f32 %v2165, 0.0
      %v2738 = vmax.f32 %v2168, 0.0
      %v2739 = vmax.f32 %v2173, 0.0
      %v2740 = vmax.f32 %v2176, 0.0
      %v2741 = vmax.f32 %v2181, 0.0
      %v2742 = vmax.f32 %v2184, 0.0
      %v2743 = vmax.f32 %v2189, 0.0
      %v2744 = vmax.f32 %v2192, 0.0
      %v2745 = vmax.f32 %v2197, 0.0
      %v2746 = vmax.f32 %v2200, 0.0
      %v2747 = vmax.f32 %v2205, 0.0
      %v2748 = vmax.f32 %v2208, 0.0
      %v2749 = vmax.f32 %v2213, 0.0
      %v2750 = vmax.f32 %v2216, 0.0
      %v2751 = vmax.f32 %v2221, 0.0
      %v2752 = vmax.f32 %v2224, 0.0
      %v2753 = vmax.f32 %v2229, 0.0
      %v2754 = vmax.f32 %v2232, 0.0
      %v2755 = vmax.f32 %v2237, 0.0
      %v2756 = vmax.f32 %v2240, 0.0
      %v2757 = vmax.f32 %v2245, 0.0
      %v2758 = vmax.f32 %v2248, 0.0
      %v2759 = vmax.f32 %v2253, 0.0
      %v2760 = vmax.f32 %v2256, 0.0
      %v2761 = vmax.f32 %v2261, 0.0
      %v2762 = vmax.f32 %v2264, 0.0
      %v2763 = vmax.f32 %v2269, 0.0
      %v2764 = vmax.f32 %v2272, 0.0
      %v2765 = vmax.f32 %v2277, 0.0
      %v2766 = vmax.f32 %v2280, 0.0
      %v2767 = vmax.f32 %v2285, 0.0
      %v2768 = vmax.f32 %v2288, 0.0
      %v2769 = vmax.f32 %v2293, 0.0
      %v2770 = vmax.f32 %v2296, 0.0
      %v2771 = vmax.f32 %v2301, 0.0
      %v2772 = vmax.f32 %v2304, 0.0
      %v2773 = vmax.f32 %v2309, 0.0
      %v2774 = vmax.f32 %v2312, 0.0
      %v2775 = vmax.f32 %v2317, 0.0
      %v2776 = vmax.f32 %v2320, 0.0
      %v2777 = vmax.f32 %v2325, 0.0
      %v2778 = vmax.f32 %v2328, 0.0
      %v2779 = vmax.f32 %v2333, 0.0
      %v2780 = vmax.f32 %v2336, 0.0
      %v2781 = vmax.f32 %v2341, 0.0
      %v2782 = vmax.f32 %v2344, 0.0
      %v2783 = vmax.f32 %v2349, 0.0
      %v2784 = vmax.f32 %v2352, 0.0
      %v2785 = vmax.f32 %v2357, 0.0
      %v2786 = vmax.f32 %v2360, 0.0
      %v2787 = vmax.f32 %v2365, 0.0
      %v2788 = vmax.f32 %v2368, 0.0
      %v2789 = vmax.f32 %v2373, 0.0
      %v2790 = vmax.f32 %v2376, 0.0
      %v2791 = vmax.f32 %v2381, 0.0
      %v2792 = vmax.f32 %v2384, 0.0
      %v2793 = vmax.f32 %v2389, 0.0
      %v2794 = vmax.f32 %v2392, 0.0
      %v2795 = vmax.f32 %v2397, 0.0
      %v2796 = vmax.f32 %v2400, 0.0
      %v2797 = vmax.f32 %v2405, 0.0
      %v2798 = vmax.f32 %v2408, 0.0
      %v2799 = vmax.f32 %v2413, 0.0
      %v2800 = vmax.f32 %v2416, 0.0
      %v2801 = vmax.f32 %v2421, 0.0
      %v2802 = vmax.f32 %v2424, 0.0
      %v2803 = vmax.f32 %v2429, 0.0
      %v2804 = vmax.f32 %v2432, 0.0
      %v2805 = vmax.f32 %v2437, 0.0
      %v2806 = vmax.f32 %v2440, 0.0
      %v2807 = vmax.f32 %v2445, 0.0
      %v2808 = vmax.f32 %v2448, 0.0
      %v2809 = vmax.f32 %v2453, 0.0
      %v2810 = vmax.f32 %v2456, 0.0
      %v2811 = vmax.f32 %v2461, 0.0
      %v2812 = vmax.f32 %v2464, 0.0
      %v2813 = vmax.f32 %v2469, 0.0
      %v2814 = vmax.f32 %v2472, 0.0
      %v2815 = vmax.f32 %v2477, 0.0
      %v2816 = vmax.f32 %v2480, 0.0
      %v2817 = vmax.f32 %v2485, 0.0
      %v2818 = vmax.f32 %v2488, 0.0
      %v2819 = vmax.f32 %v2493, 0.0
      %v2820 = vmax.f32 %v2496, 0.0
      %v2821 = vmax.f32 %v2501, 0.0
      %v2822 = vmax.f32 %v2504, 0.0
      %v2823 = vmax.f32 %v2509, 0.0
      %v2824 = vmax.f32 %v2512, 0.0
      %v2825 = vmax.f32 %v2517, 0.0
      %v2826 = vmax.f32 %v2520, 0.0
      %v2827 = vmax.f32 %v2525, 0.0
      %v2828 = vmax.f32 %v2528, 0.0
      %v2829 = vmax.f32 %v2533, 0.0
      %v2830 = vmax.f32 %v2536, 0.0
      %v2831 = vmax.f32 %v2541, 0.0
      %v2832 = vmax.f32 %v2544, 0.0
      %v2833 = vmax.f32 %v2549, 0.0
      %v2834 = vmax.f32 %v2552, 0.0
      %v2835 = vmax.f32 %v2557, 0.0
      %v2836 = vmax.f32 %v2560, 0.0
      %v2837 = vmax.f32 %v2565, 0.0
      %v2838 = vmax.f32 %v2568, 0.0
      %v2839 = vmax.f32 %v2573, 0.0
      %v2840 = vmax.f32 %v2576, 0.0
      %v2841 = vmax.f32 %v2581, 0.0
      %v2842 = vmax.f32 %v2584, 0.0
      %vm2843 = vcmask 523264
      %v2844 = vsel %vm2843, %v2587, 0.0
      %v2845 = vsel %vm2843, %v2588, 0.0
      %v2846 = vadd.f32 %v2844, %v2845
      %v2847 = vsel %vm2843, %v2589, 0.0
      %v2848 = vadd.f32 %v2846, %v2847
      %v2849 = vsel %vm2843, %v2590, 0.0
      %v2850 = vadd.f32 %v2848, %v2849
      %v2851 = vsel %vm2843, %v2591, 0.0
      %v2852 = vadd.f32 %v2850, %v2851
      %v2853 = vsel %vm2843, %v2592, 0.0
      %v2854 = vadd.f32 %v2852, %v2853
      %v2855 = vsel %vm2843, %v2593, 0.0
      %v2856 = vadd.f32 %v2854, %v2855
      %v2857 = vsel %vm2843, %v2594, 0.0
      %v2858 = vadd.f32 %v2856, %v2857
      %v2859 = vsel %vm2843, %v2595, 0.0
      %v2860 = vadd.f32 %v2858, %v2859
      %v2861 = vsel %vm2843, %v2596, 0.0
      %v2862 = vadd.f32 %v2860, %v2861
      %v2863 = vsel %vm2843, %v2597, 0.0
      %v2864 = vadd.f32 %v2862, %v2863
      %v2865 = vsel %vm2843, %v2598, 0.0
      %v2866 = vadd.f32 %v2864, %v2865
      %v2867 = vsel %vm2843, %v2599, 0.0
      %v2868 = vadd.f32 %v2866, %v2867
      %v2869 = vsel %vm2843, %v2600, 0.0
      %v2870 = vadd.f32 %v2868, %v2869
      %v2871 = vsel %vm2843, %v2601, 0.0
      %v2872 = vadd.f32 %v2870, %v2871
      %v2873 = vsel %vm2843, %v2602, 0.0
      %v2874 = vadd.f32 %v2872, %v2873
      %v2875 = vsel %vm2843, %v2603, 0.0
      %v2876 = vadd.f32 %v2874, %v2875
      %v2877 = vsel %vm2843, %v2604, 0.0
      %v2878 = vadd.f32 %v2876, %v2877
      %v2879 = vsel %vm2843, %v2605, 0.0
      %v2880 = vadd.f32 %v2878, %v2879
      %v2881 = vsel %vm2843, %v2606, 0.0
      %v2882 = vadd.f32 %v2880, %v2881
      %v2883 = vsel %vm2843, %v2607, 0.0
      %v2884 = vadd.f32 %v2882, %v2883
      %v2885 = vsel %vm2843, %v2608, 0.0
      %v2886 = vadd.f32 %v2884, %v2885
      %v2887 = vsel %vm2843, %v2609, 0.0
      %v2888 = vadd.f32 %v2886, %v2887
      %v2889 = vsel %vm2843, %v2610, 0.0
      %v2890 = vadd.f32 %v2888, %v2889
      %v2891 = vsel %vm2843, %v2611, 0.0
      %v2892 = vadd.f32 %v2890, %v2891
      %v2893 = vsel %vm2843, %v2612, 0.0
      %v2894 = vadd.f32 %v2892, %v2893
      %v2895 = vsel %vm2843, %v2613, 0.0
      %v2896 = vadd.f32 %v2894, %v2895
      %v2897 = vsel %vm2843, %v2614, 0.0
      %v2898 = vadd.f32 %v2896, %v2897
      %v2899 = vsel %vm2843, %v2615, 0.0
      %v2900 = vadd.f32 %v2898, %v2899
      %v2901 = vsel %vm2843, %v2616, 0.0
      %v2902 = vadd.f32 %v2900, %v2901
      %v2903 = vsel %vm2843, %v2617, 0.0
      %v2904 = vadd.f32 %v2902, %v2903
      %v2905 = vsel %vm2843, %v2618, 0.0
      %v2906 = vadd.f32 %v2904, %v2905
      %v2907 = vrot.slane %v2906, 4
      %v2908 = vadd.f32 %v2906, %v2907
      %v2909 = vrot.slane %v2908, 2
      %v2910 = vadd.f32 %v2908, %v2909
      %v2911 = vrot.slane %v2910, 1
      %v2912 = vadd.f32 %v2910, %v2911
      %v2913 = vsel %vm2843, %v2619, 0.0
      %v2914 = vsel %vm2843, %v2620, 0.0
      %v2915 = vadd.f32 %v2913, %v2914
      %v2916 = vsel %vm2843, %v2621, 0.0
      %v2917 = vadd.f32 %v2915, %v2916
      %v2918 = vsel %vm2843, %v2622, 0.0
      %v2919 = vadd.f32 %v2917, %v2918
      %v2920 = vsel %vm2843, %v2623, 0.0
      %v2921 = vadd.f32 %v2919, %v2920
      %v2922 = vsel %vm2843, %v2624, 0.0
      %v2923 = vadd.f32 %v2921, %v2922
      %v2924 = vsel %vm2843, %v2625, 0.0
      %v2925 = vadd.f32 %v2923, %v2924
      %v2926 = vsel %vm2843, %v2626, 0.0
      %v2927 = vadd.f32 %v2925, %v2926
      %v2928 = vsel %vm2843, %v2627, 0.0
      %v2929 = vadd.f32 %v2927, %v2928
      %v2930 = vsel %vm2843, %v2628, 0.0
      %v2931 = vadd.f32 %v2929, %v2930
      %v2932 = vsel %vm2843, %v2629, 0.0
      %v2933 = vadd.f32 %v2931, %v2932
      %v2934 = vsel %vm2843, %v2630, 0.0
      %v2935 = vadd.f32 %v2933, %v2934
      %v2936 = vsel %vm2843, %v2631, 0.0
      %v2937 = vadd.f32 %v2935, %v2936
      %v2938 = vsel %vm2843, %v2632, 0.0
      %v2939 = vadd.f32 %v2937, %v2938
      %v2940 = vsel %vm2843, %v2633, 0.0
      %v2941 = vadd.f32 %v2939, %v2940
      %v2942 = vsel %vm2843, %v2634, 0.0
      %v2943 = vadd.f32 %v2941, %v2942
      %v2944 = vsel %vm2843, %v2635, 0.0
      %v2945 = vadd.f32 %v2943, %v2944
      %v2946 = vsel %vm2843, %v2636, 0.0
      %v2947 = vadd.f32 %v2945, %v2946
      %v2948 = vsel %vm2843, %v2637, 0.0
      %v2949 = vadd.f32 %v2947, %v2948
      %v2950 = vsel %vm2843, %v2638, 0.0
      %v2951 = vadd.f32 %v2949, %v2950
      %v2952 = vsel %vm2843, %v2639, 0.0
      %v2953 = vadd.f32 %v2951, %v2952
      %v2954 = vsel %vm2843, %v2640, 0.0
      %v2955 = vadd.f32 %v2953, %v2954
      %v2956 = vsel %vm2843, %v2641, 0.0
      %v2957 = vadd.f32 %v2955, %v2956
      %v2958 = vsel %vm2843, %v2642, 0.0
      %v2959 = vadd.f32 %v2957, %v2958
      %v2960 = vsel %vm2843, %v2643, 0.0
      %v2961 = vadd.f32 %v2959, %v2960
      %v2962 = vsel %vm2843, %v2644, 0.0
      %v2963 = vadd.f32 %v2961, %v2962
      %v2964 = vsel %vm2843, %v2645, 0.0
      %v2965 = vadd.f32 %v2963, %v2964
      %v2966 = vsel %vm2843, %v2646, 0.0
      %v2967 = vadd.f32 %v2965, %v2966
      %v2968 = vsel %vm2843, %v2647, 0.0
      %v2969 = vadd.f32 %v2967, %v2968
      %v2970 = vsel %vm2843, %v2648, 0.0
      %v2971 = vadd.f32 %v2969, %v2970
      %v2972 = vsel %vm2843, %v2649, 0.0
      %v2973 = vadd.f32 %v2971, %v2972
      %v2974 = vsel %vm2843, %v2650, 0.0
      %v2975 = vadd.f32 %v2973, %v2974
      %v2976 = vrot.slane %v2975, 4
      %v2977 = vadd.f32 %v2975, %v2976
      %v2978 = vrot.slane %v2977, 2
      %v2979 = vadd.f32 %v2977, %v2978
      %v2980 = vrot.slane %v2979, 1
      %v2981 = vadd.f32 %v2979, %v2980
      %v2982 = vsel %vm2843, %v2651, 0.0
      %v2983 = vsel %vm2843, %v2652, 0.0
      %v2984 = vadd.f32 %v2982, %v2983
      %v2985 = vsel %vm2843, %v2653, 0.0
      %v2986 = vadd.f32 %v2984, %v2985
      %v2987 = vsel %vm2843, %v2654, 0.0
      %v2988 = vadd.f32 %v2986, %v2987
      %v2989 = vsel %vm2843, %v2655, 0.0
      %v2990 = vadd.f32 %v2988, %v2989
      %v2991 = vsel %vm2843, %v2656, 0.0
      %v2992 = vadd.f32 %v2990, %v2991
      %v2993 = vsel %vm2843, %v2657, 0.0
      %v2994 = vadd.f32 %v2992, %v2993
      %v2995 = vsel %vm2843, %v2658, 0.0
      %v2996 = vadd.f32 %v2994, %v2995
      %v2997 = vsel %vm2843, %v2659, 0.0
      %v2998 = vadd.f32 %v2996, %v2997
      %v2999 = vsel %vm2843, %v2660, 0.0
      %v3000 = vadd.f32 %v2998, %v2999
      %v3001 = vsel %vm2843, %v2661, 0.0
      %v3002 = vadd.f32 %v3000, %v3001
      %v3003 = vsel %vm2843, %v2662, 0.0
      %v3004 = vadd.f32 %v3002, %v3003
      %v3005 = vsel %vm2843, %v2663, 0.0
      %v3006 = vadd.f32 %v3004, %v3005
      %v3007 = vsel %vm2843, %v2664, 0.0
      %v3008 = vadd.f32 %v3006, %v3007
      %v3009 = vsel %vm2843, %v2665, 0.0
      %v3010 = vadd.f32 %v3008, %v3009
      %v3011 = vsel %vm2843, %v2666, 0.0
      %v3012 = vadd.f32 %v3010, %v3011
      %v3013 = vsel %vm2843, %v2667, 0.0
      %v3014 = vadd.f32 %v3012, %v3013
      %v3015 = vsel %vm2843, %v2668, 0.0
      %v3016 = vadd.f32 %v3014, %v3015
      %v3017 = vsel %vm2843, %v2669, 0.0
      %v3018 = vadd.f32 %v3016, %v3017
      %v3019 = vsel %vm2843, %v2670, 0.0
      %v3020 = vadd.f32 %v3018, %v3019
      %v3021 = vsel %vm2843, %v2671, 0.0
      %v3022 = vadd.f32 %v3020, %v3021
      %v3023 = vsel %vm2843, %v2672, 0.0
      %v3024 = vadd.f32 %v3022, %v3023
      %v3025 = vsel %vm2843, %v2673, 0.0
      %v3026 = vadd.f32 %v3024, %v3025
      %v3027 = vsel %vm2843, %v2674, 0.0
      %v3028 = vadd.f32 %v3026, %v3027
      %v3029 = vsel %vm2843, %v2675, 0.0
      %v3030 = vadd.f32 %v3028, %v3029
      %v3031 = vsel %vm2843, %v2676, 0.0
      %v3032 = vadd.f32 %v3030, %v3031
      %v3033 = vsel %vm2843, %v2677, 0.0
      %v3034 = vadd.f32 %v3032, %v3033
      %v3035 = vsel %vm2843, %v2678, 0.0
      %v3036 = vadd.f32 %v3034, %v3035
      %v3037 = vsel %vm2843, %v2679, 0.0
      %v3038 = vadd.f32 %v3036, %v3037
      %v3039 = vsel %vm2843, %v2680, 0.0
      %v3040 = vadd.f32 %v3038, %v3039
      %v3041 = vsel %vm2843, %v2681, 0.0
      %v3042 = vadd.f32 %v3040, %v3041
      %v3043 = vsel %vm2843, %v2682, 0.0
      %v3044 = vadd.f32 %v3042, %v3043
      %v3045 = vrot.slane %v3044, 4
      %v3046 = vadd.f32 %v3044, %v3045
      %v3047 = vrot.slane %v3046, 2
      %v3048 = vadd.f32 %v3046, %v3047
      %v3049 = vrot.slane %v3048, 1
      %v3050 = vadd.f32 %v3048, %v3049
      %v3051 = vsel %vm2843, %v2683, 0.0
      %v3052 = vsel %vm2843, %v2684, 0.0
      %v3053 = vadd.f32 %v3051, %v3052
      %v3054 = vsel %vm2843, %v2685, 0.0
      %v3055 = vadd.f32 %v3053, %v3054
      %v3056 = vsel %vm2843, %v2686, 0.0
      %v3057 = vadd.f32 %v3055, %v3056
      %v3058 = vsel %vm2843, %v2687, 0.0
      %v3059 = vadd.f32 %v3057, %v3058
      %v3060 = vsel %vm2843, %v2688, 0.0
      %v3061 = vadd.f32 %v3059, %v3060
      %v3062 = vsel %vm2843, %v2689, 0.0
      %v3063 = vadd.f32 %v3061, %v3062
      %v3064 = vsel %vm2843, %v2690, 0.0
      %v3065 = vadd.f32 %v3063, %v3064
      %v3066 = vsel %vm2843, %v2691, 0.0
      %v3067 = vadd.f32 %v3065, %v3066
      %v3068 = vsel %vm2843, %v2692, 0.0
      %v3069 = vadd.f32 %v3067, %v3068
      %v3070 = vsel %vm2843, %v2693, 0.0
      %v3071 = vadd.f32 %v3069, %v3070
      %v3072 = vsel %vm2843, %v2694, 0.0
      %v3073 = vadd.f32 %v3071, %v3072
      %v3074 = vsel %vm2843, %v2695, 0.0
      %v3075 = vadd.f32 %v3073, %v3074
      %v3076 = vsel %vm2843, %v2696, 0.0
      %v3077 = vadd.f32 %v3075, %v3076
      %v3078 = vsel %vm2843, %v2697, 0.0
      %v3079 = vadd.f32 %v3077, %v3078
      %v3080 = vsel %vm2843, %v2698, 0.0
      %v3081 = vadd.f32 %v3079, %v3080
      %v3082 = vsel %vm2843, %v2699, 0.0
      %v3083 = vadd.f32 %v3081, %v3082
      %v3084 = vsel %vm2843, %v2700, 0.0
      %v3085 = vadd.f32 %v3083, %v3084
      %v3086 = vsel %vm2843, %v2701, 0.0
      %v3087 = vadd.f32 %v3085, %v3086
      %v3088 = vsel %vm2843, %v2702, 0.0
      %v3089 = vadd.f32 %v3087, %v3088
      %v3090 = vsel %vm2843, %v2703, 0.0
      %v3091 = vadd.f32 %v3089, %v3090
      %v3092 = vsel %vm2843, %v2704, 0.0
      %v3093 = vadd.f32 %v3091, %v3092
      %v3094 = vsel %vm2843, %v2705, 0.0
      %v3095 = vadd.f32 %v3093, %v3094
      %v3096 = vsel %vm2843, %v2706, 0.0
      %v3097 = vadd.f32 %v3095, %v3096
      %v3098 = vsel %vm2843, %v2707, 0.0
      %v3099 = vadd.f32 %v3097, %v3098
      %v3100 = vsel %vm2843, %v2708, 0.0
      %v3101 = vadd.f32 %v3099, %v3100
      %v3102 = vsel %vm2843, %v2709, 0.0
      %v3103 = vadd.f32 %v3101, %v3102
      %v3104 = vsel %vm2843, %v2710, 0.0
      %v3105 = vadd.f32 %v3103, %v3104
      %v3106 = vsel %vm2843, %v2711, 0.0
      %v3107 = vadd.f32 %v3105, %v3106
      %v3108 = vsel %vm2843, %v2712, 0.0
      %v3109 = vadd.f32 %v3107, %v3108
      %v3110 = vsel %vm2843, %v2713, 0.0
      %v3111 = vadd.f32 %v3109, %v3110
      %v3112 = vsel %vm2843, %v2714, 0.0
      %v3113 = vadd.f32 %v3111, %v3112
      %v3114 = vrot.slane %v3113, 4
      %v3115 = vadd.f32 %v3113, %v3114
      %v3116 = vrot.slane %v3115, 2
      %v3117 = vadd.f32 %v3115, %v3116
      %v3118 = vrot.slane %v3117, 1
      %v3119 = vadd.f32 %v3117, %v3118
      %v3120 = vsel %vm2843, %v2715, 0.0
      %v3121 = vsel %vm2843, %v2716, 0.0
      %v3122 = vadd.f32 %v3120, %v3121
      %v3123 = vsel %vm2843, %v2717, 0.0
      %v3124 = vadd.f32 %v3122, %v3123
      %v3125 = vsel %vm2843, %v2718, 0.0
      %v3126 = vadd.f32 %v3124, %v3125
      %v3127 = vsel %vm2843, %v2719, 0.0
      %v3128 = vadd.f32 %v3126, %v3127
      %v3129 = vsel %vm2843, %v2720, 0.0
      %v3130 = vadd.f32 %v3128, %v3129
      %v3131 = vsel %vm2843, %v2721, 0.0
      %v3132 = vadd.f32 %v3130, %v3131
      %v3133 = vsel %vm2843, %v2722, 0.0
      %v3134 = vadd.f32 %v3132, %v3133
      %v3135 = vsel %vm2843, %v2723, 0.0
      %v3136 = vadd.f32 %v3134, %v3135
      %v3137 = vsel %vm2843, %v2724, 0.0
      %v3138 = vadd.f32 %v3136, %v3137
      %v3139 = vsel %vm2843, %v2725, 0.0
      %v3140 = vadd.f32 %v3138, %v3139
      %v3141 = vsel %vm2843, %v2726, 0.0
      %v3142 = vadd.f32 %v3140, %v3141
      %v3143 = vsel %vm2843, %v2727, 0.0
      %v3144 = vadd.f32 %v3142, %v3143
      %v3145 = vsel %vm2843, %v2728, 0.0
      %v3146 = vadd.f32 %v3144, %v3145
      %v3147 = vsel %vm2843, %v2729, 0.0
      %v3148 = vadd.f32 %v3146, %v3147
      %v3149 = vsel %vm2843, %v2730, 0.0
      %v3150 = vadd.f32 %v3148, %v3149
      %v3151 = vsel %vm2843, %v2731, 0.0
      %v3152 = vadd.f32 %v3150, %v3151
      %v3153 = vsel %vm2843, %v2732, 0.0
      %v3154 = vadd.f32 %v3152, %v3153
      %v3155 = vsel %vm2843, %v2733, 0.0
      %v3156 = vadd.f32 %v3154, %v3155
      %v3157 = vsel %vm2843, %v2734, 0.0
      %v3158 = vadd.f32 %v3156, %v3157
      %v3159 = vsel %vm2843, %v2735, 0.0
      %v3160 = vadd.f32 %v3158, %v3159
      %v3161 = vsel %vm2843, %v2736, 0.0
      %v3162 = vadd.f32 %v3160, %v3161
      %v3163 = vsel %vm2843, %v2737, 0.0
      %v3164 = vadd.f32 %v3162, %v3163
      %v3165 = vsel %vm2843, %v2738, 0.0
      %v3166 = vadd.f32 %v3164, %v3165
      %v3167 = vsel %vm2843, %v2739, 0.0
      %v3168 = vadd.f32 %v3166, %v3167
      %v3169 = vsel %vm2843, %v2740, 0.0
      %v3170 = vadd.f32 %v3168, %v3169
      %v3171 = vsel %vm2843, %v2741, 0.0
      %v3172 = vadd.f32 %v3170, %v3171
      %v3173 = vsel %vm2843, %v2742, 0.0
      %v3174 = vadd.f32 %v3172, %v3173
      %v3175 = vsel %vm2843, %v2743, 0.0
      %v3176 = vadd.f32 %v3174, %v3175
      %v3177 = vsel %vm2843, %v2744, 0.0
      %v3178 = vadd.f32 %v3176, %v3177
      %v3179 = vsel %vm2843, %v2745, 0.0
      %v3180 = vadd.f32 %v3178, %v3179
      %v3181 = vsel %vm2843, %v2746, 0.0
      %v3182 = vadd.f32 %v3180, %v3181
      %v3183 = vrot.slane %v3182, 4
      %v3184 = vadd.f32 %v3182, %v3183
      %v3185 = vrot.slane %v3184, 2
      %v3186 = vadd.f32 %v3184, %v3185
      %v3187 = vrot.slane %v3186, 1
      %v3188 = vadd.f32 %v3186, %v3187
      %v3189 = vsel %vm2843, %v2747, 0.0
      %v3190 = vsel %vm2843, %v2748, 0.0
      %v3191 = vadd.f32 %v3189, %v3190
      %v3192 = vsel %vm2843, %v2749, 0.0
      %v3193 = vadd.f32 %v3191, %v3192
      %v3194 = vsel %vm2843, %v2750, 0.0
      %v3195 = vadd.f32 %v3193, %v3194
      %v3196 = vsel %vm2843, %v2751, 0.0
      %v3197 = vadd.f32 %v3195, %v3196
      %v3198 = vsel %vm2843, %v2752, 0.0
      %v3199 = vadd.f32 %v3197, %v3198
      %v3200 = vsel %vm2843, %v2753, 0.0
      %v3201 = vadd.f32 %v3199, %v3200
      %v3202 = vsel %vm2843, %v2754, 0.0
      %v3203 = vadd.f32 %v3201, %v3202
      %v3204 = vsel %vm2843, %v2755, 0.0
      %v3205 = vadd.f32 %v3203, %v3204
      %v3206 = vsel %vm2843, %v2756, 0.0
      %v3207 = vadd.f32 %v3205, %v3206
      %v3208 = vsel %vm2843, %v2757, 0.0
      %v3209 = vadd.f32 %v3207, %v3208
      %v3210 = vsel %vm2843, %v2758, 0.0
      %v3211 = vadd.f32 %v3209, %v3210
      %v3212 = vsel %vm2843, %v2759, 0.0
      %v3213 = vadd.f32 %v3211, %v3212
      %v3214 = vsel %vm2843, %v2760, 0.0
      %v3215 = vadd.f32 %v3213, %v3214
      %v3216 = vsel %vm2843, %v2761, 0.0
      %v3217 = vadd.f32 %v3215, %v3216
      %v3218 = vsel %vm2843, %v2762, 0.0
      %v3219 = vadd.f32 %v3217, %v3218
      %v3220 = vsel %vm2843, %v2763, 0.0
      %v3221 = vadd.f32 %v3219, %v3220
      %v3222 = vsel %vm2843, %v2764, 0.0
      %v3223 = vadd.f32 %v3221, %v3222
      %v3224 = vsel %vm2843, %v2765, 0.0
      %v3225 = vadd.f32 %v3223, %v3224
      %v3226 = vsel %vm2843, %v2766, 0.0
      %v3227 = vadd.f32 %v3225, %v3226
      %v3228 = vsel %vm2843, %v2767, 0.0
      %v3229 = vadd.f32 %v3227, %v3228
      %v3230 = vsel %vm2843, %v2768, 0.0
      %v3231 = vadd.f32 %v3229, %v3230
      %v3232 = vsel %vm2843, %v2769, 0.0
      %v3233 = vadd.f32 %v3231, %v3232
      %v3234 = vsel %vm2843, %v2770, 0.0
      %v3235 = vadd.f32 %v3233, %v3234
      %v3236 = vsel %vm2843, %v2771, 0.0
      %v3237 = vadd.f32 %v3235, %v3236
      %v3238 = vsel %vm2843, %v2772, 0.0
      %v3239 = vadd.f32 %v3237, %v3238
      %v3240 = vsel %vm2843, %v2773, 0.0
      %v3241 = vadd.f32 %v3239, %v3240
      %v3242 = vsel %vm2843, %v2774, 0.0
      %v3243 = vadd.f32 %v3241, %v3242
      %v3244 = vsel %vm2843, %v2775, 0.0
      %v3245 = vadd.f32 %v3243, %v3244
      %v3246 = vsel %vm2843, %v2776, 0.0
      %v3247 = vadd.f32 %v3245, %v3246
      %v3248 = vsel %vm2843, %v2777, 0.0
      %v3249 = vadd.f32 %v3247, %v3248
      %v3250 = vsel %vm2843, %v2778, 0.0
      %v3251 = vadd.f32 %v3249, %v3250
      %v3252 = vrot.slane %v3251, 4
      %v3253 = vadd.f32 %v3251, %v3252
      %v3254 = vrot.slane %v3253, 2
      %v3255 = vadd.f32 %v3253, %v3254
      %v3256 = vrot.slane %v3255, 1
      %v3257 = vadd.f32 %v3255, %v3256
      %v3258 = vsel %vm2843, %v2779, 0.0
      %v3259 = vsel %vm2843, %v2780, 0.0
      %v3260 = vadd.f32 %v3258, %v3259
      %v3261 = vsel %vm2843, %v2781, 0.0
      %v3262 = vadd.f32 %v3260, %v3261
      %v3263 = vsel %vm2843, %v2782, 0.0
      %v3264 = vadd.f32 %v3262, %v3263
      %v3265 = vsel %vm2843, %v2783, 0.0
      %v3266 = vadd.f32 %v3264, %v3265
      %v3267 = vsel %vm2843, %v2784, 0.0
      %v3268 = vadd.f32 %v3266, %v3267
      %v3269 = vsel %vm2843, %v2785, 0.0
      %v3270 = vadd.f32 %v3268, %v3269
      %v3271 = vsel %vm2843, %v2786, 0.0
      %v3272 = vadd.f32 %v3270, %v3271
      %v3273 = vsel %vm2843, %v2787, 0.0
      %v3274 = vadd.f32 %v3272, %v3273
      %v3275 = vsel %vm2843, %v2788, 0.0
      %v3276 = vadd.f32 %v3274, %v3275
      %v3277 = vsel %vm2843, %v2789, 0.0
      %v3278 = vadd.f32 %v3276, %v3277
      %v3279 = vsel %vm2843, %v2790, 0.0
      %v3280 = vadd.f32 %v3278, %v3279
      %v3281 = vsel %vm2843, %v2791, 0.0
      %v3282 = vadd.f32 %v3280, %v3281
      %v3283 = vsel %vm2843, %v2792, 0.0
      %v3284 = vadd.f32 %v3282, %v3283
      %v3285 = vsel %vm2843, %v2793, 0.0
      %v3286 = vadd.f32 %v3284, %v3285
      %v3287 = vsel %vm2843, %v2794, 0.0
      %v3288 = vadd.f32 %v3286, %v3287
      %v3289 = vsel %vm2843, %v2795, 0.0
      %v3290 = vadd.f32 %v3288, %v3289
      %v3291 = vsel %vm2843, %v2796, 0.0
      %v3292 = vadd.f32 %v3290, %v3291
      %v3293 = vsel %vm2843, %v2797, 0.0
      %v3294 = vadd.f32 %v3292, %v3293
      %v3295 = vsel %vm2843, %v2798, 0.0
      %v3296 = vadd.f32 %v3294, %v3295
      %v3297 = vsel %vm2843, %v2799, 0.0
      %v3298 = vadd.f32 %v3296, %v3297
      %v3299 = vsel %vm2843, %v2800, 0.0
      %v3300 = vadd.f32 %v3298, %v3299
      %v3301 = vsel %vm2843, %v2801, 0.0
      %v3302 = vadd.f32 %v3300, %v3301
      %v3303 = vsel %vm2843, %v2802, 0.0
      %v3304 = vadd.f32 %v3302, %v3303
      %v3305 = vsel %vm2843, %v2803, 0.0
      %v3306 = vadd.f32 %v3304, %v3305
      %v3307 = vsel %vm2843, %v2804, 0.0
      %v3308 = vadd.f32 %v3306, %v3307
      %v3309 = vsel %vm2843, %v2805, 0.0
      %v3310 = vadd.f32 %v3308, %v3309
      %v3311 = vsel %vm2843, %v2806, 0.0
      %v3312 = vadd.f32 %v3310, %v3311
      %v3313 = vsel %vm2843, %v2807, 0.0
      %v3314 = vadd.f32 %v3312, %v3313
      %v3315 = vsel %vm2843, %v2808, 0.0
      %v3316 = vadd.f32 %v3314, %v3315
      %v3317 = vsel %vm2843, %v2809, 0.0
      %v3318 = vadd.f32 %v3316, %v3317
      %v3319 = vsel %vm2843, %v2810, 0.0
      %v3320 = vadd.f32 %v3318, %v3319
      %v3321 = vrot.slane %v3320, 4
      %v3322 = vadd.f32 %v3320, %v3321
      %v3323 = vrot.slane %v3322, 2
      %v3324 = vadd.f32 %v3322, %v3323
      %v3325 = vrot.slane %v3324, 1
      %v3326 = vadd.f32 %v3324, %v3325
      %v3327 = vsel %vm2843, %v2811, 0.0
      %v3328 = vsel %vm2843, %v2812, 0.0
      %v3329 = vadd.f32 %v3327, %v3328
      %v3330 = vsel %vm2843, %v2813, 0.0
      %v3331 = vadd.f32 %v3329, %v3330
      %v3332 = vsel %vm2843, %v2814, 0.0
      %v3333 = vadd.f32 %v3331, %v3332
      %v3334 = vsel %vm2843, %v2815, 0.0
      %v3335 = vadd.f32 %v3333, %v3334
      %v3336 = vsel %vm2843, %v2816, 0.0
      %v3337 = vadd.f32 %v3335, %v3336
      %v3338 = vsel %vm2843, %v2817, 0.0
      %v3339 = vadd.f32 %v3337, %v3338
      %v3340 = vsel %vm2843, %v2818, 0.0
      %v3341 = vadd.f32 %v3339, %v3340
      %v3342 = vsel %vm2843, %v2819, 0.0
      %v3343 = vadd.f32 %v3341, %v3342
      %v3344 = vsel %vm2843, %v2820, 0.0
      %v3345 = vadd.f32 %v3343, %v3344
      %v3346 = vsel %vm2843, %v2821, 0.0
      %v3347 = vadd.f32 %v3345, %v3346
      %v3348 = vsel %vm2843, %v2822, 0.0
      %v3349 = vadd.f32 %v3347, %v3348
      %v3350 = vsel %vm2843, %v2823, 0.0
      %v3351 = vadd.f32 %v3349, %v3350
      %v3352 = vsel %vm2843, %v2824, 0.0
      %v3353 = vadd.f32 %v3351, %v3352
      %v3354 = vsel %vm2843, %v2825, 0.0
      %v3355 = vadd.f32 %v3353, %v3354
      %v3356 = vsel %vm2843, %v2826, 0.0
      %v3357 = vadd.f32 %v3355, %v3356
      %v3358 = vsel %vm2843, %v2827, 0.0
      %v3359 = vadd.f32 %v3357, %v3358
      %v3360 = vsel %vm2843, %v2828, 0.0
      %v3361 = vadd.f32 %v3359, %v3360
      %v3362 = vsel %vm2843, %v2829, 0.0
      %v3363 = vadd.f32 %v3361, %v3362
      %v3364 = vsel %vm2843, %v2830, 0.0
      %v3365 = vadd.f32 %v3363, %v3364
      %v3366 = vsel %vm2843, %v2831, 0.0
      %v3367 = vadd.f32 %v3365, %v3366
      %v3368 = vsel %vm2843, %v2832, 0.0
      %v3369 = vadd.f32 %v3367, %v3368
      %v3370 = vsel %vm2843, %v2833, 0.0
      %v3371 = vadd.f32 %v3369, %v3370
      %v3372 = vsel %vm2843, %v2834, 0.0
      %v3373 = vadd.f32 %v3371, %v3372
      %v3374 = vsel %vm2843, %v2835, 0.0
      %v3375 = vadd.f32 %v3373, %v3374
      %v3376 = vsel %vm2843, %v2836, 0.0
      %v3377 = vadd.f32 %v3375, %v3376
      %v3378 = vsel %vm2843, %v2837, 0.0
      %v3379 = vadd.f32 %v3377, %v3378
      %v3380 = vsel %vm2843, %v2838, 0.0
      %v3381 = vadd.f32 %v3379, %v3380
      %v3382 = vsel %vm2843, %v2839, 0.0
      %v3383 = vadd.f32 %v3381, %v3382
      %v3384 = vsel %vm2843, %v2840, 0.0
      %v3385 = vadd.f32 %v3383, %v3384
      %v3386 = vsel %vm2843, %v2841, 0.0
      %v3387 = vadd.f32 %v3385, %v3386
      %v3388 = vsel %vm2843, %v2842, 0.0
      %v3389 = vadd.f32 %v3387, %v3388
      %v3390 = vrot.slane %v3389, 4
      %v3391 = vadd.f32 %v3389, %v3390
      %v3392 = vrot.slane %v3391, 2
      %v3393 = vadd.f32 %v3391, %v3392
      %v3394 = vrot.slane %v3393, 1
      %v3395 = vadd.f32 %v3393, %v3394
      %vm3396 = vcmask 1040384
      %v3397 = vsel %vm3396, %v2912, %v2981
      %vm3398 = vcmask 1041408
      %v3399 = vsel %vm3398, %v3397, %v3050
      %vm3400 = vcmask 1042432
      %v3401 = vsel %vm3400, %v3399, %v3119
      %vm3402 = vcmask 1043456
      %v3403 = vsel %vm3402, %v3401, %v3188
      %vm3404 = vcmask 1044480
      %v3405 = vsel %vm3404, %v3403, %v3257
      %vm3406 = vcmask 1045504
      %v3407 = vsel %vm3406, %v3405, %v3326
      %vm3408 = vcmask 1046528
      %v3409 = vsel %vm3408, %v3407, %v3395
      %v3410 = vmul.f32 %v3409, 0.00390625
      %v3411 = vpack.c.bf16 %v3410, %v3410
      %v3412 = vld [vmem:[%s3] sm:$0xf]
      %v3413 = vld [vmem:[%s3 + $0x4] sm:$0xf]
      %v3414 = vld [vmem:[%s3 + $0x8] sm:$0xf]
      %v3415 = vld [vmem:[%s3 + $0xc] sm:$0xf]
      %v3416 = vld [vmem:[%s3 + $0x10] sm:$0xf]
      %v3417 = vld [vmem:[%s3 + $0x14] sm:$0xf]
      %v3418 = vld [vmem:[%s3 + $0x18] sm:$0xf]
      %v3419 = vld [vmem:[%s3 + $0x1c] sm:$0xf]
      %v3420 = vld [vmem:[%s4] sm:$0x1]
      %v3422 = vlaneseq
      %v3423 = vshrl.u32 %v3422, 7
      %v3424 = vsub.s32 0, %v3423
      %v3425 = vrot.slane %v3420, %v3424
      %v3435 = vunpack.c.l.b16 %v3412
      %v3436 = vunpack.c.l.b16 %v3413
      %v3437 = vunpack.c.l.b16 %v3414
      %v3438 = vunpack.c.l.b16 %v3415
      %v3439 = vunpack.c.l.b16 %v3416
      %v3440 = vunpack.c.l.b16 %v3417
      %v3441 = vunpack.c.l.b16 %v3418
      %v3442 = vunpack.c.l.b16 %v3419
      %v3443 = vpack.c.b16 %v3436, %v3435
      %v3444 = vpack.c.b16 %v3438, %v3437
      %v3445 = vpack.c.b16 %v3440, %v3439
      %v3446 = vpack.c.b16 %v3442, %v3441
      %v3452 = vsel %vm2843, %v3411, 0
      %3454 = vmatprep.subr.bf16.mxu0 0
      %3455 = vmatpush1.bf16.msra.mxu0 %v3443
      %3456 = vmatprep.subr.bf16.mxu0 0
      %3457 = vmatpush1.bf16.msra.mxu0 %v3444
      %3458 = vmatprep.subr.bf16.mxu0 0
      %3459 = vmatpush1.bf16.msra.mxu0 %v3445
      %3460 = vmatprep.subr.bf16.mxu0 0
      %3461 = vmatpush1.bf16.msra.mxu0 %v3446
      %3462 = vmatprep.subr.bf16.mxu0 0
      %3463 = vmatpush1.bf16.msra.mxu0 0
      %3464 = vmatprep.subr.bf16.mxu0 0
      %3465 = vmatpush1.bf16.msra.mxu0 0
      %3466 = vmatprep.subr.bf16.mxu0 0
      %3467 = vmatpush1.bf16.msra.mxu0 0
      %3468 = vmatprep.subr.bf16.mxu0 0
      %3469 = vmatpush1.bf16.msra.mxu0 0
      %3470 = vmatprep.subr.bf16.mxu0 0
      %3471 = vmatpush1.bf16.msra.mxu0 0
      %3472 = vmatprep.subr.bf16.mxu0 0
      %3473 = vmatpush1.bf16.msra.mxu0 0
      %3474 = vmatprep.subr.bf16.mxu0 0
      %3475 = vmatpush1.bf16.msra.mxu0 0
      %3476 = vmatprep.subr.bf16.mxu0 0
      %3477 = vmatpush1.bf16.msra.mxu0 0
      %3478 = vmatprep.subr.bf16.mxu0 0
      %3479 = vmatpush1.bf16.msra.mxu0 0
      %3480 = vmatprep.subr.bf16.mxu0 0
      %3481 = vmatpush1.bf16.msra.mxu0 0
      %3482 = vmatprep.subr.bf16.mxu0 0
      %3483 = vmatpush1.bf16.msra.mxu0 0
      %3484 = vmatprep.subr.bf16.mxu0 0
      %3485 = vmatpush1.bf16.msra.mxu0 0
      %3486 = vmatprep.mubr.bf16.mxu0 0
      %3487 = vmatmul.mubr.bf16.gmra.mrb[0].mxu0 %v3452
      %v3488 = vpop.f32.mrb[0].mxu0
      %v3489 = vadd.f32 %v3425, %v3488
      %v3490 = vpop.f32.mrb[0].mxu0
      %v3491 = vpop.f32.mrb[0].mxu0
      %v3492 = vpop.f32.mrb[0].mxu0
      %3493 = vdwg.mxu0
      %3494 = vst [vmem:[%s224] sm:$0xff] %v3489
      %p3495 = scmp.lt.s32.totalorder %s16, 2
      %s3496 = scalar_select %p3495, %s16, 2
      %s3497 = smul.addr %s3496, 8
      %s3498 = scalar_lea.vmem %s5, %s3497
      // Predicated region
      $region41: #{network_forward.1} parent=39 // pred_check
        %p3499 = pneg %p144
      $region42: #{network_forward.1} parent=39 // pred_check_branch
        %3501 = sbr.rel (%p3499) target = $region44
      $region43: #{network_forward.1} parent=39 // pred_region
        _
      $region44: #{network_forward.1} parent=39 // pred_fallthru
        _
    $region40: #{network_forward.1} parent=5 // pred_fallthru
      _
    %p3502 = scmp.le.s32.totalorder 2, %s11
    // Predicated region
    $region45: #{network_forward.1} parent=5 // pred_check
      %p3503 = pneg %p3502
    $region46: #{network_forward.1} parent=5 // pred_check_branch
      %3505 = sbr.rel (%p3503) target = $region48
    $region47: #{network_forward.1} parent=5 // pred_region
      %s3506 = ssub.s32 %s11, 2
      // Predicated region
      $region49: #{network_forward.1} parent=47 // pred_check
        %p3507 = pneg %p150
      $region50: #{network_forward.1} parent=47 // pred_check_branch
        %3509 = sbr.rel (%p3507) target = $region52
      $region51: #{network_forward.1} parent=47 // pred_region
        %p3510 = scmp.lt.s32.totalorder %s17, 2
        %s3511 = scalar_select %p3510, %s17, 2
        %s3512 = smul.addr %s3511, 8
        %s3513 = scalar_lea.vmem %s5, %s3512
      $region52: #{network_forward.1} parent=47 // pred_fallthru
        _
    $region48: #{network_forward.1} parent=5 // pred_fallthru
      _
  $region6: #{network_forward.1} parent=0 // loop_footer
    %s15 = sadd.s32 1, %s11
  $region7: #{network_forward.1} parent=0 // loop_footer_branch
    %10 = sbr.rel target = $region3
  $region8: #{network_forward.1} parent=0 // loop_exit
    _

</llo_original>
